<compile_context>
chip_gen: v7x
topology: tpu7x:2x2x1
jax: 0.10.0
libtpu: 0.0.40
codegen_flags: <defaults>
</compile_context>

<pallas_src>
import jax
import jax.numpy as jnp
from jax import lax
from jax.experimental import pallas as pl
from jax.experimental.pallas import tpu as pltpu

_BN_EPS = 1e-5


def _bn_relu(x, gamma, beta):
    """BatchNorm2d (training-mode batch stats, biased var) + ReLU on (M, F)."""
    mean = jnp.mean(x, axis=0, keepdims=True)
    var = jnp.mean(jnp.square(x - mean), axis=0, keepdims=True)
    xn = (x - mean) * lax.rsqrt(var + _BN_EPS)
    return jnp.maximum(xn * gamma + beta, 0.0)


def _make_gin_kernel(num_gin, num_pred, d0, d2, kw, wo):
    """Fused forward kernel.

    Ref order (positional):
      h0, rpool, agg[0..num_gin),
      (W1, W2, vec8) per GIN layer,
      predW[0..num_pred), pred_b, wcT, bconv, out
    """
    def kernel(*refs):
        i = 0
        h_ref = refs[i]; i += 1
        r_ref = refs[i]; i += 1
        agg_refs = refs[i:i + num_gin]; i += num_gin
        gin_refs = [refs[i + 3 * l: i + 3 * l + 3] for l in range(num_gin)]
        i += 3 * num_gin
        predw_refs = refs[i:i + num_pred]; i += num_pred
        predb_ref = refs[i]; i += 1
        wct_ref = refs[i]; i += 1
        bconv_ref = refs[i]; i += 1
        o_ref = refs[i]

        f32 = jnp.float32
        h = h_ref[...]                       # (M, F0) node-major hidden rep
        rpool = r_ref[...]                   # (P, M)  sum-over-nodes operator
        predb = predb_ref[...]               # (num_pred, out_dim)

        # readout of hidden_rep[0] (the raw input features)
        pooled = jnp.dot(rpool, h, preferred_element_type=f32)
        score = jnp.dot(pooled, predw_refs[0][...],
                        preferred_element_type=f32) + predb[0:1, :]

        # GIN layers (statically unrolled)
        for l in range(num_gin):
            w1_ref, w2_ref, vec_ref = gin_refs[l]
            vec = vec_ref[...]               # (8, hidden) stacked vectors
            b1, b2 = vec[0:1, :], vec[1:2, :]
            g_mlp, be_mlp = vec[2:3, :], vec[3:4, :]
            g_app, be_app = vec[4:5, :], vec[5:6, :]
            g_out, be_out = vec[6:7, :], vec[7:8, :]

            # GINConv sum aggregation: (kron(A + (1+eps)I, I_P)) @ h
            agg = jnp.dot(agg_refs[l][...], h, preferred_element_type=f32)
            # MLP: linear -> BN -> relu -> linear
            h1 = jnp.dot(agg, w1_ref[...], preferred_element_type=f32) + b1
            h1 = _bn_relu(h1, g_mlp, be_mlp)
            h2 = jnp.dot(h1, w2_ref[...], preferred_element_type=f32) + b2
            # ApplyNodeFunc BN+relu, then GIN outer BN+relu
            h2 = _bn_relu(h2, g_app, be_app)
            h = _bn_relu(h2, g_out, be_out)
            # readout of this layer's representation
            pooled = jnp.dot(rpool, h, preferred_element_type=f32)
            score = score + jnp.dot(pooled, predw_refs[l + 1][...],
                                    preferred_element_type=f32) \
                          + predb[l + 1:l + 2, :]

        # final Conv2d(1, 1, (KH=d2, KW)) over the (d2, out_dim) plane per batch
        # element; HO == 1 because KH == d2.
        wct = wct_ref[...]                   # (KW, KH)
        bconv = bconv_ref[...]               # (1, 1)
        rows = []
        for a in range(d0):
            s_a = score[a * d2:(a + 1) * d2, :]                   # (KH, out)
            v = jnp.dot(wct, s_a, preferred_element_type=f32)     # (KW, out)
            row = v[0:1, 0:wo]
            for j in range(1, kw):
                row = row + v[j:j + 1, j:j + wo]                  # banded sum
            rows.append(row)
        out = jnp.concatenate(rows, axis=0) if d0 > 1 else rows[0]
        o_ref[...] = out + bconv

    return kernel


# ------------------------- parameters & forward ----------------------------

def init_params(key, num_layers, num_mlp_layers, input_dim, hidden_dim,
                output_dim, conv_kh=15, conv_kw=10):
    assert num_mlp_layers == 2, "this script instantiates 2-layer MLPs"

    def dense(k, fin, fout, scale=0.1):
        kw_, kb = jax.random.split(k)
        return (scale * jax.random.normal(kw_, (fin, fout), jnp.float32),
                scale * jax.random.normal(kb, (fout,), jnp.float32))

    keys = jax.random.split(key, 4 * num_layers + 4)
    ki = 0
    params = {"gin_layers": [], "pred": [], "fc": None}
    for layer in range(num_layers - 1):
        fin = input_dim if layer == 0 else hidden_dim
        W1, b1 = dense(keys[ki], fin, hidden_dim); ki += 1
        W2, b2 = dense(keys[ki], hidden_dim, hidden_dim); ki += 1
        params["gin_layers"].append({
            "W1": W1, "b1": b1, "W2": W2, "b2": b2,
            "mlp_bn_g": jnp.ones((hidden_dim,), jnp.float32),
            "mlp_bn_b": jnp.zeros((hidden_dim,), jnp.float32),
            "apply_bn_g": jnp.ones((hidden_dim,), jnp.float32),
            "apply_bn_b": jnp.zeros((hidden_dim,), jnp.float32),
            "out_bn_g": jnp.ones((hidden_dim,), jnp.float32),
            "out_bn_b": jnp.zeros((hidden_dim,), jnp.float32),
            "eps": jnp.float32(0.0),              # GINConv init_eps = 0
        })
    for layer in range(num_layers):
        fin = input_dim if layer == 0 else hidden_dim
        params["pred"].append(dense(keys[ki], fin, output_dim)); ki += 1
    kc, kcb = jax.random.split(keys[ki])
    params["fc"] = (0.1 * jax.random.normal(kc, (conv_kh, conv_kw), jnp.float32),
                    0.1 * jax.random.normal(kcb, (1,), jnp.float32))
    return params


def gin_forward(x, A, params):
    d0, f0, d2, n_nodes = x.shape
    p = d0 * d2
    m = n_nodes * p
    out_dim = params["pred"][0][0].shape[1]
    wc, bc = params["fc"]
    kh, kw = wc.shape
    assert d2 == kh, "need d2 == conv KH so the torch .squeeze(1) output is (B, WO)"
    wo = out_dim - kw + 1

    # node-major hidden rep (M, F0); row index m = node*(d0*d2) + (a*d2 + b)
    h0 = jnp.transpose(x, (3, 0, 2, 1)).reshape(m, f0)
    eye_p = jnp.eye(p, dtype=jnp.float32)
    eye_n = jnp.eye(n_nodes, dtype=jnp.float32)
    # GINConv sum aggregation (1+eps)*h_v + sum_{u~v} h_u as one (M,M) operator
    agg_ops = [jnp.kron(A + (1.0 + lp["eps"]) * eye_n, eye_p)
               for lp in params["gin_layers"]]
    # DGL SumPooling over nodes as a (P, M) 0/1 matrix
    rpool = jnp.tile(eye_p, (1, n_nodes))

    inputs = [h0, rpool] + agg_ops
    for lp in params["gin_layers"]:
        vec8 = jnp.stack([lp["b1"], lp["b2"],
                          lp["mlp_bn_g"], lp["mlp_bn_b"],
                          lp["apply_bn_g"], lp["apply_bn_b"],
                          lp["out_bn_g"], lp["out_bn_b"]], axis=0)
        inputs += [lp["W1"], lp["W2"], vec8]
    inputs += [w for (w, _) in params["pred"]]
    inputs += [jnp.stack([b for (_, b) in params["pred"]], axis=0),
               wc.T, bc.reshape(1, 1)]

    kernel = _make_gin_kernel(len(params["gin_layers"]), len(params["pred"]),
                              d0, d2, kw, wo)
    vmem = lambda: pl.BlockSpec(memory_space=pltpu.MemorySpace.VMEM)
    return pl.pallas_call(
        kernel,
        out_shape=jax.ShapeDtypeStruct((d0, wo), jnp.float32),
        in_specs=[vmem() for _ in inputs],
        out_specs=vmem(),
    )(*inputs)


# ------------------------- plain-JAX reference ------------------------------

def gin_reference(x, A, params):
    d0, f0, d2, n = x.shape
    p = d0 * d2

    def bn_relu(h2d, g, b):
        mean = jnp.mean(h2d, axis=0, keepdims=True)
        var = jnp.mean(jnp.square(h2d - mean), axis=0, keepdims=True)
        return jnp.maximum((h2d - mean) / jnp.sqrt(var + _BN_EPS) * g + b, 0.0)

    h = jnp.transpose(x, (3, 0, 2, 1)).reshape(n * p, f0)
    reps = [h]
    for lp in params["gin_layers"]:
        Apl = A + (1.0 + lp["eps"]) * jnp.eye(n, dtype=jnp.float32)
        fdim = h.shape[1]
        agg = (Apl @ h.reshape(n, p * fdim)).reshape(n * p, fdim)
        h1 = bn_relu(agg @ lp["W1"] + lp["b1"], lp["mlp_bn_g"], lp["mlp_bn_b"])
        h2 = h1 @ lp["W2"] + lp["b2"]
        h2 = bn_relu(h2, lp["apply_bn_g"], lp["apply_bn_b"])
        h = bn_relu(h2, lp["out_bn_g"], lp["out_bn_b"])
        reps.append(h)
    out_dim = params["pred"][0][0].shape[1]
    score = jnp.zeros((p, out_dim), jnp.float32)
    for i, hr in enumerate(reps):
        pooled = hr.reshape(n, p, hr.shape[1]).sum(axis=0)
        w, b = params["pred"][i]
        score = score + pooled @ w + b
    wc, bc = params["fc"]
    kh, kw = wc.shape
    wo = out_dim - kw + 1
    sc3 = score.reshape(d0, d2, out_dim)
    out = jnp.stack([
        jnp.stack([jnp.sum(sc3[a, :, w0:w0 + kw] * wc) for w0 in range(wo)])
        for a in range(d0)]) + bc[0]
    return out


# --------------------------------- main -------------------------------------

if __name__ == "__main__":
    key = jax.random.PRNGKey(0)
    k_x, k_p = jax.random.split(key)

    B, input_dim, H, N = 2, 8, 15, 8           # x: (B, C=input_dim, H, W=nodes)
    hidden_dim, output_dim = 16, 16
    num_layers, num_mlp_layers = 3, 2

    x = jax.random.normal(k_x, (B, input_dim, H, N), jnp.float32)

    # Deterministic graph: 8-node undirected ring (binary adjacency matrix).
    idx = jnp.arange(N)
    A = (jnp.zeros((N, N), jnp.float32)
         .at[idx, (idx + 1) % N].set(1.0)
         .at[idx, (idx - 1) % N].set(1.0))

    params = init_params(k_p, num_layers, num_mlp_layers,
                         input_dim, hidden_dim, output_dim)

    out = jax.jit(gin_forward)(x, A, params)
    out = jax.block_until_ready(out)

    assert out.shape == (B, output_dim - 10 + 1), out.shape
    assert bool(jnp.all(jnp.isfinite(out)))

    ref = gin_reference(x, A, params)
    assert bool(jnp.allclose(out, ref, rtol=5e-2, atol=5e-2)), (out, ref)

    print("KERNEL_OK")
</pallas_src>

<mosaic_0001>
module attributes {stable_mosaic.version = 11 : i64} {
  func.func @kernel(%arg0: memref<240x8xf32, #tpu.memory_space<vmem>>, %arg1: memref<30x240xf32, #tpu.memory_space<vmem>>, %arg2: memref<240x240xf32, #tpu.memory_space<vmem>>, %arg3: memref<240x240xf32, #tpu.memory_space<vmem>>, %arg4: memref<8x16xf32, #tpu.memory_space<vmem>>, %arg5: memref<16x16xf32, #tpu.memory_space<vmem>>, %arg6: memref<8x16xf32, #tpu.memory_space<vmem>>, %arg7: memref<16x16xf32, #tpu.memory_space<vmem>>, %arg8: memref<16x16xf32, #tpu.memory_space<vmem>>, %arg9: memref<8x16xf32, #tpu.memory_space<vmem>>, %arg10: memref<8x16xf32, #tpu.memory_space<vmem>>, %arg11: memref<16x16xf32, #tpu.memory_space<vmem>>, %arg12: memref<16x16xf32, #tpu.memory_space<vmem>>, %arg13: memref<3x16xf32, #tpu.memory_space<vmem>>, %arg14: memref<10x15xf32, #tpu.memory_space<vmem>>, %arg15: memref<1x1xf32, #tpu.memory_space<vmem>>, %arg16: memref<2x7xf32, #tpu.memory_space<vmem>>) attributes {dimension_semantics = [], scalar_prefetch = 0 : i64, scratch_operands = 0 : i64, tpu.core_type = #tpu.core_type<tc>} {
    %c0 = arith.constant 0 : index
    %c0_0 = arith.constant 0 : index
    %0 = vector.load %arg0[%c0, %c0_0] : memref<240x8xf32, #tpu.memory_space<vmem>>, vector<240x8xf32>
    %c0_1 = arith.constant 0 : index
    %c0_2 = arith.constant 0 : index
    %1 = vector.load %arg1[%c0_1, %c0_2] : memref<30x240xf32, #tpu.memory_space<vmem>>, vector<30x240xf32>
    %c0_3 = arith.constant 0 : index
    %c0_4 = arith.constant 0 : index
    %2 = vector.load %arg13[%c0_3, %c0_4] : memref<3x16xf32, #tpu.memory_space<vmem>>, vector<3x16xf32>
    %cst = arith.constant dense<0.000000e+00> : vector<30x8xf32>
    %3 = tpu.matmul %1, %0, %cst {dimension_numbers = #tpu.dot_dimension_numbers<[1], [0], [0], [1], [0, 0, 1, 1], [], []>} : vector<30x240xf32>, vector<240x8xf32>, vector<30x8xf32> -> vector<30x8xf32>
    %c0_5 = arith.constant 0 : index
    %c0_6 = arith.constant 0 : index
    %4 = vector.load %arg10[%c0_5, %c0_6] : memref<8x16xf32, #tpu.memory_space<vmem>>, vector<8x16xf32>
    %cst_7 = arith.constant dense<0.000000e+00> : vector<30x16xf32>
    %5 = tpu.matmul %3, %4, %cst_7 {dimension_numbers = #tpu.dot_dimension_numbers<[1], [0], [0], [1], [0, 0, 1, 1], [], []>} : vector<30x8xf32>, vector<8x16xf32>, vector<30x16xf32> -> vector<30x16xf32>
    %6 = vector.extract_strided_slice %2 {offsets = [0, 0], sizes = [1, 16], strides = [1, 1]} : vector<3x16xf32> to vector<1x16xf32>
    %7 = vector.broadcast %6 : vector<1x16xf32> to vector<30x16xf32>
    %8 = arith.addf %5, %7 : vector<30x16xf32>
    %c0_8 = arith.constant 0 : index
    %c0_9 = arith.constant 0 : index
    %9 = vector.load %arg6[%c0_8, %c0_9] : memref<8x16xf32, #tpu.memory_space<vmem>>, vector<8x16xf32>
    %10 = vector.extract_strided_slice %9 {offsets = [0, 0], sizes = [1, 16], strides = [1, 1]} : vector<8x16xf32> to vector<1x16xf32>
    %11 = vector.extract_strided_slice %9 {offsets = [1, 0], sizes = [1, 16], strides = [1, 1]} : vector<8x16xf32> to vector<1x16xf32>
    %12 = vector.extract_strided_slice %9 {offsets = [2, 0], sizes = [1, 16], strides = [1, 1]} : vector<8x16xf32> to vector<1x16xf32>
    %13 = vector.extract_strided_slice %9 {offsets = [3, 0], sizes = [1, 16], strides = [1, 1]} : vector<8x16xf32> to vector<1x16xf32>
    %14 = vector.extract_strided_slice %9 {offsets = [4, 0], sizes = [1, 16], strides = [1, 1]} : vector<8x16xf32> to vector<1x16xf32>
    %15 = vector.extract_strided_slice %9 {offsets = [5, 0], sizes = [1, 16], strides = [1, 1]} : vector<8x16xf32> to vector<1x16xf32>
    %16 = vector.extract_strided_slice %9 {offsets = [6, 0], sizes = [1, 16], strides = [1, 1]} : vector<8x16xf32> to vector<1x16xf32>
    %17 = vector.extract_strided_slice %9 {offsets = [7, 0], sizes = [1, 16], strides = [1, 1]} : vector<8x16xf32> to vector<1x16xf32>
    %c0_10 = arith.constant 0 : index
    %c0_11 = arith.constant 0 : index
    %18 = vector.load %arg2[%c0_10, %c0_11] : memref<240x240xf32, #tpu.memory_space<vmem>>, vector<240x240xf32>
    %cst_12 = arith.constant dense<0.000000e+00> : vector<240x8xf32>
    %19 = tpu.matmul %18, %0, %cst_12 {dimension_numbers = #tpu.dot_dimension_numbers<[1], [0], [0], [1], [0, 0, 1, 1], [], []>} : vector<240x240xf32>, vector<240x8xf32>, vector<240x8xf32> -> vector<240x8xf32>
    %c0_13 = arith.constant 0 : index
    %c0_14 = arith.constant 0 : index
    %20 = vector.load %arg4[%c0_13, %c0_14] : memref<8x16xf32, #tpu.memory_space<vmem>>, vector<8x16xf32>
    %cst_15 = arith.constant dense<0.000000e+00> : vector<240x16xf32>
    %21 = tpu.matmul %19, %20, %cst_15 {dimension_numbers = #tpu.dot_dimension_numbers<[1], [0], [0], [1], [0, 0, 1, 1], [], []>} : vector<240x8xf32>, vector<8x16xf32>, vector<240x16xf32> -> vector<240x16xf32>
    %22 = vector.broadcast %10 : vector<1x16xf32> to vector<240x16xf32>
    %23 = arith.addf %21, %22 : vector<240x16xf32>
    %cst_16 = arith.constant dense<0.000000e+00> : vector<16xf32>
    %24 = vector.multi_reduction <add>, %23, %cst_16 [0] : vector<240x16xf32> to vector<16xf32>
    %25 = vector.shape_cast %24 : vector<16xf32> to vector<1x16xf32>
    %cst_17 = arith.constant 2.400000e+02 : f32
    %26 = vector.broadcast %cst_17 : f32 to vector<1x16xf32>
    %27 = arith.divf %25, %26 : vector<1x16xf32>
    %28 = vector.broadcast %27 : vector<1x16xf32> to vector<240x16xf32>
    %29 = arith.subf %23, %28 : vector<240x16xf32>
    %30 = arith.mulf %29, %29 : vector<240x16xf32>
    %cst_18 = arith.constant dense<0.000000e+00> : vector<16xf32>
    %31 = vector.multi_reduction <add>, %30, %cst_18 [0] : vector<240x16xf32> to vector<16xf32>
    %32 = vector.shape_cast %31 : vector<16xf32> to vector<1x16xf32>
    %cst_19 = arith.constant 2.400000e+02 : f32
    %33 = vector.broadcast %cst_19 : f32 to vector<1x16xf32>
    %34 = arith.divf %32, %33 : vector<1x16xf32>
    %35 = vector.broadcast %27 : vector<1x16xf32> to vector<240x16xf32>
    %36 = arith.subf %23, %35 : vector<240x16xf32>
    %cst_20 = arith.constant 9.99999974E-6 : f32
    %37 = vector.broadcast %cst_20 : f32 to vector<1x16xf32>
    %38 = arith.addf %34, %37 : vector<1x16xf32>
    %39 = math.rsqrt %38 : vector<1x16xf32>
    %40 = vector.broadcast %39 : vector<1x16xf32> to vector<240x16xf32>
    %41 = arith.mulf %36, %40 : vector<240x16xf32>
    %42 = vector.broadcast %12 : vector<1x16xf32> to vector<240x16xf32>
    %43 = arith.mulf %41, %42 : vector<240x16xf32>
    %44 = vector.broadcast %13 : vector<1x16xf32> to vector<240x16xf32>
    %45 = arith.addf %43, %44 : vector<240x16xf32>
    %cst_21 = arith.constant 0.000000e+00 : f32
    %46 = vector.broadcast %cst_21 : f32 to vector<240x16xf32>
    %47 = arith.maximumf %45, %46 : vector<240x16xf32>
    %c0_22 = arith.constant 0 : index
    %c0_23 = arith.constant 0 : index
    %48 = vector.load %arg5[%c0_22, %c0_23] : memref<16x16xf32, #tpu.memory_space<vmem>>, vector<16x16xf32>
    %cst_24 = arith.constant dense<0.000000e+00> : vector<240x16xf32>
    %49 = tpu.matmul %47, %48, %cst_24 {dimension_numbers = #tpu.dot_dimension_numbers<[1], [0], [0], [1], [0, 0, 1, 1], [], []>} : vector<240x16xf32>, vector<16x16xf32>, vector<240x16xf32> -> vector<240x16xf32>
    %50 = vector.broadcast %11 : vector<1x16xf32> to vector<240x16xf32>
    %51 = arith.addf %49, %50 : vector<240x16xf32>
    %cst_25 = arith.constant dense<0.000000e+00> : vector<16xf32>
    %52 = vector.multi_reduction <add>, %51, %cst_25 [0] : vector<240x16xf32> to vector<16xf32>
    %53 = vector.shape_cast %52 : vector<16xf32> to vector<1x16xf32>
    %cst_26 = arith.constant 2.400000e+02 : f32
    %54 = vector.broadcast %cst_26 : f32 to vector<1x16xf32>
    %55 = arith.divf %53, %54 : vector<1x16xf32>
    %56 = vector.broadcast %55 : vector<1x16xf32> to vector<240x16xf32>
    %57 = arith.subf %51, %56 : vector<240x16xf32>
    %58 = arith.mulf %57, %57 : vector<240x16xf32>
    %cst_27 = arith.constant dense<0.000000e+00> : vector<16xf32>
    %59 = vector.multi_reduction <add>, %58, %cst_27 [0] : vector<240x16xf32> to vector<16xf32>
    %60 = vector.shape_cast %59 : vector<16xf32> to vector<1x16xf32>
    %cst_28 = arith.constant 2.400000e+02 : f32
    %61 = vector.broadcast %cst_28 : f32 to vector<1x16xf32>
    %62 = arith.divf %60, %61 : vector<1x16xf32>
    %63 = vector.broadcast %55 : vector<1x16xf32> to vector<240x16xf32>
    %64 = arith.subf %51, %63 : vector<240x16xf32>
    %cst_29 = arith.constant 9.99999974E-6 : f32
    %65 = vector.broadcast %cst_29 : f32 to vector<1x16xf32>
    %66 = arith.addf %62, %65 : vector<1x16xf32>
    %67 = math.rsqrt %66 : vector<1x16xf32>
    %68 = vector.broadcast %67 : vector<1x16xf32> to vector<240x16xf32>
    %69 = arith.mulf %64, %68 : vector<240x16xf32>
    %70 = vector.broadcast %14 : vector<1x16xf32> to vector<240x16xf32>
    %71 = arith.mulf %69, %70 : vector<240x16xf32>
    %72 = vector.broadcast %15 : vector<1x16xf32> to vector<240x16xf32>
    %73 = arith.addf %71, %72 : vector<240x16xf32>
    %cst_30 = arith.constant 0.000000e+00 : f32
    %74 = vector.broadcast %cst_30 : f32 to vector<240x16xf32>
    %75 = arith.maximumf %73, %74 : vector<240x16xf32>
    %cst_31 = arith.constant dense<0.000000e+00> : vector<16xf32>
    %76 = vector.multi_reduction <add>, %75, %cst_31 [0] : vector<240x16xf32> to vector<16xf32>
    %77 = vector.shape_cast %76 : vector<16xf32> to vector<1x16xf32>
    %cst_32 = arith.constant 2.400000e+02 : f32
    %78 = vector.broadcast %cst_32 : f32 to vector<1x16xf32>
    %79 = arith.divf %77, %78 : vector<1x16xf32>
    %80 = vector.broadcast %79 : vector<1x16xf32> to vector<240x16xf32>
    %81 = arith.subf %75, %80 : vector<240x16xf32>
    %82 = arith.mulf %81, %81 : vector<240x16xf32>
    %cst_33 = arith.constant dense<0.000000e+00> : vector<16xf32>
    %83 = vector.multi_reduction <add>, %82, %cst_33 [0] : vector<240x16xf32> to vector<16xf32>
    %84 = vector.shape_cast %83 : vector<16xf32> to vector<1x16xf32>
    %cst_34 = arith.constant 2.400000e+02 : f32
    %85 = vector.broadcast %cst_34 : f32 to vector<1x16xf32>
    %86 = arith.divf %84, %85 : vector<1x16xf32>
    %87 = vector.broadcast %79 : vector<1x16xf32> to vector<240x16xf32>
    %88 = arith.subf %75, %87 : vector<240x16xf32>
    %cst_35 = arith.constant 9.99999974E-6 : f32
    %89 = vector.broadcast %cst_35 : f32 to vector<1x16xf32>
    %90 = arith.addf %86, %89 : vector<1x16xf32>
    %91 = math.rsqrt %90 : vector<1x16xf32>
    %92 = vector.broadcast %91 : vector<1x16xf32> to vector<240x16xf32>
    %93 = arith.mulf %88, %92 : vector<240x16xf32>
    %94 = vector.broadcast %16 : vector<1x16xf32> to vector<240x16xf32>
    %95 = arith.mulf %93, %94 : vector<240x16xf32>
    %96 = vector.broadcast %17 : vector<1x16xf32> to vector<240x16xf32>
    %97 = arith.addf %95, %96 : vector<240x16xf32>
    %cst_36 = arith.constant 0.000000e+00 : f32
    %98 = vector.broadcast %cst_36 : f32 to vector<240x16xf32>
    %99 = arith.maximumf %97, %98 : vector<240x16xf32>
    %cst_37 = arith.constant dense<0.000000e+00> : vector<30x16xf32>
    %100 = tpu.matmul %1, %99, %cst_37 {dimension_numbers = #tpu.dot_dimension_numbers<[1], [0], [0], [1], [0, 0, 1, 1], [], []>} : vector<30x240xf32>, vector<240x16xf32>, vector<30x16xf32> -> vector<30x16xf32>
    %c0_38 = arith.constant 0 : index
    %c0_39 = arith.constant 0 : index
    %101 = vector.load %arg11[%c0_38, %c0_39] : memref<16x16xf32, #tpu.memory_space<vmem>>, vector<16x16xf32>
    %cst_40 = arith.constant dense<0.000000e+00> : vector<30x16xf32>
    %102 = tpu.matmul %100, %101, %cst_40 {dimension_numbers = #tpu.dot_dimension_numbers<[1], [0], [0], [1], [0, 0, 1, 1], [], []>} : vector<30x16xf32>, vector<16x16xf32>, vector<30x16xf32> -> vector<30x16xf32>
    %103 = arith.addf %8, %102 : vector<30x16xf32>
    %104 = vector.extract_strided_slice %2 {offsets = [1, 0], sizes = [1, 16], strides = [1, 1]} : vector<3x16xf32> to vector<1x16xf32>
    %105 = vector.broadcast %104 : vector<1x16xf32> to vector<30x16xf32>
    %106 = arith.addf %103, %105 : vector<30x16xf32>
    %c0_41 = arith.constant 0 : index
    %c0_42 = arith.constant 0 : index
    %107 = vector.load %arg9[%c0_41, %c0_42] : memref<8x16xf32, #tpu.memory_space<vmem>>, vector<8x16xf32>
    %108 = vector.extract_strided_slice %107 {offsets = [0, 0], sizes = [1, 16], strides = [1, 1]} : vector<8x16xf32> to vector<1x16xf32>
    %109 = vector.extract_strided_slice %107 {offsets = [1, 0], sizes = [1, 16], strides = [1, 1]} : vector<8x16xf32> to vector<1x16xf32>
    %110 = vector.extract_strided_slice %107 {offsets = [2, 0], sizes = [1, 16], strides = [1, 1]} : vector<8x16xf32> to vector<1x16xf32>
    %111 = vector.extract_strided_slice %107 {offsets = [3, 0], sizes = [1, 16], strides = [1, 1]} : vector<8x16xf32> to vector<1x16xf32>
    %112 = vector.extract_strided_slice %107 {offsets = [4, 0], sizes = [1, 16], strides = [1, 1]} : vector<8x16xf32> to vector<1x16xf32>
    %113 = vector.extract_strided_slice %107 {offsets = [5, 0], sizes = [1, 16], strides = [1, 1]} : vector<8x16xf32> to vector<1x16xf32>
    %114 = vector.extract_strided_slice %107 {offsets = [6, 0], sizes = [1, 16], strides = [1, 1]} : vector<8x16xf32> to vector<1x16xf32>
    %115 = vector.extract_strided_slice %107 {offsets = [7, 0], sizes = [1, 16], strides = [1, 1]} : vector<8x16xf32> to vector<1x16xf32>
    %c0_43 = arith.constant 0 : index
    %c0_44 = arith.constant 0 : index
    %116 = vector.load %arg3[%c0_43, %c0_44] : memref<240x240xf32, #tpu.memory_space<vmem>>, vector<240x240xf32>
    %cst_45 = arith.constant dense<0.000000e+00> : vector<240x16xf32>
    %117 = tpu.matmul %116, %99, %cst_45 {dimension_numbers = #tpu.dot_dimension_numbers<[1], [0], [0], [1], [0, 0, 1, 1], [], []>} : vector<240x240xf32>, vector<240x16xf32>, vector<240x16xf32> -> vector<240x16xf32>
    %c0_46 = arith.constant 0 : index
    %c0_47 = arith.constant 0 : index
    %118 = vector.load %arg7[%c0_46, %c0_47] : memref<16x16xf32, #tpu.memory_space<vmem>>, vector<16x16xf32>
    %cst_48 = arith.constant dense<0.000000e+00> : vector<240x16xf32>
    %119 = tpu.matmul %117, %118, %cst_48 {dimension_numbers = #tpu.dot_dimension_numbers<[1], [0], [0], [1], [0, 0, 1, 1], [], []>} : vector<240x16xf32>, vector<16x16xf32>, vector<240x16xf32> -> vector<240x16xf32>
    %120 = vector.broadcast %108 : vector<1x16xf32> to vector<240x16xf32>
    %121 = arith.addf %119, %120 : vector<240x16xf32>
    %cst_49 = arith.constant dense<0.000000e+00> : vector<16xf32>
    %122 = vector.multi_reduction <add>, %121, %cst_49 [0] : vector<240x16xf32> to vector<16xf32>
    %123 = vector.shape_cast %122 : vector<16xf32> to vector<1x16xf32>
    %cst_50 = arith.constant 2.400000e+02 : f32
    %124 = vector.broadcast %cst_50 : f32 to vector<1x16xf32>
    %125 = arith.divf %123, %124 : vector<1x16xf32>
    %126 = vector.broadcast %125 : vector<1x16xf32> to vector<240x16xf32>
    %127 = arith.subf %121, %126 : vector<240x16xf32>
    %128 = arith.mulf %127, %127 : vector<240x16xf32>
    %cst_51 = arith.constant dense<0.000000e+00> : vector<16xf32>
    %129 = vector.multi_reduction <add>, %128, %cst_51 [0] : vector<240x16xf32> to vector<16xf32>
    %130 = vector.shape_cast %129 : vector<16xf32> to vector<1x16xf32>
    %cst_52 = arith.constant 2.400000e+02 : f32
    %131 = vector.broadcast %cst_52 : f32 to vector<1x16xf32>
    %132 = arith.divf %130, %131 : vector<1x16xf32>
    %133 = vector.broadcast %125 : vector<1x16xf32> to vector<240x16xf32>
    %134 = arith.subf %121, %133 : vector<240x16xf32>
    %cst_53 = arith.constant 9.99999974E-6 : f32
    %135 = vector.broadcast %cst_53 : f32 to vector<1x16xf32>
    %136 = arith.addf %132, %135 : vector<1x16xf32>
    %137 = math.rsqrt %136 : vector<1x16xf32>
    %138 = vector.broadcast %137 : vector<1x16xf32> to vector<240x16xf32>
    %139 = arith.mulf %134, %138 : vector<240x16xf32>
    %140 = vector.broadcast %110 : vector<1x16xf32> to vector<240x16xf32>
    %141 = arith.mulf %139, %140 : vector<240x16xf32>
    %142 = vector.broadcast %111 : vector<1x16xf32> to vector<240x16xf32>
    %143 = arith.addf %141, %142 : vector<240x16xf32>
    %cst_54 = arith.constant 0.000000e+00 : f32
    %144 = vector.broadcast %cst_54 : f32 to vector<240x16xf32>
    %145 = arith.maximumf %143, %144 : vector<240x16xf32>
    %c0_55 = arith.constant 0 : index
    %c0_56 = arith.constant 0 : index
    %146 = vector.load %arg8[%c0_55, %c0_56] : memref<16x16xf32, #tpu.memory_space<vmem>>, vector<16x16xf32>
    %cst_57 = arith.constant dense<0.000000e+00> : vector<240x16xf32>
    %147 = tpu.matmul %145, %146, %cst_57 {dimension_numbers = #tpu.dot_dimension_numbers<[1], [0], [0], [1], [0, 0, 1, 1], [], []>} : vector<240x16xf32>, vector<16x16xf32>, vector<240x16xf32> -> vector<240x16xf32>
    %148 = vector.broadcast %109 : vector<1x16xf32> to vector<240x16xf32>
    %149 = arith.addf %147, %148 : vector<240x16xf32>
    %cst_58 = arith.constant dense<0.000000e+00> : vector<16xf32>
    %150 = vector.multi_reduction <add>, %149, %cst_58 [0] : vector<240x16xf32> to vector<16xf32>
    %151 = vector.shape_cast %150 : vector<16xf32> to vector<1x16xf32>
    %cst_59 = arith.constant 2.400000e+02 : f32
    %152 = vector.broadcast %cst_59 : f32 to vector<1x16xf32>
    %153 = arith.divf %151, %152 : vector<1x16xf32>
    %154 = vector.broadcast %153 : vector<1x16xf32> to vector<240x16xf32>
    %155 = arith.subf %149, %154 : vector<240x16xf32>
    %156 = arith.mulf %155, %155 : vector<240x16xf32>
    %cst_60 = arith.constant dense<0.000000e+00> : vector<16xf32>
    %157 = vector.multi_reduction <add>, %156, %cst_60 [0] : vector<240x16xf32> to vector<16xf32>
    %158 = vector.shape_cast %157 : vector<16xf32> to vector<1x16xf32>
    %cst_61 = arith.constant 2.400000e+02 : f32
    %159 = vector.broadcast %cst_61 : f32 to vector<1x16xf32>
    %160 = arith.divf %158, %159 : vector<1x16xf32>
    %161 = vector.broadcast %153 : vector<1x16xf32> to vector<240x16xf32>
    %162 = arith.subf %149, %161 : vector<240x16xf32>
    %cst_62 = arith.constant 9.99999974E-6 : f32
    %163 = vector.broadcast %cst_62 : f32 to vector<1x16xf32>
    %164 = arith.addf %160, %163 : vector<1x16xf32>
    %165 = math.rsqrt %164 : vector<1x16xf32>
    %166 = vector.broadcast %165 : vector<1x16xf32> to vector<240x16xf32>
    %167 = arith.mulf %162, %166 : vector<240x16xf32>
    %168 = vector.broadcast %112 : vector<1x16xf32> to vector<240x16xf32>
    %169 = arith.mulf %167, %168 : vector<240x16xf32>
    %170 = vector.broadcast %113 : vector<1x16xf32> to vector<240x16xf32>
    %171 = arith.addf %169, %170 : vector<240x16xf32>
    %cst_63 = arith.constant 0.000000e+00 : f32
    %172 = vector.broadcast %cst_63 : f32 to vector<240x16xf32>
    %173 = arith.maximumf %171, %172 : vector<240x16xf32>
    %cst_64 = arith.constant dense<0.000000e+00> : vector<16xf32>
    %174 = vector.multi_reduction <add>, %173, %cst_64 [0] : vector<240x16xf32> to vector<16xf32>
    %175 = vector.shape_cast %174 : vector<16xf32> to vector<1x16xf32>
    %cst_65 = arith.constant 2.400000e+02 : f32
    %176 = vector.broadcast %cst_65 : f32 to vector<1x16xf32>
    %177 = arith.divf %175, %176 : vector<1x16xf32>
    %178 = vector.broadcast %177 : vector<1x16xf32> to vector<240x16xf32>
    %179 = arith.subf %173, %178 : vector<240x16xf32>
    %180 = arith.mulf %179, %179 : vector<240x16xf32>
    %cst_66 = arith.constant dense<0.000000e+00> : vector<16xf32>
    %181 = vector.multi_reduction <add>, %180, %cst_66 [0] : vector<240x16xf32> to vector<16xf32>
    %182 = vector.shape_cast %181 : vector<16xf32> to vector<1x16xf32>
    %cst_67 = arith.constant 2.400000e+02 : f32
    %183 = vector.broadcast %cst_67 : f32 to vector<1x16xf32>
    %184 = arith.divf %182, %183 : vector<1x16xf32>
    %185 = vector.broadcast %177 : vector<1x16xf32> to vector<240x16xf32>
    %186 = arith.subf %173, %185 : vector<240x16xf32>
    %cst_68 = arith.constant 9.99999974E-6 : f32
    %187 = vector.broadcast %cst_68 : f32 to vector<1x16xf32>
    %188 = arith.addf %184, %187 : vector<1x16xf32>
    %189 = math.rsqrt %188 : vector<1x16xf32>
    %190 = vector.broadcast %189 : vector<1x16xf32> to vector<240x16xf32>
    %191 = arith.mulf %186, %190 : vector<240x16xf32>
    %192 = vector.broadcast %114 : vector<1x16xf32> to vector<240x16xf32>
    %193 = arith.mulf %191, %192 : vector<240x16xf32>
    %194 = vector.broadcast %115 : vector<1x16xf32> to vector<240x16xf32>
    %195 = arith.addf %193, %194 : vector<240x16xf32>
    %cst_69 = arith.constant 0.000000e+00 : f32
    %196 = vector.broadcast %cst_69 : f32 to vector<240x16xf32>
    %197 = arith.maximumf %195, %196 : vector<240x16xf32>
    %cst_70 = arith.constant dense<0.000000e+00> : vector<30x16xf32>
    %198 = tpu.matmul %1, %197, %cst_70 {dimension_numbers = #tpu.dot_dimension_numbers<[1], [0], [0], [1], [0, 0, 1, 1], [], []>} : vector<30x240xf32>, vector<240x16xf32>, vector<30x16xf32> -> vector<30x16xf32>
    %c0_71 = arith.constant 0 : index
    %c0_72 = arith.constant 0 : index
    %199 = vector.load %arg12[%c0_71, %c0_72] : memref<16x16xf32, #tpu.memory_space<vmem>>, vector<16x16xf32>
    %cst_73 = arith.constant dense<0.000000e+00> : vector<30x16xf32>
    %200 = tpu.matmul %198, %199, %cst_73 {dimension_numbers = #tpu.dot_dimension_numbers<[1], [0], [0], [1], [0, 0, 1, 1], [], []>} : vector<30x16xf32>, vector<16x16xf32>, vector<30x16xf32> -> vector<30x16xf32>
    %201 = arith.addf %106, %200 : vector<30x16xf32>
    %202 = vector.extract_strided_slice %2 {offsets = [2, 0], sizes = [1, 16], strides = [1, 1]} : vector<3x16xf32> to vector<1x16xf32>
    %203 = vector.broadcast %202 : vector<1x16xf32> to vector<30x16xf32>
    %204 = arith.addf %201, %203 : vector<30x16xf32>
    %c0_74 = arith.constant 0 : index
    %c0_75 = arith.constant 0 : index
    %205 = vector.load %arg14[%c0_74, %c0_75] : memref<10x15xf32, #tpu.memory_space<vmem>>, vector<10x15xf32>
    %c0_76 = arith.constant 0 : index
    %c0_77 = arith.constant 0 : index
    %206 = vector.load %arg15[%c0_76, %c0_77] : memref<1x1xf32, #tpu.memory_space<vmem>>, vector<1x1xf32>
    %207 = vector.extract_strided_slice %204 {offsets = [0, 0], sizes = [15, 16], strides = [1, 1]} : vector<30x16xf32> to vector<15x16xf32>
    %cst_78 = arith.constant dense<0.000000e+00> : vector<10x16xf32>
    %208 = tpu.matmul %205, %207, %cst_78 {dimension_numbers = #tpu.dot_dimension_numbers<[1], [0], [0], [1], [0, 0, 1, 1], [], []>} : vector<10x15xf32>, vector<15x16xf32>, vector<10x16xf32> -> vector<10x16xf32>
    %209 = vector.extract_strided_slice %208 {offsets = [0, 0], sizes = [1, 7], strides = [1, 1]} : vector<10x16xf32> to vector<1x7xf32>
    %210 = vector.extract_strided_slice %208 {offsets = [1, 1], sizes = [1, 7], strides = [1, 1]} : vector<10x16xf32> to vector<1x7xf32>
    %211 = arith.addf %209, %210 : vector<1x7xf32>
    %212 = vector.extract_strided_slice %208 {offsets = [2, 2], sizes = [1, 7], strides = [1, 1]} : vector<10x16xf32> to vector<1x7xf32>
    %213 = arith.addf %211, %212 : vector<1x7xf32>
    %214 = vector.extract_strided_slice %208 {offsets = [3, 3], sizes = [1, 7], strides = [1, 1]} : vector<10x16xf32> to vector<1x7xf32>
    %215 = arith.addf %213, %214 : vector<1x7xf32>
    %216 = vector.extract_strided_slice %208 {offsets = [4, 4], sizes = [1, 7], strides = [1, 1]} : vector<10x16xf32> to vector<1x7xf32>
    %217 = arith.addf %215, %216 : vector<1x7xf32>
    %218 = vector.extract_strided_slice %208 {offsets = [5, 5], sizes = [1, 7], strides = [1, 1]} : vector<10x16xf32> to vector<1x7xf32>
    %219 = arith.addf %217, %218 : vector<1x7xf32>
    %220 = vector.extract_strided_slice %208 {offsets = [6, 6], sizes = [1, 7], strides = [1, 1]} : vector<10x16xf32> to vector<1x7xf32>
    %221 = arith.addf %219, %220 : vector<1x7xf32>
    %222 = vector.extract_strided_slice %208 {offsets = [7, 7], sizes = [1, 7], strides = [1, 1]} : vector<10x16xf32> to vector<1x7xf32>
    %223 = arith.addf %221, %222 : vector<1x7xf32>
    %224 = vector.extract_strided_slice %208 {offsets = [8, 8], sizes = [1, 7], strides = [1, 1]} : vector<10x16xf32> to vector<1x7xf32>
    %225 = arith.addf %223, %224 : vector<1x7xf32>
    %226 = vector.extract_strided_slice %208 {offsets = [9, 9], sizes = [1, 7], strides = [1, 1]} : vector<10x16xf32> to vector<1x7xf32>
    %227 = arith.addf %225, %226 : vector<1x7xf32>
    %228 = vector.extract_strided_slice %204 {offsets = [15, 0], sizes = [15, 16], strides = [1, 1]} : vector<30x16xf32> to vector<15x16xf32>
    %cst_79 = arith.constant dense<0.000000e+00> : vector<10x16xf32>
    %229 = tpu.matmul %205, %228, %cst_79 {dimension_numbers = #tpu.dot_dimension_numbers<[1], [0], [0], [1], [0, 0, 1, 1], [], []>} : vector<10x15xf32>, vector<15x16xf32>, vector<10x16xf32> -> vector<10x16xf32>
    %230 = vector.extract_strided_slice %229 {offsets = [0, 0], sizes = [1, 7], strides = [1, 1]} : vector<10x16xf32> to vector<1x7xf32>
    %231 = vector.extract_strided_slice %229 {offsets = [1, 1], sizes = [1, 7], strides = [1, 1]} : vector<10x16xf32> to vector<1x7xf32>
    %232 = arith.addf %230, %231 : vector<1x7xf32>
    %233 = vector.extract_strided_slice %229 {offsets = [2, 2], sizes = [1, 7], strides = [1, 1]} : vector<10x16xf32> to vector<1x7xf32>
    %234 = arith.addf %232, %233 : vector<1x7xf32>
    %235 = vector.extract_strided_slice %229 {offsets = [3, 3], sizes = [1, 7], strides = [1, 1]} : vector<10x16xf32> to vector<1x7xf32>
    %236 = arith.addf %234, %235 : vector<1x7xf32>
    %237 = vector.extract_strided_slice %229 {offsets = [4, 4], sizes = [1, 7], strides = [1, 1]} : vector<10x16xf32> to vector<1x7xf32>
    %238 = arith.addf %236, %237 : vector<1x7xf32>
    %239 = vector.extract_strided_slice %229 {offsets = [5, 5], sizes = [1, 7], strides = [1, 1]} : vector<10x16xf32> to vector<1x7xf32>
    %240 = arith.addf %238, %239 : vector<1x7xf32>
    %241 = vector.extract_strided_slice %229 {offsets = [6, 6], sizes = [1, 7], strides = [1, 1]} : vector<10x16xf32> to vector<1x7xf32>
    %242 = arith.addf %240, %241 : vector<1x7xf32>
    %243 = vector.extract_strided_slice %229 {offsets = [7, 7], sizes = [1, 7], strides = [1, 1]} : vector<10x16xf32> to vector<1x7xf32>
    %244 = arith.addf %242, %243 : vector<1x7xf32>
    %245 = vector.extract_strided_slice %229 {offsets = [8, 8], sizes = [1, 7], strides = [1, 1]} : vector<10x16xf32> to vector<1x7xf32>
    %246 = arith.addf %244, %245 : vector<1x7xf32>
    %247 = vector.extract_strided_slice %229 {offsets = [9, 9], sizes = [1, 7], strides = [1, 1]} : vector<10x16xf32> to vector<1x7xf32>
    %248 = arith.addf %246, %247 : vector<1x7xf32>
    %249 = tpu.concatenate %227, %248 in 0 : vector<1x7xf32>, vector<1x7xf32> -> vector<2x7xf32>
    %250 = vector.broadcast %206 : vector<1x1xf32> to vector<2x7xf32>
    %251 = arith.addf %249, %250 : vector<2x7xf32>
    %c0_80 = arith.constant 0 : index
    %c0_81 = arith.constant 0 : index
    %252 = vector.load %arg16[%c0_80, %c0_81] : memref<2x7xf32, #tpu.memory_space<vmem>>, vector<2x7xf32>
    tpu.vector_store %arg16[%c0_80, %c0_81], %251 {strides = array<i32>} : memref<2x7xf32, #tpu.memory_space<vmem>>, vector<2x7xf32>,
    return
  }
}

</mosaic_0001>

<llo_original>
// kernel: tile.9
$region0: #{tile.9}
  %s0 = inlined_call_operand.vmem [shape: f32[30,8,30], index: 0, kind: input, shape index: {}]
  %s1 = inlined_call_operand.vmem [shape: f32[30,240], index: 1, kind: output, shape index: {}]
  %v2 = vld [vmem:[%s0] ss:$8 sm:$0xf]
  %v3 = vld [vmem:[%s0] ss:$8 sm:$0xf0]
  %vm4 = vcmask 1047556
  %v5 = vsel %vm4, %v3, %v2
  %vm6 = vcmask 244736
  %7 = vst.msk [vmem:[%s1] sm:$0xff] %vm6, %v5
  %s8 = scalar_lea.vmem %s0, 64
  %v9 = vld [vmem:[%s8] ss:$8 sm:$0xf]
  %s10 = scalar_lea.vmem %s0, 64
  %v11 = vld [vmem:[%s10] ss:$8 sm:$0xf0]
  %vm12 = vcmask 1047556
  %v13 = vsel %vm12, %v11, %v9
  %vm14 = vcmask 244736
  %s15 = scalar_lea.vmem %s1, 16
  %16 = vst.msk [vmem:[%s15] sm:$0xff] %vm14, %v13
  %s17 = scalar_lea.vmem %s0, 128
  %v18 = vld [vmem:[%s17] ss:$8 sm:$0xf]
  %s19 = scalar_lea.vmem %s0, 128
  %v20 = vld [vmem:[%s19] ss:$8 sm:$0xf0]
  %vm21 = vcmask 1047556
  %v22 = vsel %vm21, %v20, %v18
  %vm23 = vcmask 244736
  %s24 = scalar_lea.vmem %s1, 32
  %25 = vst.msk [vmem:[%s24] sm:$0xff] %vm23, %v22
  %s26 = scalar_lea.vmem %s0, 192
  %v27 = vld [vmem:[%s26] ss:$8 sm:$0xf]
  %s28 = scalar_lea.vmem %s0, 192
  %s29 = smov 48
  %v30 = vld [vmem:[%s28] ss:$8 sm:%s29]
  %vm31 = vcmask 1045508
  %v32 = vsel %vm31, %v30, %v27
  %vm33 = vcmask 244736
  %s34 = scalar_lea.vmem %s1, 48
  %35 = vst.msk [vmem:[%s34] sm:$0x3f] %vm33, %v32
  %s36 = scalar_lea.vmem %s0, 4
  %v37 = vld [vmem:[%s36] ss:$8 sm:$0xf]
  %s38 = scalar_lea.vmem %s0, 4
  %v39 = vld [vmem:[%s38] ss:$8 sm:$0xf0]
  %vm40 = vcmask 1047556
  %v41 = vsel %vm40, %v39, %v37
  %s42 = scalar_lea.vmem %s0, 4
  %v43 = vld [vmem:[%s42] ss:$8 sm:$0xf]
  %s44 = scalar_lea.vmem %s0, 4
  %v45 = vld [vmem:[%s44] ss:$8 sm:$0xf0]
  %vm46 = vcmask 1047556
  %v47 = vsel %vm46, %v45, %v43
  %vm48 = vcmask 64512
  %v49 = vsel %vm48, %v47, %v41
  %50 = vrot.lane.b32.xlu0 %v49, 120
  %v51 = vpop.permute.xlu0 %50
  %vm52 = vcmask 179200
  %s53 = scalar_lea.vmem %s1, 8
  %54 = vst.msk [vmem:[%s53] sm:$0xff] %vm52, %v51
  %vm55 = vcmask 1048512
  %56 = vst.msk [vmem:[%s1] sm:$0xff] %vm55, %v51
  %s57 = scalar_lea.vmem %s0, 132
  %v58 = vld [vmem:[%s57] ss:$8 sm:$0xf]
  %s59 = scalar_lea.vmem %s0, 132
  %v60 = vld [vmem:[%s59] ss:$8 sm:$0xf0]
  %vm61 = vcmask 1047556
  %v62 = vsel %vm61, %v60, %v58
  %s63 = scalar_lea.vmem %s0, 132
  %v64 = vld [vmem:[%s63] ss:$8 sm:$0xf]
  %s65 = scalar_lea.vmem %s0, 132
  %v66 = vld [vmem:[%s65] ss:$8 sm:$0xf0]
  %vm67 = vcmask 1047556
  %v68 = vsel %vm67, %v66, %v64
  %vm69 = vcmask 64512
  %v70 = vsel %vm69, %v68, %v62
  %71 = vrot.lane.b32.xlu0 %v70, 120
  %v72 = vpop.permute.xlu0 %71
  %vm73 = vcmask 179200
  %s74 = scalar_lea.vmem %s1, 40
  %75 = vst.msk [vmem:[%s74] sm:$0xff] %vm73, %v72
  %vm76 = vcmask 1048512
  %s77 = scalar_lea.vmem %s1, 32
  %78 = vst.msk [vmem:[%s77] sm:$0xff] %vm76, %v72
  %s79 = scalar_lea.vmem %s0, 68
  %v80 = vld [vmem:[%s79] ss:$8 sm:$0xf]
  %s81 = scalar_lea.vmem %s0, 68
  %v82 = vld [vmem:[%s81] ss:$8 sm:$0xf0]
  %vm83 = vcmask 1047556
  %v84 = vsel %vm83, %v82, %v80
  %s85 = scalar_lea.vmem %s0, 68
  %v86 = vld [vmem:[%s85] ss:$8 sm:$0xf]
  %s87 = scalar_lea.vmem %s0, 68
  %v88 = vld [vmem:[%s87] ss:$8 sm:$0xf0]
  %vm89 = vcmask 1047556
  %v90 = vsel %vm89, %v88, %v86
  %vm91 = vcmask 64512
  %v92 = vsel %vm91, %v90, %v84
  %93 = vrot.lane.b32.xlu0 %v92, 120
  %v94 = vpop.permute.xlu0 %93
  %vm95 = vcmask 179200
  %s96 = scalar_lea.vmem %s1, 24
  %97 = vst.msk [vmem:[%s96] sm:$0xff] %vm95, %v94
  %vm98 = vcmask 1048512
  %s99 = scalar_lea.vmem %s1, 16
  %100 = vst.msk [vmem:[%s99] sm:$0xff] %vm98, %v94
  %s101 = scalar_lea.vmem %s0, 196
  %v102 = vld [vmem:[%s101] ss:$8 sm:$0xf]
  %s103 = scalar_lea.vmem %s0, 196
  %s104 = smov 48
  %v105 = vld [vmem:[%s103] ss:$8 sm:%s104]
  %vm106 = vcmask 1045508
  %v107 = vsel %vm106, %v105, %v102
  %s108 = scalar_lea.vmem %s0, 196
  %v109 = vld [vmem:[%s108] ss:$8 sm:$0xf]
  %s110 = scalar_lea.vmem %s0, 196
  %s111 = smov 48
  %v112 = vld [vmem:[%s110] ss:$8 sm:%s111]
  %vm113 = vcmask 1045508
  %v114 = vsel %vm113, %v112, %v109
  %vm115 = vcmask 64512
  %v116 = vsel %vm115, %v114, %v107
  %117 = vrot.lane.b32.xlu0 %v116, 120
  %v118 = vpop.permute.xlu0 %117
  %vm119 = vcmask 179200
  %s120 = scalar_lea.vmem %s1, 56
  %121 = vst.msk [vmem:[%s120] sm:$0x3f] %vm119, %v118
  %vm122 = vcmask 1048512
  %s123 = scalar_lea.vmem %s1, 48
  %124 = vst.msk [vmem:[%s123] sm:$0x3f] %vm122, %v118
  %s125 = scalar_lea.vmem %s0, 3
  %v126 = vld [vmem:[%s125] ss:$8 sm:$0xf]
  %s127 = scalar_lea.vmem %s0, 3
  %v128 = vld [vmem:[%s127] ss:$8 sm:$0xf0]
  %vm129 = vcmask 1047556
  %v130 = vsel %vm129, %v128, %v126
  %131 = vrot.lane.b32.xlu0 %v130, 90
  %v132 = vpop.permute.xlu0 %131
  %vm133 = vcmask 982736
  %134 = vst.msk [vmem:[%s1] sm:$0xff] %vm133, %v132
  %s135 = scalar_lea.vmem %s0, 131
  %v136 = vld [vmem:[%s135] ss:$8 sm:$0xf]
  %s137 = scalar_lea.vmem %s0, 131
  %v138 = vld [vmem:[%s137] ss:$8 sm:$0xf0]
  %vm139 = vcmask 1047556
  %v140 = vsel %vm139, %v138, %v136
  %141 = vrot.lane.b32.xlu0 %v140, 90
  %v142 = vpop.permute.xlu0 %141
  %vm143 = vcmask 982736
  %s144 = scalar_lea.vmem %s1, 32
  %145 = vst.msk [vmem:[%s144] sm:$0xff] %vm143, %v142
  %s146 = scalar_lea.vmem %s0, 67
  %v147 = vld [vmem:[%s146] ss:$8 sm:$0xf]
  %s148 = scalar_lea.vmem %s0, 67
  %v149 = vld [vmem:[%s148] ss:$8 sm:$0xf0]
  %vm150 = vcmask 1047556
  %v151 = vsel %vm150, %v149, %v147
  %152 = vrot.lane.b32.xlu0 %v151, 90
  %v153 = vpop.permute.xlu0 %152
  %vm154 = vcmask 982736
  %s155 = scalar_lea.vmem %s1, 16
  %156 = vst.msk [vmem:[%s155] sm:$0xff] %vm154, %v153
  %s157 = scalar_lea.vmem %s0, 195
  %v158 = vld [vmem:[%s157] ss:$8 sm:$0xf]
  %s159 = scalar_lea.vmem %s0, 195
  %s160 = smov 48
  %v161 = vld [vmem:[%s159] ss:$8 sm:%s160]
  %vm162 = vcmask 1045508
  %v163 = vsel %vm162, %v161, %v158
  %164 = vrot.lane.b32.xlu0 %v163, 90
  %v165 = vpop.permute.xlu0 %164
  %vm166 = vcmask 982736
  %s167 = scalar_lea.vmem %s1, 48
  %168 = vst.msk [vmem:[%s167] sm:$0x3f] %vm166, %v165
  %s169 = scalar_lea.vmem %s0, 7
  %v170 = vld [vmem:[%s169] ss:$8 sm:$0xf]
  %s171 = scalar_lea.vmem %s0, 7
  %v172 = vld [vmem:[%s171] ss:$8 sm:$0xf0]
  %vm173 = vcmask 1047556
  %v174 = vsel %vm173, %v172, %v170
  %175 = vrot.lane.b32.xlu0 %v174, 82
  %v176 = vpop.permute.xlu0 %175
  %vm177 = vcmask 917136
  %s178 = scalar_lea.vmem %s1, 8
  %179 = vst.msk [vmem:[%s178] sm:$0xff] %vm177, %v176
  %s180 = scalar_lea.vmem %s0, 135
  %v181 = vld [vmem:[%s180] ss:$8 sm:$0xf]
  %s182 = scalar_lea.vmem %s0, 135
  %v183 = vld [vmem:[%s182] ss:$8 sm:$0xf0]
  %vm184 = vcmask 1047556
  %v185 = vsel %vm184, %v183, %v181
  %186 = vrot.lane.b32.xlu0 %v185, 82
  %v187 = vpop.permute.xlu0 %186
  %vm188 = vcmask 917136
  %s189 = scalar_lea.vmem %s1, 40
  %190 = vst.msk [vmem:[%s189] sm:$0xff] %vm188, %v187
  %s191 = scalar_lea.vmem %s0, 71
  %v192 = vld [vmem:[%s191] ss:$8 sm:$0xf]
  %s193 = scalar_lea.vmem %s0, 71
  %v194 = vld [vmem:[%s193] ss:$8 sm:$0xf0]
  %vm195 = vcmask 1047556
  %v196 = vsel %vm195, %v194, %v192
  %197 = vrot.lane.b32.xlu0 %v196, 82
  %v198 = vpop.permute.xlu0 %197
  %vm199 = vcmask 917136
  %s200 = scalar_lea.vmem %s1, 24
  %201 = vst.msk [vmem:[%s200] sm:$0xff] %vm199, %v198
  %s202 = scalar_lea.vmem %s0, 199
  %v203 = vld [vmem:[%s202] ss:$8 sm:$0xf]
  %s204 = scalar_lea.vmem %s0, 199
  %s205 = smov 48
  %v206 = vld [vmem:[%s204] ss:$8 sm:%s205]
  %vm207 = vcmask 1045508
  %v208 = vsel %vm207, %v206, %v203
  %209 = vrot.lane.b32.xlu0 %v208, 82
  %v210 = vpop.permute.xlu0 %209
  %vm211 = vcmask 917136
  %s212 = scalar_lea.vmem %s1, 56
  %213 = vst.msk [vmem:[%s212] sm:$0x3f] %vm211, %v210
  %s214 = scalar_lea.vmem %s0, 2
  %v215 = vld [vmem:[%s214] ss:$8 sm:$0xf]
  %s216 = scalar_lea.vmem %s0, 2
  %v217 = vld [vmem:[%s216] ss:$8 sm:$0xf0]
  %vm218 = vcmask 1047556
  %v219 = vsel %vm218, %v217, %v215
  %220 = vrot.lane.b32.xlu0 %v219, 60
  %v221 = vpop.permute.xlu0 %220
  %vm222 = vcmask 736736
  %223 = vst.msk [vmem:[%s1] sm:$0xff] %vm222, %v221
  %s224 = scalar_lea.vmem %s0, 130
  %v225 = vld [vmem:[%s224] ss:$8 sm:$0xf]
  %s226 = scalar_lea.vmem %s0, 130
  %v227 = vld [vmem:[%s226] ss:$8 sm:$0xf0]
  %vm228 = vcmask 1047556
  %v229 = vsel %vm228, %v227, %v225
  %230 = vrot.lane.b32.xlu0 %v229, 60
  %v231 = vpop.permute.xlu0 %230
  %vm232 = vcmask 736736
  %s233 = scalar_lea.vmem %s1, 32
  %234 = vst.msk [vmem:[%s233] sm:$0xff] %vm232, %v231
  %s235 = scalar_lea.vmem %s0, 66
  %v236 = vld [vmem:[%s235] ss:$8 sm:$0xf]
  %s237 = scalar_lea.vmem %s0, 66
  %v238 = vld [vmem:[%s237] ss:$8 sm:$0xf0]
  %vm239 = vcmask 1047556
  %v240 = vsel %vm239, %v238, %v236
  %241 = vrot.lane.b32.xlu0 %v240, 60
  %v242 = vpop.permute.xlu0 %241
  %vm243 = vcmask 736736
  %s244 = scalar_lea.vmem %s1, 16
  %245 = vst.msk [vmem:[%s244] sm:$0xff] %vm243, %v242
  %s246 = scalar_lea.vmem %s0, 194
  %v247 = vld [vmem:[%s246] ss:$8 sm:$0xf]
  %s248 = scalar_lea.vmem %s0, 194
  %s249 = smov 48
  %v250 = vld [vmem:[%s248] ss:$8 sm:%s249]
  %vm251 = vcmask 1045508
  %v252 = vsel %vm251, %v250, %v247
  %253 = vrot.lane.b32.xlu0 %v252, 60
  %v254 = vpop.permute.xlu0 %253
  %vm255 = vcmask 736736
  %s256 = scalar_lea.vmem %s1, 48
  %257 = vst.msk [vmem:[%s256] sm:$0x3f] %vm255, %v254
  %s258 = scalar_lea.vmem %s0, 6
  %v259 = vld [vmem:[%s258] ss:$8 sm:$0xf]
  %s260 = scalar_lea.vmem %s0, 6
  %v261 = vld [vmem:[%s260] ss:$8 sm:$0xf0]
  %vm262 = vcmask 1047556
  %v263 = vsel %vm262, %v261, %v259
  %264 = vrot.lane.b32.xlu0 %v263, 52
  %v265 = vpop.permute.xlu0 %264
  %vm266 = vcmask 671136
  %s267 = scalar_lea.vmem %s1, 8
  %268 = vst.msk [vmem:[%s267] sm:$0xff] %vm266, %v265
  %s269 = scalar_lea.vmem %s0, 134
  %v270 = vld [vmem:[%s269] ss:$8 sm:$0xf]
  %s271 = scalar_lea.vmem %s0, 134
  %v272 = vld [vmem:[%s271] ss:$8 sm:$0xf0]
  %vm273 = vcmask 1047556
  %v274 = vsel %vm273, %v272, %v270
  %275 = vrot.lane.b32.xlu0 %v274, 52
  %v276 = vpop.permute.xlu0 %275
  %vm277 = vcmask 671136
  %s278 = scalar_lea.vmem %s1, 40
  %279 = vst.msk [vmem:[%s278] sm:$0xff] %vm277, %v276
  %s280 = scalar_lea.vmem %s0, 70
  %v281 = vld [vmem:[%s280] ss:$8 sm:$0xf]
  %s282 = scalar_lea.vmem %s0, 70
  %v283 = vld [vmem:[%s282] ss:$8 sm:$0xf0]
  %vm284 = vcmask 1047556
  %v285 = vsel %vm284, %v283, %v281
  %286 = vrot.lane.b32.xlu0 %v285, 52
  %v287 = vpop.permute.xlu0 %286
  %vm288 = vcmask 671136
  %s289 = scalar_lea.vmem %s1, 24
  %290 = vst.msk [vmem:[%s289] sm:$0xff] %vm288, %v287
  %s291 = scalar_lea.vmem %s0, 198
  %v292 = vld [vmem:[%s291] ss:$8 sm:$0xf]
  %s293 = scalar_lea.vmem %s0, 198
  %s294 = smov 48
  %v295 = vld [vmem:[%s293] ss:$8 sm:%s294]
  %vm296 = vcmask 1045508
  %v297 = vsel %vm296, %v295, %v292
  %298 = vrot.lane.b32.xlu0 %v297, 52
  %v299 = vpop.permute.xlu0 %298
  %vm300 = vcmask 671136
  %s301 = scalar_lea.vmem %s1, 56
  %302 = vst.msk [vmem:[%s301] sm:$0x3f] %vm300, %v299
  %s303 = scalar_lea.vmem %s0, 1
  %v304 = vld [vmem:[%s303] ss:$8 sm:$0xf]
  %s305 = scalar_lea.vmem %s0, 1
  %v306 = vld [vmem:[%s305] ss:$8 sm:$0xf0]
  %vm307 = vcmask 1047556
  %v308 = vsel %vm307, %v306, %v304
  %309 = vrot.lane.b32.xlu0 %v308, 30
  %v310 = vpop.permute.xlu0 %309
  %vm311 = vcmask 490736
  %312 = vst.msk [vmem:[%s1] sm:$0xff] %vm311, %v310
  %s313 = scalar_lea.vmem %s0, 129
  %v314 = vld [vmem:[%s313] ss:$8 sm:$0xf]
  %s315 = scalar_lea.vmem %s0, 129
  %v316 = vld [vmem:[%s315] ss:$8 sm:$0xf0]
  %vm317 = vcmask 1047556
  %v318 = vsel %vm317, %v316, %v314
  %319 = vrot.lane.b32.xlu0 %v318, 30
  %v320 = vpop.permute.xlu0 %319
  %vm321 = vcmask 490736
  %s322 = scalar_lea.vmem %s1, 32
  %323 = vst.msk [vmem:[%s322] sm:$0xff] %vm321, %v320
  %s324 = scalar_lea.vmem %s0, 65
  %v325 = vld [vmem:[%s324] ss:$8 sm:$0xf]
  %s326 = scalar_lea.vmem %s0, 65
  %v327 = vld [vmem:[%s326] ss:$8 sm:$0xf0]
  %vm328 = vcmask 1047556
  %v329 = vsel %vm328, %v327, %v325
  %330 = vrot.lane.b32.xlu0 %v329, 30
  %v331 = vpop.permute.xlu0 %330
  %vm332 = vcmask 490736
  %s333 = scalar_lea.vmem %s1, 16
  %334 = vst.msk [vmem:[%s333] sm:$0xff] %vm332, %v331
  %s335 = scalar_lea.vmem %s0, 193
  %v336 = vld [vmem:[%s335] ss:$8 sm:$0xf]
  %s337 = scalar_lea.vmem %s0, 193
  %s338 = smov 48
  %v339 = vld [vmem:[%s337] ss:$8 sm:%s338]
  %vm340 = vcmask 1045508
  %v341 = vsel %vm340, %v339, %v336
  %342 = vrot.lane.b32.xlu0 %v341, 30
  %v343 = vpop.permute.xlu0 %342
  %vm344 = vcmask 490736
  %s345 = scalar_lea.vmem %s1, 48
  %346 = vst.msk [vmem:[%s345] sm:$0x3f] %vm344, %v343
  %s347 = scalar_lea.vmem %s0, 5
  %v348 = vld [vmem:[%s347] ss:$8 sm:$0xf]
  %s349 = scalar_lea.vmem %s0, 5
  %v350 = vld [vmem:[%s349] ss:$8 sm:$0xf0]
  %vm351 = vcmask 1047556
  %v352 = vsel %vm351, %v350, %v348
  %353 = vrot.lane.b32.xlu0 %v352, 22
  %v354 = vpop.permute.xlu0 %353
  %vm355 = vcmask 425136
  %s356 = scalar_lea.vmem %s1, 8
  %357 = vst.msk [vmem:[%s356] sm:$0xff] %vm355, %v354
  %s358 = scalar_lea.vmem %s0, 133
  %v359 = vld [vmem:[%s358] ss:$8 sm:$0xf]
  %s360 = scalar_lea.vmem %s0, 133
  %v361 = vld [vmem:[%s360] ss:$8 sm:$0xf0]
  %vm362 = vcmask 1047556
  %v363 = vsel %vm362, %v361, %v359
  %364 = vrot.lane.b32.xlu0 %v363, 22
  %v365 = vpop.permute.xlu0 %364
  %vm366 = vcmask 425136
  %s367 = scalar_lea.vmem %s1, 40
  %368 = vst.msk [vmem:[%s367] sm:$0xff] %vm366, %v365
  %s369 = scalar_lea.vmem %s0, 69
  %v370 = vld [vmem:[%s369] ss:$8 sm:$0xf]
  %s371 = scalar_lea.vmem %s0, 69
  %v372 = vld [vmem:[%s371] ss:$8 sm:$0xf0]
  %vm373 = vcmask 1047556
  %v374 = vsel %vm373, %v372, %v370
  %375 = vrot.lane.b32.xlu0 %v374, 22
  %v376 = vpop.permute.xlu0 %375
  %vm377 = vcmask 425136
  %s378 = scalar_lea.vmem %s1, 24
  %379 = vst.msk [vmem:[%s378] sm:$0xff] %vm377, %v376
  %s380 = scalar_lea.vmem %s0, 197
  %v381 = vld [vmem:[%s380] ss:$8 sm:$0xf]
  %s382 = scalar_lea.vmem %s0, 197
  %s383 = smov 48
  %v384 = vld [vmem:[%s382] ss:$8 sm:%s383]
  %vm385 = vcmask 1045508
  %v386 = vsel %vm385, %v384, %v381
  %387 = vrot.lane.b32.xlu0 %v386, 22
  %v388 = vpop.permute.xlu0 %387
  %vm389 = vcmask 425136
  %s390 = scalar_lea.vmem %s1, 56
  %391 = vst.msk [vmem:[%s390] sm:$0x3f] %vm389, %v388

// kernel: gin_forward.1
$region0: #{gin_forward.1}
  #allocation0 [shape = 'u32[]', space=smem, size = 0x4, offset = 0x4, fixed_abs, tag = 'smem constant byte address 0x4 - core index']
  #allocation1 [shape = 'u32[144,128]{1,0:T(1,128)}', space=vmem, size = 0x12000, scoped, tag = 'internal scratch']
  #allocation2 [shape = 'f32[1,1]{1,0:T(1,128)S(1)}', space=vmem, size = 0x200, scoped, tag = 'scoped memory for gin_forward.1']
  %s0 = inlined_call_operand.vmem [shape: f32[240,8], index: 0, kind: input, shape index: {}]
  %s1 = inlined_call_operand.vmem [shape: f32[30,240], index: 1, kind: input, shape index: {}]
  %s2 = inlined_call_operand.vmem [shape: f32[240,240], index: 2, kind: input, shape index: {}]
  %s3 = inlined_call_operand.vmem [shape: f32[240,240], index: 3, kind: input, shape index: {}]
  %s4 = inlined_call_operand.vmem [shape: f32[8,16], index: 4, kind: input, shape index: {}]
  %s5 = inlined_call_operand.vmem [shape: f32[16,16], index: 5, kind: input, shape index: {}]
  %s6 = inlined_call_operand.vmem [shape: f32[8,16], index: 6, kind: input, shape index: {}]
  %s7 = inlined_call_operand.vmem [shape: f32[16,16], index: 7, kind: input, shape index: {}]
  %s8 = inlined_call_operand.vmem [shape: f32[16,16], index: 8, kind: input, shape index: {}]
  %s9 = inlined_call_operand.vmem [shape: f32[8,16], index: 9, kind: input, shape index: {}]
  %s10 = inlined_call_operand.vmem [shape: f32[8,16], index: 10, kind: input, shape index: {}]
  %s11 = inlined_call_operand.vmem [shape: f32[16,16], index: 11, kind: input, shape index: {}]
  %s12 = inlined_call_operand.vmem [shape: f32[16,16], index: 12, kind: input, shape index: {}]
  %s13 = inlined_call_operand.vmem [shape: f32[3,16], index: 13, kind: input, shape index: {}]
  %s14 = inlined_call_operand.vmem [shape: f32[10,15], index: 14, kind: input, shape index: {}]
  %s15 = inlined_call_operand.<no memory space> [shape: f32[1,1], index: 15, kind: input, shape index: {}]
  %s16 = inlined_call_operand.hbm [shape: f32[2,7], index: 16, kind: output, shape index: {}]
  %s17 = sld [smem:[#allocation0]]
  $region74: #{gin_forward.1} parent=0
    _
  %s19 = ssub.s32 1, %s17
  %s20 = scalar_select 0, %s19, %s17
  %v21 = vstv %s15
  %22 = vst [vmem:[#allocation2] sm:$0x1] %v21
  $region1: #{gin_forward.1} parent=0
    #allocation3 [shape = 'u8[1024]{0}', space=vmem, size = 0x400, scoped, tag = 'output window, operand 0, single buffered']
    #allocation4 [shape = 's32[1]{0}', space=sflag, size = 0x4, scoped, tag = 'scoped memory for gin_forward.1']
    %23 = vsyncpa [#allocation4], 0
    // Predicated region
    $region2: #{gin_forward.1} parent=1 // pred_check
      _
    $region3: #{gin_forward.1} parent=1 // pred_check_branch
      %25 = sbr.rel (0) target = $region5
    $region4: #{gin_forward.1} parent=1 // pred_region
      _
    $region5: #{gin_forward.1} parent=1 // pred_fallthru
      _
    // Predicated region
    $region6: #{gin_forward.1} parent=1 // pred_check
      _
    $region7: #{gin_forward.1} parent=1 // pred_check_branch
      %27 = sbr.rel (0) target = $region9
    $region8: #{gin_forward.1} parent=1 // pred_region
      _
    $region9: #{gin_forward.1} parent=1 // pred_fallthru
      _
    // Predicated region
    $region10: #{gin_forward.1} parent=1 // pred_check
      _
    $region11: #{gin_forward.1} parent=1 // pred_check_branch
      %29 = sbr.rel (0) target = $region13
    $region12: #{gin_forward.1} parent=1 // pred_region
      _
    $region13: #{gin_forward.1} parent=1 // pred_fallthru
      _
    // Predicated region
    $region14: #{gin_forward.1} parent=1 // pred_check
      _
    $region15: #{gin_forward.1} parent=1 // pred_check_branch
      %31 = sbr.rel (0) target = $region17
    $region16: #{gin_forward.1} parent=1 // pred_region
      _
    $region17: #{gin_forward.1} parent=1 // pred_fallthru
      _
    // Predicated region
    $region18: #{gin_forward.1} parent=1 // pred_check
      _
    $region19: #{gin_forward.1} parent=1 // pred_check_branch
      %33 = sbr.rel (0) target = $region21
    $region20: #{gin_forward.1} parent=1 // pred_region
      _
    $region21: #{gin_forward.1} parent=1 // pred_fallthru
      _
    // Predicated region
    $region22: #{gin_forward.1} parent=1 // pred_check
      _
    $region23: #{gin_forward.1} parent=1 // pred_check_branch
      %35 = sbr.rel (0) target = $region25
    $region24: #{gin_forward.1} parent=1 // pred_region
      _
    $region25: #{gin_forward.1} parent=1 // pred_fallthru
      _
    // Predicated region
    $region26: #{gin_forward.1} parent=1 // pred_check
      _
    $region27: #{gin_forward.1} parent=1 // pred_check_branch
      %37 = sbr.rel (0) target = $region29
    $region28: #{gin_forward.1} parent=1 // pred_region
      _
    $region29: #{gin_forward.1} parent=1 // pred_fallthru
      _
    // Predicated region
    $region30: #{gin_forward.1} parent=1 // pred_check
      _
    $region31: #{gin_forward.1} parent=1 // pred_check_branch
      %39 = sbr.rel (0) target = $region33
    $region32: #{gin_forward.1} parent=1 // pred_region
      _
    $region33: #{gin_forward.1} parent=1 // pred_fallthru
      _
    // Predicated region
    $region34: #{gin_forward.1} parent=1 // pred_check
      _
    $region35: #{gin_forward.1} parent=1 // pred_check_branch
      %41 = sbr.rel (0) target = $region37
    $region36: #{gin_forward.1} parent=1 // pred_region
      _
    $region37: #{gin_forward.1} parent=1 // pred_fallthru
      _
    // Predicated region
    $region38: #{gin_forward.1} parent=1 // pred_check
      _
    $region39: #{gin_forward.1} parent=1 // pred_check_branch
      %43 = sbr.rel (0) target = $region41
    $region40: #{gin_forward.1} parent=1 // pred_region
      _
    $region41: #{gin_forward.1} parent=1 // pred_fallthru
      _
    // Predicated region
    $region42: #{gin_forward.1} parent=1 // pred_check
      _
    $region43: #{gin_forward.1} parent=1 // pred_check_branch
      %45 = sbr.rel (0) target = $region45
    $region44: #{gin_forward.1} parent=1 // pred_region
      _
    $region45: #{gin_forward.1} parent=1 // pred_fallthru
      _
    // Predicated region
    $region46: #{gin_forward.1} parent=1 // pred_check
      _
    $region47: #{gin_forward.1} parent=1 // pred_check_branch
      %47 = sbr.rel (0) target = $region49
    $region48: #{gin_forward.1} parent=1 // pred_region
      _
    $region49: #{gin_forward.1} parent=1 // pred_fallthru
      _
    // Predicated region
    $region50: #{gin_forward.1} parent=1 // pred_check
      _
    $region51: #{gin_forward.1} parent=1 // pred_check_branch
      %49 = sbr.rel (0) target = $region53
    $region52: #{gin_forward.1} parent=1 // pred_region
      _
    $region53: #{gin_forward.1} parent=1 // pred_fallthru
      _
    // Predicated region
    $region54: #{gin_forward.1} parent=1 // pred_check
      _
    $region55: #{gin_forward.1} parent=1 // pred_check_branch
      %51 = sbr.rel (0) target = $region57
    $region56: #{gin_forward.1} parent=1 // pred_region
      _
    $region57: #{gin_forward.1} parent=1 // pred_fallthru
      _
    // Predicated region
    $region58: #{gin_forward.1} parent=1 // pred_check
      _
    $region59: #{gin_forward.1} parent=1 // pred_check_branch
      %53 = sbr.rel (0) target = $region61
    $region60: #{gin_forward.1} parent=1 // pred_region
      _
    $region61: #{gin_forward.1} parent=1 // pred_fallthru
      _
    // Predicated region
    $region62: #{gin_forward.1} parent=1 // pred_check
      _
    $region63: #{gin_forward.1} parent=1 // pred_check_branch
      %55 = sbr.rel (0) target = $region65
    $region64: #{gin_forward.1} parent=1 // pred_region
      _
    $region65: #{gin_forward.1} parent=1 // pred_fallthru
      _
    %v56 = vld [vmem:[%s0] sm:$0xff]
    %v57 = vld [vmem:[%s0 + $0x8] sm:$0xff]
    %v58 = vld [vmem:[%s0 + $0x10] sm:$0xff]
    %v59 = vld [vmem:[%s0 + $0x18] sm:$0xff]
    %v60 = vld [vmem:[%s0 + $0x20] sm:$0xff]
    %v61 = vld [vmem:[%s0 + $0x28] sm:$0xff]
    %v62 = vld [vmem:[%s0 + $0x30] sm:$0xff]
    %v63 = vld [vmem:[%s0 + $0x38] sm:$0xff]
    %v64 = vld [vmem:[%s0 + $0x40] sm:$0xff]
    %v65 = vld [vmem:[%s0 + $0x48] sm:$0xff]
    %v66 = vld [vmem:[%s0 + $0x50] sm:$0xff]
    %v67 = vld [vmem:[%s0 + $0x58] sm:$0xff]
    %v68 = vld [vmem:[%s0 + $0x60] sm:$0xff]
    %v69 = vld [vmem:[%s0 + $0x68] sm:$0xff]
    %v70 = vld [vmem:[%s0 + $0x70] sm:$0xff]
    %v71 = vld [vmem:[%s0 + $0x78] sm:$0xff]
    %v72 = vld [vmem:[%s0 + $0x80] sm:$0xff]
    %v73 = vld [vmem:[%s0 + $0x88] sm:$0xff]
    %v74 = vld [vmem:[%s0 + $0x90] sm:$0xff]
    %v75 = vld [vmem:[%s0 + $0x98] sm:$0xff]
    %v76 = vld [vmem:[%s0 + $0xa0] sm:$0xff]
    %v77 = vld [vmem:[%s0 + $0xa8] sm:$0xff]
    %v78 = vld [vmem:[%s0 + $0xb0] sm:$0xff]
    %v79 = vld [vmem:[%s0 + $0xb8] sm:$0xff]
    %v80 = vld [vmem:[%s0 + $0xc0] sm:$0xff]
    %v81 = vld [vmem:[%s0 + $0xc8] sm:$0xff]
    %v82 = vld [vmem:[%s0 + $0xd0] sm:$0xff]
    %v83 = vld [vmem:[%s0 + $0xd8] sm:$0xff]
    %v84 = vld [vmem:[%s0 + $0xe0] sm:$0xff]
    %v85 = vld [vmem:[%s0 + $0xe8] sm:$0xff]
    %v86 = vld [vmem:[%s1] sm:$0xff]
    %v87 = vld [vmem:[%s1 + $0x8] sm:$0xff]
    %v88 = vld [vmem:[%s1 + $0x10] sm:$0xff]
    %v89 = vld [vmem:[%s1 + $0x18] sm:$0xff]
    %v90 = vld [vmem:[%s1 + $0x20] sm:$0xff]
    %v91 = vld [vmem:[%s1 + $0x28] sm:$0xff]
    %v92 = vld [vmem:[%s1 + $0x30] sm:$0x3f]
    %v93 = vld [vmem:[%s1 + $0x38] sm:$0x3f]
    %v94 = vld [vmem:[%s13] sm:$0x7]
    %vm95 = vcmask 916480
    %v97 = vsel %vm95, %v87, 0
    %v100 = vsel %vm95, %v89, 0
    %v103 = vsel %vm95, %v91, 0
    %v106 = vsel %vm95, %v93, 0
    %108 = vmatprep.subr.mxu0 0.0
    %109 = vmatpush1.msra.mxu0 %v56
    %110 = vmatprep.subr.mxu0 0.0
    %111 = vmatpush1.msra.mxu0 %v57
    %112 = vmatprep.subr.mxu0 0.0
    %113 = vmatpush1.msra.mxu0 %v58
    %114 = vmatprep.subr.mxu0 0.0
    %115 = vmatpush1.msra.mxu0 %v59
    %116 = vmatprep.subr.mxu0 0.0
    %117 = vmatpush1.msra.mxu0 %v60
    %118 = vmatprep.subr.mxu0 0.0
    %119 = vmatpush1.msra.mxu0 %v61
    %120 = vmatprep.subr.mxu0 0.0
    %121 = vmatpush1.msra.mxu0 %v62
    %122 = vmatprep.subr.mxu0 0.0
    %123 = vmatpush1.msra.mxu0 %v63
    %124 = vmatprep.subr.mxu0 0.0
    %125 = vmatpush1.msra.mxu0 %v64
    %126 = vmatprep.subr.mxu0 0.0
    %127 = vmatpush1.msra.mxu0 %v65
    %128 = vmatprep.subr.mxu0 0.0
    %129 = vmatpush1.msra.mxu0 %v66
    %130 = vmatprep.subr.mxu0 0.0
    %131 = vmatpush1.msra.mxu0 %v67
    %132 = vmatprep.subr.mxu0 0.0
    %133 = vmatpush1.msra.mxu0 %v68
    %134 = vmatprep.subr.mxu0 0.0
    %135 = vmatpush1.msra.mxu0 %v69
    %136 = vmatprep.subr.mxu0 0.0
    %137 = vmatpush1.msra.mxu0 %v70
    %138 = vmatprep.subr.mxu0 0.0
    %139 = vmatpush1.msra.mxu0 %v71
    %140 = vmatprep.subr.mxu0 0.0
    %141 = vmatpush1.msra.mxu0 %v72
    %142 = vmatprep.subr.mxu0 0.0
    %143 = vmatpush1.msra.mxu0 %v73
    %144 = vmatprep.subr.mxu0 0.0
    %145 = vmatpush1.msra.mxu0 %v74
    %146 = vmatprep.subr.mxu0 0.0
    %147 = vmatpush1.msra.mxu0 %v75
    %148 = vmatprep.subr.mxu0 0.0
    %149 = vmatpush1.msra.mxu0 %v76
    %150 = vmatprep.subr.mxu0 0.0
    %151 = vmatpush1.msra.mxu0 %v77
    %152 = vmatprep.subr.mxu0 0.0
    %153 = vmatpush1.msra.mxu0 %v78
    %154 = vmatprep.subr.mxu0 0.0
    %155 = vmatpush1.msra.mxu0 %v79
    %156 = vmatprep.subr.mxu0 0.0
    %157 = vmatpush1.msra.mxu0 %v80
    %158 = vmatprep.subr.mxu0 0.0
    %159 = vmatpush1.msra.mxu0 %v81
    %160 = vmatprep.subr.mxu0 0.0
    %161 = vmatpush1.msra.mxu0 %v82
    %162 = vmatprep.subr.mxu0 0.0
    %163 = vmatpush1.msra.mxu0 %v83
    %164 = vmatprep.subr.mxu0 0.0
    %165 = vmatpush1.msra.mxu0 %v84
    %166 = vmatprep.subr.mxu0 0.0
    %167 = vmatpush1.msra.mxu0 %v85
    %168 = vmatprep.subr.mxu0 0.0
    %169 = vmatpush1.msra.mxu0 0.0
    %170 = vmatprep.subr.mxu0 0.0
    %171 = vmatpush1.msra.mxu0 0.0
    %172 = vmatprep.mubr.f32.mxu0 %v97
    %173 = vmatmul.mubr.f32.gmra.mrb[0].mxu0 %v86
    %v174 = vpop.f32.mrb[0].mxu0
    %v175 = vadd.f32 0.0, %v174
    %v176 = vpop.f32.mrb[0].mxu0
    %177 = vmatprep.mubr.f32.mxu0 %v100
    %178 = vmatmul.mubr.f32.gmra.mrb[0].mxu0 %v88
    %v179 = vpop.f32.mrb[0].mxu0
    %v180 = vadd.f32 0.0, %v179
    %v181 = vpop.f32.mrb[0].mxu0
    %182 = vmatprep.mubr.f32.mxu0 %v103
    %183 = vmatmul.mubr.f32.gmra.mrb[0].mxu0 %v90
    %v184 = vpop.f32.mrb[0].mxu0
    %v185 = vadd.f32 0.0, %v184
    %v186 = vpop.f32.mrb[0].mxu0
    %187 = vmatprep.mubr.f32.mxu0 %v106
    %188 = vmatmul.mubr.f32.gmra.mrb[0].mxu0 %v92
    %v189 = vpop.f32.mrb[0].mxu0
    %v190 = vadd.f32 0.0, %v189
    %v191 = vpop.f32.mrb[0].mxu0
    %192 = vdwg.mxu0
    %v193 = vld [vmem:[%s10] sm:$0xff]
    %v194 = vlaneseq
    %v195 = vshrl.u32 %v194, 7
    %v196 = vsub.s32 0, %v195
    %v197 = vrot.slane %v94, %v196
    %vm198 = vcmask 64512
    %v200 = vsel %vm198, %v175, 0
    %v203 = vsel %vm198, %v180, 0
    %v206 = vsel %vm198, %v185, 0
    %v209 = vsel %vm198, %v190, 0
    %211 = vmatprep.subr.mxu0 0.0
    %212 = vmatpush1.msra.mxu0 %v193
    %213 = vmatprep.subr.mxu0 0.0
    %214 = vmatpush1.msra.mxu0 0.0
    %215 = vmatprep.subr.mxu0 0.0
    %216 = vmatpush1.msra.mxu0 0.0
    %217 = vmatprep.subr.mxu0 0.0
    %218 = vmatpush1.msra.mxu0 0.0
    %219 = vmatprep.subr.mxu0 0.0
    %220 = vmatpush1.msra.mxu0 0.0
    %221 = vmatprep.subr.mxu0 0.0
    %222 = vmatpush1.msra.mxu0 0.0
    %223 = vmatprep.subr.mxu0 0.0
    %224 = vmatpush1.msra.mxu0 0.0
    %225 = vmatprep.subr.mxu0 0.0
    %226 = vmatpush1.msra.mxu0 0.0
    %227 = vmatprep.subr.mxu0 0.0
    %228 = vmatpush1.msra.mxu0 0.0
    %229 = vmatprep.subr.mxu0 0.0
    %230 = vmatpush1.msra.mxu0 0.0
    %231 = vmatprep.subr.mxu0 0.0
    %232 = vmatpush1.msra.mxu0 0.0
    %233 = vmatprep.subr.mxu0 0.0
    %234 = vmatpush1.msra.mxu0 0.0
    %235 = vmatprep.subr.mxu0 0.0
    %236 = vmatpush1.msra.mxu0 0.0
    %237 = vmatprep.subr.mxu0 0.0
    %238 = vmatpush1.msra.mxu0 0.0
    %239 = vmatprep.subr.mxu0 0.0
    %240 = vmatpush1.msra.mxu0 0.0
    %241 = vmatprep.subr.mxu0 0.0
    %242 = vmatpush1.msra.mxu0 0.0
    %243 = vmatprep.subr.mxu0 0.0
    %244 = vmatpush1.msra.mxu0 0.0
    %245 = vmatprep.subr.mxu0 0.0
    %246 = vmatpush1.msra.mxu0 0.0
    %247 = vmatprep.subr.mxu0 0.0
    %248 = vmatpush1.msra.mxu0 0.0
    %249 = vmatprep.subr.mxu0 0.0
    %250 = vmatpush1.msra.mxu0 0.0
    %251 = vmatprep.subr.mxu0 0.0
    %252 = vmatpush1.msra.mxu0 0.0
    %253 = vmatprep.subr.mxu0 0.0
    %254 = vmatpush1.msra.mxu0 0.0
    %255 = vmatprep.subr.mxu0 0.0
    %256 = vmatpush1.msra.mxu0 0.0
    %257 = vmatprep.subr.mxu0 0.0
    %258 = vmatpush1.msra.mxu0 0.0
    %259 = vmatprep.subr.mxu0 0.0
    %260 = vmatpush1.msra.mxu0 0.0
    %261 = vmatprep.subr.mxu0 0.0
    %262 = vmatpush1.msra.mxu0 0.0
    %263 = vmatprep.subr.mxu0 0.0
    %264 = vmatpush1.msra.mxu0 0.0
    %265 = vmatprep.subr.mxu0 0.0
    %266 = vmatpush1.msra.mxu0 0.0
    %267 = vmatprep.subr.mxu0 0.0
    %268 = vmatpush1.msra.mxu0 0.0
    %269 = vmatprep.subr.mxu0 0.0
    %270 = vmatpush1.msra.mxu0 0.0
    %271 = vmatprep.subr.mxu0 0.0
    %272 = vmatpush1.msra.mxu0 0.0
    %273 = vmatprep.subr.mxu0 0.0
    %274 = vmatpush1.msra.mxu0 0.0
    %275 = vmatprep.mubr.f32.mxu0 0.0
    %276 = vmatmul.mubr.f32.gmra.mrb[0].mxu0 %v200
    %v277 = vpop.f32.mrb[0].mxu0
    %v278 = vadd.f32 %v197, %v277
    %v279 = vpop.f32.mrb[0].mxu0
    %280 = vmatprep.mubr.f32.mxu0 0.0
    %281 = vmatmul.mubr.f32.gmra.mrb[0].mxu0 %v203
    %v282 = vpop.f32.mrb[0].mxu0
    %v283 = vadd.f32 %v197, %v282
    %v284 = vpop.f32.mrb[0].mxu0
    %285 = vmatprep.mubr.f32.mxu0 0.0
    %286 = vmatmul.mubr.f32.gmra.mrb[0].mxu0 %v206
    %v287 = vpop.f32.mrb[0].mxu0
    %v288 = vadd.f32 %v197, %v287
    %v289 = vpop.f32.mrb[0].mxu0
    %290 = vmatprep.mubr.f32.mxu0 0.0
    %291 = vmatmul.mubr.f32.gmra.mrb[0].mxu0 %v209
    %v292 = vpop.f32.mrb[0].mxu0
    %v293 = vadd.f32 %v197, %v292
    %v294 = vpop.f32.mrb[0].mxu0
    %295 = vdwg.mxu0
    %v296 = vld [vmem:[%s6] sm:$0xff]
    %v297 = vld [vmem:[%s2] sm:$0xff]
    %v298 = vld [vmem:[%s2 + $0x8] sm:$0xff]
    %v299 = vld [vmem:[%s2 + $0x10] sm:$0xff]
    %v300 = vld [vmem:[%s2 + $0x18] sm:$0xff]
    %v301 = vld [vmem:[%s2 + $0x20] sm:$0xff]
    %v302 = vld [vmem:[%s2 + $0x28] sm:$0xff]
    %v303 = vld [vmem:[%s2 + $0x30] sm:$0xff]
    %v304 = vld [vmem:[%s2 + $0x38] sm:$0xff]
    %v305 = vld [vmem:[%s2 + $0x40] sm:$0xff]
    %v306 = vld [vmem:[%s2 + $0x48] sm:$0xff]
    %v307 = vld [vmem:[%s2 + $0x50] sm:$0xff]
    %v308 = vld [vmem:[%s2 + $0x58] sm:$0xff]
    %v309 = vld [vmem:[%s2 + $0x60] sm:$0xff]
    %v310 = vld [vmem:[%s2 + $0x68] sm:$0xff]
    %v311 = vld [vmem:[%s2 + $0x70] sm:$0xff]
    %v312 = vld [vmem:[%s2 + $0x78] sm:$0xff]
    %v313 = vld [vmem:[%s2 + $0x80] sm:$0xff]
    %v314 = vld [vmem:[%s2 + $0x88] sm:$0xff]
    %v315 = vld [vmem:[%s2 + $0x90] sm:$0xff]
    %v316 = vld [vmem:[%s2 + $0x98] sm:$0xff]
    %v317 = vld [vmem:[%s2 + $0xa0] sm:$0xff]
    %v318 = vld [vmem:[%s2 + $0xa8] sm:$0xff]
    %v319 = vld [vmem:[%s2 + $0xb0] sm:$0xff]
    %v320 = vld [vmem:[%s2 + $0xb8] sm:$0xff]
    %v321 = vld [vmem:[%s2 + $0xc0] sm:$0xff]
    %v322 = vld [vmem:[%s2 + $0xc8] sm:$0xff]
    %v323 = vld [vmem:[%s2 + $0xd0] sm:$0xff]
    %v324 = vld [vmem:[%s2 + $0xd8] sm:$0xff]
    %v325 = vld [vmem:[%s2 + $0xe0] sm:$0xff]
    %v326 = vld [vmem:[%s2 + $0xe8] sm:$0xff]
    %v327 = vld [vmem:[%s2 + $0xf0] sm:$0xff]
    %v328 = vld [vmem:[%s2 + $0xf8] sm:$0xff]
    %v329 = vld [vmem:[%s2 + $0x100] sm:$0xff]
    %v330 = vld [vmem:[%s2 + $0x108] sm:$0xff]
    %v331 = vld [vmem:[%s2 + $0x110] sm:$0xff]
    %v332 = vld [vmem:[%s2 + $0x118] sm:$0xff]
    %v333 = vld [vmem:[%s2 + $0x120] sm:$0xff]
    %v334 = vld [vmem:[%s2 + $0x128] sm:$0xff]
    %v335 = vld [vmem:[%s2 + $0x130] sm:$0xff]
    %v336 = vld [vmem:[%s2 + $0x138] sm:$0xff]
    %v337 = vld [vmem:[%s2 + $0x140] sm:$0xff]
    %v338 = vld [vmem:[%s2 + $0x148] sm:$0xff]
    %v339 = vld [vmem:[%s2 + $0x150] sm:$0xff]
    %v340 = vld [vmem:[%s2 + $0x158] sm:$0xff]
    %v341 = vld [vmem:[%s2 + $0x160] sm:$0xff]
    %v342 = vld [vmem:[%s2 + $0x168] sm:$0xff]
    %v343 = vld [vmem:[%s2 + $0x170] sm:$0xff]
    %v344 = vld [vmem:[%s2 + $0x178] sm:$0xff]
    %v345 = vld [vmem:[%s2 + $0x180] sm:$0xff]
    %v346 = vld [vmem:[%s2 + $0x188] sm:$0xff]
    %v347 = vld [vmem:[%s2 + $0x190] sm:$0xff]
    %v348 = vld [vmem:[%s2 + $0x198] sm:$0xff]
    %v349 = vld [vmem:[%s2 + $0x1a0] sm:$0xff]
    %v350 = vld [vmem:[%s2 + $0x1a8] sm:$0xff]
    %v351 = vld [vmem:[%s2 + $0x1b0] sm:$0xff]
    %v352 = vld [vmem:[%s2 + $0x1b8] sm:$0xff]
    %v353 = vld [vmem:[%s2 + $0x1c0] sm:$0xff]
    %v354 = vld [vmem:[%s2 + $0x1c8] sm:$0xff]
    %v355 = vld [vmem:[%s2 + $0x1d0] sm:$0xff]
    %v356 = vld [vmem:[%s2 + $0x1d8] sm:$0xff]
    %v358 = vsel %vm95, %v298, 0
    %v361 = vsel %vm95, %v300, 0
    %v364 = vsel %vm95, %v302, 0
    %v367 = vsel %vm95, %v304, 0
    %v370 = vsel %vm95, %v306, 0
    %v373 = vsel %vm95, %v308, 0
    %v376 = vsel %vm95, %v310, 0
    %v379 = vsel %vm95, %v312, 0
    %v382 = vsel %vm95, %v314, 0
    %v385 = vsel %vm95, %v316, 0
    %v388 = vsel %vm95, %v318, 0
    %v391 = vsel %vm95, %v320, 0
    %v394 = vsel %vm95, %v322, 0
    %v397 = vsel %vm95, %v324, 0
    %v400 = vsel %vm95, %v326, 0
    %v403 = vsel %vm95, %v328, 0
    %v406 = vsel %vm95, %v330, 0
    %v409 = vsel %vm95, %v332, 0
    %v412 = vsel %vm95, %v334, 0
    %v415 = vsel %vm95, %v336, 0
    %v418 = vsel %vm95, %v338, 0
    %v421 = vsel %vm95, %v340, 0
    %v424 = vsel %vm95, %v342, 0
    %v427 = vsel %vm95, %v344, 0
    %v430 = vsel %vm95, %v346, 0
    %v433 = vsel %vm95, %v348, 0
    %v436 = vsel %vm95, %v350, 0
    %v439 = vsel %vm95, %v352, 0
    %v442 = vsel %vm95, %v354, 0
    %v445 = vsel %vm95, %v356, 0
    %447 = vmatprep.subr.mxu0 0.0
    %448 = vmatpush1.msra.mxu0 %v56
    %449 = vmatprep.subr.mxu0 0.0
    %450 = vmatpush1.msra.mxu0 %v57
    %451 = vmatprep.subr.mxu0 0.0
    %452 = vmatpush1.msra.mxu0 %v58
    %453 = vmatprep.subr.mxu0 0.0
    %454 = vmatpush1.msra.mxu0 %v59
    %455 = vmatprep.subr.mxu0 0.0
    %456 = vmatpush1.msra.mxu0 %v60
    %457 = vmatprep.subr.mxu0 0.0
    %458 = vmatpush1.msra.mxu0 %v61
    %459 = vmatprep.subr.mxu0 0.0
    %460 = vmatpush1.msra.mxu0 %v62
    %461 = vmatprep.subr.mxu0 0.0
    %462 = vmatpush1.msra.mxu0 %v63
    %463 = vmatprep.subr.mxu0 0.0
    %464 = vmatpush1.msra.mxu0 %v64
    %465 = vmatprep.subr.mxu0 0.0
    %466 = vmatpush1.msra.mxu0 %v65
    %467 = vmatprep.subr.mxu0 0.0
    %468 = vmatpush1.msra.mxu0 %v66
    %469 = vmatprep.subr.mxu0 0.0
    %470 = vmatpush1.msra.mxu0 %v67
    %471 = vmatprep.subr.mxu0 0.0
    %472 = vmatpush1.msra.mxu0 %v68
    %473 = vmatprep.subr.mxu0 0.0
    %474 = vmatpush1.msra.mxu0 %v69
    %475 = vmatprep.subr.mxu0 0.0
    %476 = vmatpush1.msra.mxu0 %v70
    %477 = vmatprep.subr.mxu0 0.0
    %478 = vmatpush1.msra.mxu0 %v71
    %479 = vmatprep.subr.mxu0 0.0
    %480 = vmatpush1.msra.mxu0 %v72
    %481 = vmatprep.subr.mxu0 0.0
    %482 = vmatpush1.msra.mxu0 %v73
    %483 = vmatprep.subr.mxu0 0.0
    %484 = vmatpush1.msra.mxu0 %v74
    %485 = vmatprep.subr.mxu0 0.0
    %486 = vmatpush1.msra.mxu0 %v75
    %487 = vmatprep.subr.mxu0 0.0
    %488 = vmatpush1.msra.mxu0 %v76
    %489 = vmatprep.subr.mxu0 0.0
    %490 = vmatpush1.msra.mxu0 %v77
    %491 = vmatprep.subr.mxu0 0.0
    %492 = vmatpush1.msra.mxu0 %v78
    %493 = vmatprep.subr.mxu0 0.0
    %494 = vmatpush1.msra.mxu0 %v79
    %495 = vmatprep.subr.mxu0 0.0
    %496 = vmatpush1.msra.mxu0 %v80
    %497 = vmatprep.subr.mxu0 0.0
    %498 = vmatpush1.msra.mxu0 %v81
    %499 = vmatprep.subr.mxu0 0.0
    %500 = vmatpush1.msra.mxu0 %v82
    %501 = vmatprep.subr.mxu0 0.0
    %502 = vmatpush1.msra.mxu0 %v83
    %503 = vmatprep.subr.mxu0 0.0
    %504 = vmatpush1.msra.mxu0 %v84
    %505 = vmatprep.subr.mxu0 0.0
    %506 = vmatpush1.msra.mxu0 %v85
    %507 = vmatprep.subr.mxu0 0.0
    %508 = vmatpush1.msra.mxu0 0.0
    %509 = vmatprep.subr.mxu0 0.0
    %510 = vmatpush1.msra.mxu0 0.0
    %511 = vmatprep.mubr.f32.mxu0 %v358
    %512 = vmatmul.mubr.f32.gmra.mrb[0].mxu0 %v297
    %v513 = vpop.f32.mrb[0].mxu0
    %v514 = vadd.f32 0.0, %v513
    %v515 = vpop.f32.mrb[0].mxu0
    %516 = vmatprep.mubr.f32.mxu0 %v361
    %517 = vmatmul.mubr.f32.gmra.mrb[0].mxu0 %v299
    %v518 = vpop.f32.mrb[0].mxu0
    %v519 = vadd.f32 0.0, %v518
    %v520 = vpop.f32.mrb[0].mxu0
    %521 = vmatprep.mubr.f32.mxu0 %v364
    %522 = vmatmul.mubr.f32.gmra.mrb[0].mxu0 %v301
    %v523 = vpop.f32.mrb[0].mxu0
    %v524 = vadd.f32 0.0, %v523
    %v525 = vpop.f32.mrb[0].mxu0
    %526 = vmatprep.mubr.f32.mxu0 %v367
    %527 = vmatmul.mubr.f32.gmra.mrb[0].mxu0 %v303
    %v528 = vpop.f32.mrb[0].mxu0
    %v529 = vadd.f32 0.0, %v528
    %v530 = vpop.f32.mrb[0].mxu0
    %531 = vmatprep.mubr.f32.mxu0 %v370
    %532 = vmatmul.mubr.f32.gmra.mrb[0].mxu0 %v305
    %v533 = vpop.f32.mrb[0].mxu0
    %v534 = vadd.f32 0.0, %v533
    %v535 = vpop.f32.mrb[0].mxu0
    %536 = vmatprep.mubr.f32.mxu0 %v373
    %537 = vmatmul.mubr.f32.gmra.mrb[0].mxu0 %v307
    %v538 = vpop.f32.mrb[0].mxu0
    %v539 = vadd.f32 0.0, %v538
    %v540 = vpop.f32.mrb[0].mxu0
    %541 = vmatprep.mubr.f32.mxu0 %v376
    %542 = vmatmul.mubr.f32.gmra.mrb[0].mxu0 %v309
    %v543 = vpop.f32.mrb[0].mxu0
    %v544 = vadd.f32 0.0, %v543
    %v545 = vpop.f32.mrb[0].mxu0
    %546 = vmatprep.mubr.f32.mxu0 %v379
    %547 = vmatmul.mubr.f32.gmra.mrb[0].mxu0 %v311
    %v548 = vpop.f32.mrb[0].mxu0
    %v549 = vadd.f32 0.0, %v548
    %v550 = vpop.f32.mrb[0].mxu0
    %551 = vmatprep.mubr.f32.mxu0 %v382
    %552 = vmatmul.mubr.f32.gmra.mrb[0].mxu0 %v313
    %v553 = vpop.f32.mrb[0].mxu0
    %v554 = vadd.f32 0.0, %v553
    %v555 = vpop.f32.mrb[0].mxu0
    %556 = vmatprep.mubr.f32.mxu0 %v385
    %557 = vmatmul.mubr.f32.gmra.mrb[0].mxu0 %v315
    %v558 = vpop.f32.mrb[0].mxu0
    %v559 = vadd.f32 0.0, %v558
    %v560 = vpop.f32.mrb[0].mxu0
    %561 = vmatprep.mubr.f32.mxu0 %v388
    %562 = vmatmul.mubr.f32.gmra.mrb[0].mxu0 %v317
    %v563 = vpop.f32.mrb[0].mxu0
    %v564 = vadd.f32 0.0, %v563
    %v565 = vpop.f32.mrb[0].mxu0
    %566 = vmatprep.mubr.f32.mxu0 %v391
    %567 = vmatmul.mubr.f32.gmra.mrb[0].mxu0 %v319
    %v568 = vpop.f32.mrb[0].mxu0
    %v569 = vadd.f32 0.0, %v568
    %v570 = vpop.f32.mrb[0].mxu0
    %571 = vmatprep.mubr.f32.mxu0 %v394
    %572 = vmatmul.mubr.f32.gmra.mrb[0].mxu0 %v321
    %v573 = vpop.f32.mrb[0].mxu0
    %v574 = vadd.f32 0.0, %v573
    %v575 = vpop.f32.mrb[0].mxu0
    %576 = vmatprep.mubr.f32.mxu0 %v397
    %577 = vmatmul.mubr.f32.gmra.mrb[0].mxu0 %v323
    %v578 = vpop.f32.mrb[0].mxu0
    %v579 = vadd.f32 0.0, %v578
    %v580 = vpop.f32.mrb[0].mxu0
    %581 = vmatprep.mubr.f32.mxu0 %v400
    %582 = vmatmul.mubr.f32.gmra.mrb[0].mxu0 %v325
    %v583 = vpop.f32.mrb[0].mxu0
    %v584 = vadd.f32 0.0, %v583
    %v585 = vpop.f32.mrb[0].mxu0
    %586 = vmatprep.mubr.f32.mxu0 %v403
    %587 = vmatmul.mubr.f32.gmra.mrb[0].mxu0 %v327
    %v588 = vpop.f32.mrb[0].mxu0
    %v589 = vadd.f32 0.0, %v588
    %v590 = vpop.f32.mrb[0].mxu0
    %591 = vmatprep.mubr.f32.mxu0 %v406
    %592 = vmatmul.mubr.f32.gmra.mrb[0].mxu0 %v329
    %v593 = vpop.f32.mrb[0].mxu0
    %v594 = vadd.f32 0.0, %v593
    %v595 = vpop.f32.mrb[0].mxu0
    %596 = vmatprep.mubr.f32.mxu0 %v409
    %597 = vmatmul.mubr.f32.gmra.mrb[0].mxu0 %v331
    %v598 = vpop.f32.mrb[0].mxu0
    %v599 = vadd.f32 0.0, %v598
    %v600 = vpop.f32.mrb[0].mxu0
    %601 = vmatprep.mubr.f32.mxu0 %v412
    %602 = vmatmul.mubr.f32.gmra.mrb[0].mxu0 %v333
    %v603 = vpop.f32.mrb[0].mxu0
    %v604 = vadd.f32 0.0, %v603
    %v605 = vpop.f32.mrb[0].mxu0
    %606 = vmatprep.mubr.f32.mxu0 %v415
    %607 = vmatmul.mubr.f32.gmra.mrb[0].mxu0 %v335
    %v608 = vpop.f32.mrb[0].mxu0
    %v609 = vadd.f32 0.0, %v608
    %v610 = vpop.f32.mrb[0].mxu0
    %611 = vmatprep.mubr.f32.mxu0 %v418
    %612 = vmatmul.mubr.f32.gmra.mrb[0].mxu0 %v337
    %v613 = vpop.f32.mrb[0].mxu0
    %v614 = vadd.f32 0.0, %v613
    %v615 = vpop.f32.mrb[0].mxu0
    %616 = vmatprep.mubr.f32.mxu0 %v421
    %617 = vmatmul.mubr.f32.gmra.mrb[0].mxu0 %v339
    %v618 = vpop.f32.mrb[0].mxu0
    %v619 = vadd.f32 0.0, %v618
    %v620 = vpop.f32.mrb[0].mxu0
    %621 = vmatprep.mubr.f32.mxu0 %v424
    %622 = vmatmul.mubr.f32.gmra.mrb[0].mxu0 %v341
    %v623 = vpop.f32.mrb[0].mxu0
    %v624 = vadd.f32 0.0, %v623
    %v625 = vpop.f32.mrb[0].mxu0
    %626 = vmatprep.mubr.f32.mxu0 %v427
    %627 = vmatmul.mubr.f32.gmra.mrb[0].mxu0 %v343
    %v628 = vpop.f32.mrb[0].mxu0
    %v629 = vadd.f32 0.0, %v628
    %v630 = vpop.f32.mrb[0].mxu0
    %631 = vmatprep.mubr.f32.mxu0 %v430
    %632 = vmatmul.mubr.f32.gmra.mrb[0].mxu0 %v345
    %v633 = vpop.f32.mrb[0].mxu0
    %v634 = vadd.f32 0.0, %v633
    %v635 = vpop.f32.mrb[0].mxu0
    %636 = vmatprep.mubr.f32.mxu0 %v433
    %637 = vmatmul.mubr.f32.gmra.mrb[0].mxu0 %v347
    %v638 = vpop.f32.mrb[0].mxu0
    %v639 = vadd.f32 0.0, %v638
    %v640 = vpop.f32.mrb[0].mxu0
    %641 = vmatprep.mubr.f32.mxu0 %v436
    %642 = vmatmul.mubr.f32.gmra.mrb[0].mxu0 %v349
    %v643 = vpop.f32.mrb[0].mxu0
    %v644 = vadd.f32 0.0, %v643
    %v645 = vpop.f32.mrb[0].mxu0
    %646 = vmatprep.mubr.f32.mxu0 %v439
    %647 = vmatmul.mubr.f32.gmra.mrb[0].mxu0 %v351
    %v648 = vpop.f32.mrb[0].mxu0
    %v649 = vadd.f32 0.0, %v648
    %v650 = vpop.f32.mrb[0].mxu0
    %651 = vmatprep.mubr.f32.mxu0 %v442
    %652 = vmatmul.mubr.f32.gmra.mrb[0].mxu0 %v353
    %v653 = vpop.f32.mrb[0].mxu0
    %v654 = vadd.f32 0.0, %v653
    %v655 = vpop.f32.mrb[0].mxu0
    %656 = vmatprep.mubr.f32.mxu0 %v445
    %657 = vmatmul.mubr.f32.gmra.mrb[0].mxu0 %v355
    %v658 = vpop.f32.mrb[0].mxu0
    %v659 = vadd.f32 0.0, %v658
    %v660 = vpop.f32.mrb[0].mxu0
    %661 = vdwg.mxu0
    %v662 = vld [vmem:[%s4] sm:$0xff]
    %v663 = vlaneseq
    %v664 = vshrl.u32 %v663, 7
    %v665 = vsub.s32 0, %v664
    %v666 = vrot.slane %v296, %v665
    %v668 = vsel %vm198, %v514, 0
    %v671 = vsel %vm198, %v519, 0
    %v674 = vsel %vm198, %v524, 0
    %v677 = vsel %vm198, %v529, 0
    %v680 = vsel %vm198, %v534, 0
    %v683 = vsel %vm198, %v539, 0
    %v686 = vsel %vm198, %v544, 0
    %v689 = vsel %vm198, %v549, 0
    %v692 = vsel %vm198, %v554, 0
    %v695 = vsel %vm198, %v559, 0
    %v698 = vsel %vm198, %v564, 0
    %v701 = vsel %vm198, %v569, 0
    %v704 = vsel %vm198, %v574, 0
    %v707 = vsel %vm198, %v579, 0
    %v710 = vsel %vm198, %v584, 0
    %v713 = vsel %vm198, %v589, 0
    %v716 = vsel %vm198, %v594, 0
    %v719 = vsel %vm198, %v599, 0
    %v722 = vsel %vm198, %v604, 0
    %v725 = vsel %vm198, %v609, 0
    %v728 = vsel %vm198, %v614, 0
    %v731 = vsel %vm198, %v619, 0
    %v734 = vsel %vm198, %v624, 0
    %v737 = vsel %vm198, %v629, 0
    %v740 = vsel %vm198, %v634, 0
    %v743 = vsel %vm198, %v639, 0
    %v746 = vsel %vm198, %v644, 0
    %v749 = vsel %vm198, %v649, 0
    %v752 = vsel %vm198, %v654, 0
    %v755 = vsel %vm198, %v659, 0
    %757 = vmatprep.subr.mxu0 0.0
    %758 = vmatpush1.msra.mxu0 %v662
    %759 = vmatprep.subr.mxu0 0.0
    %760 = vmatpush1.msra.mxu0 0.0
    %761 = vmatprep.subr.mxu0 0.0
    %762 = vmatpush1.msra.mxu0 0.0
    %763 = vmatprep.subr.mxu0 0.0
    %764 = vmatpush1.msra.mxu0 0.0
    %765 = vmatprep.subr.mxu0 0.0
    %766 = vmatpush1.msra.mxu0 0.0
    %767 = vmatprep.subr.mxu0 0.0
    %768 = vmatpush1.msra.mxu0 0.0
    %769 = vmatprep.subr.mxu0 0.0
    %770 = vmatpush1.msra.mxu0 0.0
    %771 = vmatprep.subr.mxu0 0.0
    %772 = vmatpush1.msra.mxu0 0.0
    %773 = vmatprep.subr.mxu0 0.0
    %774 = vmatpush1.msra.mxu0 0.0
    %775 = vmatprep.subr.mxu0 0.0
    %776 = vmatpush1.msra.mxu0 0.0
    %777 = vmatprep.subr.mxu0 0.0
    %778 = vmatpush1.msra.mxu0 0.0
    %779 = vmatprep.subr.mxu0 0.0
    %780 = vmatpush1.msra.mxu0 0.0
    %781 = vmatprep.subr.mxu0 0.0
    %782 = vmatpush1.msra.mxu0 0.0
    %783 = vmatprep.subr.mxu0 0.0
    %784 = vmatpush1.msra.mxu0 0.0
    %785 = vmatprep.subr.mxu0 0.0
    %786 = vmatpush1.msra.mxu0 0.0
    %787 = vmatprep.subr.mxu0 0.0
    %788 = vmatpush1.msra.mxu0 0.0
    %789 = vmatprep.subr.mxu0 0.0
    %790 = vmatpush1.msra.mxu0 0.0
    %791 = vmatprep.subr.mxu0 0.0
    %792 = vmatpush1.msra.mxu0 0.0
    %793 = vmatprep.subr.mxu0 0.0
    %794 = vmatpush1.msra.mxu0 0.0
    %795 = vmatprep.subr.mxu0 0.0
    %796 = vmatpush1.msra.mxu0 0.0
    %797 = vmatprep.subr.mxu0 0.0
    %798 = vmatpush1.msra.mxu0 0.0
    %799 = vmatprep.subr.mxu0 0.0
    %800 = vmatpush1.msra.mxu0 0.0
    %801 = vmatprep.subr.mxu0 0.0
    %802 = vmatpush1.msra.mxu0 0.0
    %803 = vmatprep.subr.mxu0 0.0
    %804 = vmatpush1.msra.mxu0 0.0
    %805 = vmatprep.subr.mxu0 0.0
    %806 = vmatpush1.msra.mxu0 0.0
    %807 = vmatprep.subr.mxu0 0.0
    %808 = vmatpush1.msra.mxu0 0.0
    %809 = vmatprep.subr.mxu0 0.0
    %810 = vmatpush1.msra.mxu0 0.0
    %811 = vmatprep.subr.mxu0 0.0
    %812 = vmatpush1.msra.mxu0 0.0
    %813 = vmatprep.subr.mxu0 0.0
    %814 = vmatpush1.msra.mxu0 0.0
    %815 = vmatprep.subr.mxu0 0.0
    %816 = vmatpush1.msra.mxu0 0.0
    %817 = vmatprep.subr.mxu0 0.0
    %818 = vmatpush1.msra.mxu0 0.0
    %819 = vmatprep.subr.mxu0 0.0
    %820 = vmatpush1.msra.mxu0 0.0
    %821 = vmatprep.mubr.f32.mxu0 0.0
    %822 = vmatmul.mubr.f32.gmra.mrb[0].mxu0 %v668
    %v823 = vpop.f32.mrb[0].mxu0
    %v824 = vadd.f32 %v666, %v823
    %v825 = vpop.f32.mrb[0].mxu0
    %826 = vmatprep.mubr.f32.mxu0 0.0
    %827 = vmatmul.mubr.f32.gmra.mrb[0].mxu0 %v671
    %v828 = vpop.f32.mrb[0].mxu0
    %v829 = vadd.f32 %v666, %v828
    %v830 = vpop.f32.mrb[0].mxu0
    %831 = vmatprep.mubr.f32.mxu0 0.0
    %832 = vmatmul.mubr.f32.gmra.mrb[0].mxu0 %v674
    %v833 = vpop.f32.mrb[0].mxu0
    %v834 = vadd.f32 %v666, %v833
    %v835 = vpop.f32.mrb[0].mxu0
    %836 = vmatprep.mubr.f32.mxu0 0.0
    %837 = vmatmul.mubr.f32.gmra.mrb[0].mxu0 %v677
    %v838 = vpop.f32.mrb[0].mxu0
    %v839 = vadd.f32 %v666, %v838
    %v840 = vpop.f32.mrb[0].mxu0
    %841 = vmatprep.mubr.f32.mxu0 0.0
    %842 = vmatmul.mubr.f32.gmra.mrb[0].mxu0 %v680
    %v843 = vpop.f32.mrb[0].mxu0
    %v844 = vadd.f32 %v666, %v843
    %v845 = vpop.f32.mrb[0].mxu0
    %846 = vmatprep.mubr.f32.mxu0 0.0
    %847 = vmatmul.mubr.f32.gmra.mrb[0].mxu0 %v683
    %v848 = vpop.f32.mrb[0].mxu0
    %v849 = vadd.f32 %v666, %v848
    %v850 = vpop.f32.mrb[0].mxu0
    %851 = vmatprep.mubr.f32.mxu0 0.0
    %852 = vmatmul.mubr.f32.gmra.mrb[0].mxu0 %v686
    %v853 = vpop.f32.mrb[0].mxu0
    %v854 = vadd.f32 %v666, %v853
    %v855 = vpop.f32.mrb[0].mxu0
    %856 = vmatprep.mubr.f32.mxu0 0.0
    %857 = vmatmul.mubr.f32.gmra.mrb[0].mxu0 %v689
    %v858 = vpop.f32.mrb[0].mxu0
    %v859 = vadd.f32 %v666, %v858
    %v860 = vpop.f32.mrb[0].mxu0
    %861 = vmatprep.mubr.f32.mxu0 0.0
    %862 = vmatmul.mubr.f32.gmra.mrb[0].mxu0 %v692
    %v863 = vpop.f32.mrb[0].mxu0
    %v864 = vadd.f32 %v666, %v863
    %v865 = vpop.f32.mrb[0].mxu0
    %866 = vmatprep.mubr.f32.mxu0 0.0
    %867 = vmatmul.mubr.f32.gmra.mrb[0].mxu0 %v695
    %v868 = vpop.f32.mrb[0].mxu0
    %v869 = vadd.f32 %v666, %v868
    %v870 = vpop.f32.mrb[0].mxu0
    %871 = vmatprep.mubr.f32.mxu0 0.0
    %872 = vmatmul.mubr.f32.gmra.mrb[0].mxu0 %v698
    %v873 = vpop.f32.mrb[0].mxu0
    %v874 = vadd.f32 %v666, %v873
    %v875 = vpop.f32.mrb[0].mxu0
    %876 = vmatprep.mubr.f32.mxu0 0.0
    %877 = vmatmul.mubr.f32.gmra.mrb[0].mxu0 %v701
    %v878 = vpop.f32.mrb[0].mxu0
    %v879 = vadd.f32 %v666, %v878
    %v880 = vpop.f32.mrb[0].mxu0
    %881 = vmatprep.mubr.f32.mxu0 0.0
    %882 = vmatmul.mubr.f32.gmra.mrb[0].mxu0 %v704
    %v883 = vpop.f32.mrb[0].mxu0
    %v884 = vadd.f32 %v666, %v883
    %v885 = vpop.f32.mrb[0].mxu0
    %886 = vmatprep.mubr.f32.mxu0 0.0
    %887 = vmatmul.mubr.f32.gmra.mrb[0].mxu0 %v707
    %v888 = vpop.f32.mrb[0].mxu0
    %v889 = vadd.f32 %v666, %v888
    %v890 = vpop.f32.mrb[0].mxu0
    %891 = vmatprep.mubr.f32.mxu0 0.0
    %892 = vmatmul.mubr.f32.gmra.mrb[0].mxu0 %v710
    %v893 = vpop.f32.mrb[0].mxu0
    %v894 = vadd.f32 %v666, %v893
    %v895 = vpop.f32.mrb[0].mxu0
    %896 = vmatprep.mubr.f32.mxu0 0.0
    %897 = vmatmul.mubr.f32.gmra.mrb[0].mxu0 %v713
    %v898 = vpop.f32.mrb[0].mxu0
    %v899 = vadd.f32 %v666, %v898
    %v900 = vpop.f32.mrb[0].mxu0
    %901 = vmatprep.mubr.f32.mxu0 0.0
    %902 = vmatmul.mubr.f32.gmra.mrb[0].mxu0 %v716
    %v903 = vpop.f32.mrb[0].mxu0
    %v904 = vadd.f32 %v666, %v903
    %v905 = vpop.f32.mrb[0].mxu0
    %906 = vmatprep.mubr.f32.mxu0 0.0
    %907 = vmatmul.mubr.f32.gmra.mrb[0].mxu0 %v719
    %v908 = vpop.f32.mrb[0].mxu0
    %v909 = vadd.f32 %v666, %v908
    %v910 = vpop.f32.mrb[0].mxu0
    %911 = vmatprep.mubr.f32.mxu0 0.0
    %912 = vmatmul.mubr.f32.gmra.mrb[0].mxu0 %v722
    %v913 = vpop.f32.mrb[0].mxu0
    %v914 = vadd.f32 %v666, %v913
    %v915 = vpop.f32.mrb[0].mxu0
    %916 = vmatprep.mubr.f32.mxu0 0.0
    %917 = vmatmul.mubr.f32.gmra.mrb[0].mxu0 %v725
    %v918 = vpop.f32.mrb[0].mxu0
    %v919 = vadd.f32 %v666, %v918
    %v920 = vpop.f32.mrb[0].mxu0
    %921 = vmatprep.mubr.f32.mxu0 0.0
    %922 = vmatmul.mubr.f32.gmra.mrb[0].mxu0 %v728
    %v923 = vpop.f32.mrb[0].mxu0
    %v924 = vadd.f32 %v666, %v923
    %v925 = vpop.f32.mrb[0].mxu0
    %926 = vmatprep.mubr.f32.mxu0 0.0
    %927 = vmatmul.mubr.f32.gmra.mrb[0].mxu0 %v731
    %v928 = vpop.f32.mrb[0].mxu0
    %v929 = vadd.f32 %v666, %v928
    %v930 = vpop.f32.mrb[0].mxu0
    %931 = vmatprep.mubr.f32.mxu0 0.0
    %932 = vmatmul.mubr.f32.gmra.mrb[0].mxu0 %v734
    %v933 = vpop.f32.mrb[0].mxu0
    %v934 = vadd.f32 %v666, %v933
    %v935 = vpop.f32.mrb[0].mxu0
    %936 = vmatprep.mubr.f32.mxu0 0.0
    %937 = vmatmul.mubr.f32.gmra.mrb[0].mxu0 %v737
    %v938 = vpop.f32.mrb[0].mxu0
    %v939 = vadd.f32 %v666, %v938
    %v940 = vpop.f32.mrb[0].mxu0
    %941 = vmatprep.mubr.f32.mxu0 0.0
    %942 = vmatmul.mubr.f32.gmra.mrb[0].mxu0 %v740
    %v943 = vpop.f32.mrb[0].mxu0
    %v944 = vadd.f32 %v666, %v943
    %v945 = vpop.f32.mrb[0].mxu0
    %946 = vmatprep.mubr.f32.mxu0 0.0
    %947 = vmatmul.mubr.f32.gmra.mrb[0].mxu0 %v743
    %v948 = vpop.f32.mrb[0].mxu0
    %v949 = vadd.f32 %v666, %v948
    %v950 = vpop.f32.mrb[0].mxu0
    %951 = vmatprep.mubr.f32.mxu0 0.0
    %952 = vmatmul.mubr.f32.gmra.mrb[0].mxu0 %v746
    %v953 = vpop.f32.mrb[0].mxu0
    %v954 = vadd.f32 %v666, %v953
    %v955 = vpop.f32.mrb[0].mxu0
    %956 = vmatprep.mubr.f32.mxu0 0.0
    %957 = vmatmul.mubr.f32.gmra.mrb[0].mxu0 %v749
    %v958 = vpop.f32.mrb[0].mxu0
    %v959 = vadd.f32 %v666, %v958
    %v960 = vpop.f32.mrb[0].mxu0
    %961 = vmatprep.mubr.f32.mxu0 0.0
    %962 = vmatmul.mubr.f32.gmra.mrb[0].mxu0 %v752
    %v963 = vpop.f32.mrb[0].mxu0
    %v964 = vadd.f32 %v666, %v963
    %v965 = vpop.f32.mrb[0].mxu0
    %966 = vmatprep.mubr.f32.mxu0 0.0
    %967 = vmatmul.mubr.f32.gmra.mrb[0].mxu0 %v755
    %v968 = vpop.f32.mrb[0].mxu0
    %v969 = vadd.f32 %v666, %v968
    %v970 = vpop.f32.mrb[0].mxu0
    %971 = vdwg.mxu0
    %vm972 = vcmask 130048
    %v973 = vsel %vm972, %v824, 0.0
    %v974 = vsel %vm972, %v829, 0.0
    %v975 = vadd.f32 %v973, %v974
    %v976 = vsel %vm972, %v834, 0.0
    %v977 = vadd.f32 %v975, %v976
    %v978 = vsel %vm972, %v839, 0.0
    %v979 = vadd.f32 %v977, %v978
    %v980 = vsel %vm972, %v844, 0.0
    %v981 = vadd.f32 %v979, %v980
    %v982 = vsel %vm972, %v849, 0.0
    %v983 = vadd.f32 %v981, %v982
    %v984 = vsel %vm972, %v854, 0.0
    %v985 = vadd.f32 %v983, %v984
    %v986 = vsel %vm972, %v859, 0.0
    %v987 = vadd.f32 %v985, %v986
    %v988 = vsel %vm972, %v864, 0.0
    %v989 = vadd.f32 %v987, %v988
    %v990 = vsel %vm972, %v869, 0.0
    %v991 = vadd.f32 %v989, %v990
    %v992 = vsel %vm972, %v874, 0.0
    %v993 = vadd.f32 %v991, %v992
    %v994 = vsel %vm972, %v879, 0.0
    %v995 = vadd.f32 %v993, %v994
    %v996 = vsel %vm972, %v884, 0.0
    %v997 = vadd.f32 %v995, %v996
    %v998 = vsel %vm972, %v889, 0.0
    %v999 = vadd.f32 %v997, %v998
    %v1000 = vsel %vm972, %v894, 0.0
    %v1001 = vadd.f32 %v999, %v1000
    %v1002 = vsel %vm972, %v899, 0.0
    %v1003 = vadd.f32 %v1001, %v1002
    %v1004 = vsel %vm972, %v904, 0.0
    %v1005 = vadd.f32 %v1003, %v1004
    %v1006 = vsel %vm972, %v909, 0.0
    %v1007 = vadd.f32 %v1005, %v1006
    %v1008 = vsel %vm972, %v914, 0.0
    %v1009 = vadd.f32 %v1007, %v1008
    %v1010 = vsel %vm972, %v919, 0.0
    %v1011 = vadd.f32 %v1009, %v1010
    %v1012 = vsel %vm972, %v924, 0.0
    %v1013 = vadd.f32 %v1011, %v1012
    %v1014 = vsel %vm972, %v929, 0.0
    %v1015 = vadd.f32 %v1013, %v1014
    %v1016 = vsel %vm972, %v934, 0.0
    %v1017 = vadd.f32 %v1015, %v1016
    %v1018 = vsel %vm972, %v939, 0.0
    %v1019 = vadd.f32 %v1017, %v1018
    %v1020 = vsel %vm972, %v944, 0.0
    %v1021 = vadd.f32 %v1019, %v1020
    %v1022 = vsel %vm972, %v949, 0.0
    %v1023 = vadd.f32 %v1021, %v1022
    %v1024 = vsel %vm972, %v954, 0.0
    %v1025 = vadd.f32 %v1023, %v1024
    %v1026 = vsel %vm972, %v959, 0.0
    %v1027 = vadd.f32 %v1025, %v1026
    %v1028 = vsel %vm972, %v964, 0.0
    %v1029 = vadd.f32 %v1027, %v1028
    %v1030 = vsel %vm972, %v969, 0.0
    %v1031 = vadd.f32 %v1029, %v1030
    %v1032 = vrot.slane %v1031, 4
    %v1033 = vadd.f32 %v1031, %v1032
    %v1034 = vrot.slane %v1033, 2
    %v1035 = vadd.f32 %v1033, %v1034
    %v1036 = vrot.slane %v1035, 1
    %v1037 = vadd.f32 %v1035, %v1036
    %v1038 = vrcp.pop 240.0
    %v1039 = vmul.f32 %v1037, %v1038
    %v1040 = vsub.f32 %v824, %v1039
    %v1041 = vsub.f32 %v829, %v1039
    %v1042 = vsub.f32 %v834, %v1039
    %v1043 = vsub.f32 %v839, %v1039
    %v1044 = vsub.f32 %v844, %v1039
    %v1045 = vsub.f32 %v849, %v1039
    %v1046 = vsub.f32 %v854, %v1039
    %v1047 = vsub.f32 %v859, %v1039
    %v1048 = vsub.f32 %v864, %v1039
    %v1049 = vsub.f32 %v869, %v1039
    %v1050 = vsub.f32 %v874, %v1039
    %v1051 = vsub.f32 %v879, %v1039
    %v1052 = vsub.f32 %v884, %v1039
    %v1053 = vsub.f32 %v889, %v1039
    %v1054 = vsub.f32 %v894, %v1039
    %v1055 = vsub.f32 %v899, %v1039
    %v1056 = vsub.f32 %v904, %v1039
    %v1057 = vsub.f32 %v909, %v1039
    %v1058 = vsub.f32 %v914, %v1039
    %v1059 = vsub.f32 %v919, %v1039
    %v1060 = vsub.f32 %v924, %v1039
    %v1061 = vsub.f32 %v929, %v1039
    %v1062 = vsub.f32 %v934, %v1039
    %v1063 = vsub.f32 %v939, %v1039
    %v1064 = vsub.f32 %v944, %v1039
    %v1065 = vsub.f32 %v949, %v1039
    %v1066 = vsub.f32 %v954, %v1039
    %v1067 = vsub.f32 %v959, %v1039
    %v1068 = vsub.f32 %v964, %v1039
    %v1069 = vsub.f32 %v969, %v1039
    %v1070 = vmul.f32 %v1040, %v1040
    %v1071 = vmul.f32 %v1041, %v1041
    %v1072 = vmul.f32 %v1042, %v1042
    %v1073 = vmul.f32 %v1043, %v1043
    %v1074 = vmul.f32 %v1044, %v1044
    %v1075 = vmul.f32 %v1045, %v1045
    %v1076 = vmul.f32 %v1046, %v1046
    %v1077 = vmul.f32 %v1047, %v1047
    %v1078 = vmul.f32 %v1048, %v1048
    %v1079 = vmul.f32 %v1049, %v1049
    %v1080 = vmul.f32 %v1050, %v1050
    %v1081 = vmul.f32 %v1051, %v1051
    %v1082 = vmul.f32 %v1052, %v1052
    %v1083 = vmul.f32 %v1053, %v1053
    %v1084 = vmul.f32 %v1054, %v1054
    %v1085 = vmul.f32 %v1055, %v1055
    %v1086 = vmul.f32 %v1056, %v1056
    %v1087 = vmul.f32 %v1057, %v1057
    %v1088 = vmul.f32 %v1058, %v1058
    %v1089 = vmul.f32 %v1059, %v1059
    %v1090 = vmul.f32 %v1060, %v1060
    %v1091 = vmul.f32 %v1061, %v1061
    %v1092 = vmul.f32 %v1062, %v1062
    %v1093 = vmul.f32 %v1063, %v1063
    %v1094 = vmul.f32 %v1064, %v1064
    %v1095 = vmul.f32 %v1065, %v1065
    %v1096 = vmul.f32 %v1066, %v1066
    %v1097 = vmul.f32 %v1067, %v1067
    %v1098 = vmul.f32 %v1068, %v1068
    %v1099 = vmul.f32 %v1069, %v1069
    %v1100 = vsel %vm972, %v1070, 0.0
    %v1101 = vsel %vm972, %v1071, 0.0
    %v1102 = vadd.f32 %v1100, %v1101
    %v1103 = vsel %vm972, %v1072, 0.0
    %v1104 = vadd.f32 %v1102, %v1103
    %v1105 = vsel %vm972, %v1073, 0.0
    %v1106 = vadd.f32 %v1104, %v1105
    %v1107 = vsel %vm972, %v1074, 0.0
    %v1108 = vadd.f32 %v1106, %v1107
    %v1109 = vsel %vm972, %v1075, 0.0
    %v1110 = vadd.f32 %v1108, %v1109
    %v1111 = vsel %vm972, %v1076, 0.0
    %v1112 = vadd.f32 %v1110, %v1111
    %v1113 = vsel %vm972, %v1077, 0.0
    %v1114 = vadd.f32 %v1112, %v1113
    %v1115 = vsel %vm972, %v1078, 0.0
    %v1116 = vadd.f32 %v1114, %v1115
    %v1117 = vsel %vm972, %v1079, 0.0
    %v1118 = vadd.f32 %v1116, %v1117
    %v1119 = vsel %vm972, %v1080, 0.0
    %v1120 = vadd.f32 %v1118, %v1119
    %v1121 = vsel %vm972, %v1081, 0.0
    %v1122 = vadd.f32 %v1120, %v1121
    %v1123 = vsel %vm972, %v1082, 0.0
    %v1124 = vadd.f32 %v1122, %v1123
    %v1125 = vsel %vm972, %v1083, 0.0
    %v1126 = vadd.f32 %v1124, %v1125
    %v1127 = vsel %vm972, %v1084, 0.0
    %v1128 = vadd.f32 %v1126, %v1127
    %v1129 = vsel %vm972, %v1085, 0.0
    %v1130 = vadd.f32 %v1128, %v1129
    %v1131 = vsel %vm972, %v1086, 0.0
    %v1132 = vadd.f32 %v1130, %v1131
    %v1133 = vsel %vm972, %v1087, 0.0
    %v1134 = vadd.f32 %v1132, %v1133
    %v1135 = vsel %vm972, %v1088, 0.0
    %v1136 = vadd.f32 %v1134, %v1135
    %v1137 = vsel %vm972, %v1089, 0.0
    %v1138 = vadd.f32 %v1136, %v1137
    %v1139 = vsel %vm972, %v1090, 0.0
    %v1140 = vadd.f32 %v1138, %v1139
    %v1141 = vsel %vm972, %v1091, 0.0
    %v1142 = vadd.f32 %v1140, %v1141
    %v1143 = vsel %vm972, %v1092, 0.0
    %v1144 = vadd.f32 %v1142, %v1143
    %v1145 = vsel %vm972, %v1093, 0.0
    %v1146 = vadd.f32 %v1144, %v1145
    %v1147 = vsel %vm972, %v1094, 0.0
    %v1148 = vadd.f32 %v1146, %v1147
    %v1149 = vsel %vm972, %v1095, 0.0
    %v1150 = vadd.f32 %v1148, %v1149
    %v1151 = vsel %vm972, %v1096, 0.0
    %v1152 = vadd.f32 %v1150, %v1151
    %v1153 = vsel %vm972, %v1097, 0.0
    %v1154 = vadd.f32 %v1152, %v1153
    %v1155 = vsel %vm972, %v1098, 0.0
    %v1156 = vadd.f32 %v1154, %v1155
    %v1157 = vsel %vm972, %v1099, 0.0
    %v1158 = vadd.f32 %v1156, %v1157
    %v1159 = vrot.slane %v1158, 4
    %v1160 = vadd.f32 %v1158, %v1159
    %v1161 = vrot.slane %v1160, 2
    %v1162 = vadd.f32 %v1160, %v1161
    %v1163 = vrot.slane %v1162, 1
    %v1164 = vadd.f32 %v1162, %v1163
    %v1165 = vmul.f32 %v1164, %v1038
    %v1166 = vadd.f32 %v1165, 1e-05
    %v1167 = vrsqrt.pop %v1166
    %v1168 = vmul.f32 %v1040, %v1167
    %v1169 = vmul.f32 %v1041, %v1167
    %v1170 = vmul.f32 %v1042, %v1167
    %v1171 = vmul.f32 %v1043, %v1167
    %v1172 = vmul.f32 %v1044, %v1167
    %v1173 = vmul.f32 %v1045, %v1167
    %v1174 = vmul.f32 %v1046, %v1167
    %v1175 = vmul.f32 %v1047, %v1167
    %v1176 = vmul.f32 %v1048, %v1167
    %v1177 = vmul.f32 %v1049, %v1167
    %v1178 = vmul.f32 %v1050, %v1167
    %v1179 = vmul.f32 %v1051, %v1167
    %v1180 = vmul.f32 %v1052, %v1167
    %v1181 = vmul.f32 %v1053, %v1167
    %v1182 = vmul.f32 %v1054, %v1167
    %v1183 = vmul.f32 %v1055, %v1167
    %v1184 = vmul.f32 %v1056, %v1167
    %v1185 = vmul.f32 %v1057, %v1167
    %v1186 = vmul.f32 %v1058, %v1167
    %v1187 = vmul.f32 %v1059, %v1167
    %v1188 = vmul.f32 %v1060, %v1167
    %v1189 = vmul.f32 %v1061, %v1167
    %v1190 = vmul.f32 %v1062, %v1167
    %v1191 = vmul.f32 %v1063, %v1167
    %v1192 = vmul.f32 %v1064, %v1167
    %v1193 = vmul.f32 %v1065, %v1167
    %v1194 = vmul.f32 %v1066, %v1167
    %v1195 = vmul.f32 %v1067, %v1167
    %v1196 = vmul.f32 %v1068, %v1167
    %v1197 = vmul.f32 %v1069, %v1167
    %v1198 = vlaneseq
    %v1199 = vshrl.u32 %v1198, 7
    %v1200 = vsub.s32 2, %v1199
    %v1201 = vrot.slane %v296, %v1200
    %v1202 = vmul.f32 %v1168, %v1201
    %v1203 = vmul.f32 %v1169, %v1201
    %v1204 = vmul.f32 %v1170, %v1201
    %v1205 = vmul.f32 %v1171, %v1201
    %v1206 = vmul.f32 %v1172, %v1201
    %v1207 = vmul.f32 %v1173, %v1201
    %v1208 = vmul.f32 %v1174, %v1201
    %v1209 = vmul.f32 %v1175, %v1201
    %v1210 = vmul.f32 %v1176, %v1201
    %v1211 = vmul.f32 %v1177, %v1201
    %v1212 = vmul.f32 %v1178, %v1201
    %v1213 = vmul.f32 %v1179, %v1201
    %v1214 = vmul.f32 %v1180, %v1201
    %v1215 = vmul.f32 %v1181, %v1201
    %v1216 = vmul.f32 %v1182, %v1201
    %v1217 = vmul.f32 %v1183, %v1201
    %v1218 = vmul.f32 %v1184, %v1201
    %v1219 = vmul.f32 %v1185, %v1201
    %v1220 = vmul.f32 %v1186, %v1201
    %v1221 = vmul.f32 %v1187, %v1201
    %v1222 = vmul.f32 %v1188, %v1201
    %v1223 = vmul.f32 %v1189, %v1201
    %v1224 = vmul.f32 %v1190, %v1201
    %v1225 = vmul.f32 %v1191, %v1201
    %v1226 = vmul.f32 %v1192, %v1201
    %v1227 = vmul.f32 %v1193, %v1201
    %v1228 = vmul.f32 %v1194, %v1201
    %v1229 = vmul.f32 %v1195, %v1201
    %v1230 = vmul.f32 %v1196, %v1201
    %v1231 = vmul.f32 %v1197, %v1201
    %v1232 = vlaneseq
    %v1233 = vshrl.u32 %v1232, 7
    %v1234 = vsub.s32 3, %v1233
    %v1235 = vrot.slane %v296, %v1234
    %v1236 = vadd.f32 %v1202, %v1235
    %v1237 = vadd.f32 %v1203, %v1235
    %v1238 = vadd.f32 %v1204, %v1235
    %v1239 = vadd.f32 %v1205, %v1235
    %v1240 = vadd.f32 %v1206, %v1235
    %v1241 = vadd.f32 %v1207, %v1235
    %v1242 = vadd.f32 %v1208, %v1235
    %v1243 = vadd.f32 %v1209, %v1235
    %v1244 = vadd.f32 %v1210, %v1235
    %v1245 = vadd.f32 %v1211, %v1235
    %v1246 = vadd.f32 %v1212, %v1235
    %v1247 = vadd.f32 %v1213, %v1235
    %v1248 = vadd.f32 %v1214, %v1235
    %v1249 = vadd.f32 %v1215, %v1235
    %v1250 = vadd.f32 %v1216, %v1235
    %v1251 = vadd.f32 %v1217, %v1235
    %v1252 = vadd.f32 %v1218, %v1235
    %v1253 = vadd.f32 %v1219, %v1235
    %v1254 = vadd.f32 %v1220, %v1235
    %v1255 = vadd.f32 %v1221, %v1235
    %v1256 = vadd.f32 %v1222, %v1235
    %v1257 = vadd.f32 %v1223, %v1235
    %v1258 = vadd.f32 %v1224, %v1235
    %v1259 = vadd.f32 %v1225, %v1235
    %v1260 = vadd.f32 %v1226, %v1235
    %v1261 = vadd.f32 %v1227, %v1235
    %v1262 = vadd.f32 %v1228, %v1235
    %v1263 = vadd.f32 %v1229, %v1235
    %v1264 = vadd.f32 %v1230, %v1235
    %v1265 = vadd.f32 %v1231, %v1235
    %v1266 = vmax.f32 %v1236, 0.0
    %v1267 = vmax.f32 %v1237, 0.0
    %v1268 = vmax.f32 %v1238, 0.0
    %v1269 = vmax.f32 %v1239, 0.0
    %v1270 = vmax.f32 %v1240, 0.0
    %v1271 = vmax.f32 %v1241, 0.0
    %v1272 = vmax.f32 %v1242, 0.0
    %v1273 = vmax.f32 %v1243, 0.0
    %v1274 = vmax.f32 %v1244, 0.0
    %v1275 = vmax.f32 %v1245, 0.0
    %v1276 = vmax.f32 %v1246, 0.0
    %v1277 = vmax.f32 %v1247, 0.0
    %v1278 = vmax.f32 %v1248, 0.0
    %v1279 = vmax.f32 %v1249, 0.0
    %v1280 = vmax.f32 %v1250, 0.0
    %v1281 = vmax.f32 %v1251, 0.0
    %v1282 = vmax.f32 %v1252, 0.0
    %v1283 = vmax.f32 %v1253, 0.0
    %v1284 = vmax.f32 %v1254, 0.0
    %v1285 = vmax.f32 %v1255, 0.0
    %v1286 = vmax.f32 %v1256, 0.0
    %v1287 = vmax.f32 %v1257, 0.0
    %v1288 = vmax.f32 %v1258, 0.0
    %v1289 = vmax.f32 %v1259, 0.0
    %v1290 = vmax.f32 %v1260, 0.0
    %v1291 = vmax.f32 %v1261, 0.0
    %v1292 = vmax.f32 %v1262, 0.0
    %v1293 = vmax.f32 %v1263, 0.0
    %v1294 = vmax.f32 %v1264, 0.0
    %v1295 = vmax.f32 %v1265, 0.0
    %v1296 = vld [vmem:[%s5] sm:$0xff]
    %v1297 = vld [vmem:[%s5 + $0x8] sm:$0xff]
    %v1298 = vlaneseq
    %v1299 = vshrl.u32 %v1298, 7
    %v1300 = vsub.s32 1, %v1299
    %v1301 = vrot.slane %v296, %v1300
    %v1303 = vsel %vm972, %v1266, 0
    %v1306 = vsel %vm972, %v1267, 0
    %v1309 = vsel %vm972, %v1268, 0
    %v1312 = vsel %vm972, %v1269, 0
    %v1315 = vsel %vm972, %v1270, 0
    %v1318 = vsel %vm972, %v1271, 0
    %v1321 = vsel %vm972, %v1272, 0
    %v1324 = vsel %vm972, %v1273, 0
    %v1327 = vsel %vm972, %v1274, 0
    %v1330 = vsel %vm972, %v1275, 0
    %v1333 = vsel %vm972, %v1276, 0
    %v1336 = vsel %vm972, %v1277, 0
    %v1339 = vsel %vm972, %v1278, 0
    %v1342 = vsel %vm972, %v1279, 0
    %v1345 = vsel %vm972, %v1280, 0
    %v1348 = vsel %vm972, %v1281, 0
    %v1351 = vsel %vm972, %v1282, 0
    %v1354 = vsel %vm972, %v1283, 0
    %v1357 = vsel %vm972, %v1284, 0
    %v1360 = vsel %vm972, %v1285, 0
    %v1363 = vsel %vm972, %v1286, 0
    %v1366 = vsel %vm972, %v1287, 0
    %v1369 = vsel %vm972, %v1288, 0
    %v1372 = vsel %vm972, %v1289, 0
    %v1375 = vsel %vm972, %v1290, 0
    %v1378 = vsel %vm972, %v1291, 0
    %v1381 = vsel %vm972, %v1292, 0
    %v1384 = vsel %vm972, %v1293, 0
    %v1387 = vsel %vm972, %v1294, 0
    %v1390 = vsel %vm972, %v1295, 0
    %1392 = vmatprep.subr.mxu0 0.0
    %1393 = vmatpush1.msra.mxu0 %v1296
    %1394 = vmatprep.subr.mxu0 0.0
    %1395 = vmatpush1.msra.mxu0 %v1297
    %1396 = vmatprep.subr.mxu0 0.0
    %1397 = vmatpush1.msra.mxu0 0.0
    %1398 = vmatprep.subr.mxu0 0.0
    %1399 = vmatpush1.msra.mxu0 0.0
    %1400 = vmatprep.subr.mxu0 0.0
    %1401 = vmatpush1.msra.mxu0 0.0
    %1402 = vmatprep.subr.mxu0 0.0
    %1403 = vmatpush1.msra.mxu0 0.0
    %1404 = vmatprep.subr.mxu0 0.0
    %1405 = vmatpush1.msra.mxu0 0.0
    %1406 = vmatprep.subr.mxu0 0.0
    %1407 = vmatpush1.msra.mxu0 0.0
    %1408 = vmatprep.subr.mxu0 0.0
    %1409 = vmatpush1.msra.mxu0 0.0
    %1410 = vmatprep.subr.mxu0 0.0
    %1411 = vmatpush1.msra.mxu0 0.0
    %1412 = vmatprep.subr.mxu0 0.0
    %1413 = vmatpush1.msra.mxu0 0.0
    %1414 = vmatprep.subr.mxu0 0.0
    %1415 = vmatpush1.msra.mxu0 0.0
    %1416 = vmatprep.subr.mxu0 0.0
    %1417 = vmatpush1.msra.mxu0 0.0
    %1418 = vmatprep.subr.mxu0 0.0
    %1419 = vmatpush1.msra.mxu0 0.0
    %1420 = vmatprep.subr.mxu0 0.0
    %1421 = vmatpush1.msra.mxu0 0.0
    %1422 = vmatprep.subr.mxu0 0.0
    %1423 = vmatpush1.msra.mxu0 0.0
    %1424 = vmatprep.subr.mxu0 0.0
    %1425 = vmatpush1.msra.mxu0 0.0
    %1426 = vmatprep.subr.mxu0 0.0
    %1427 = vmatpush1.msra.mxu0 0.0
    %1428 = vmatprep.subr.mxu0 0.0
    %1429 = vmatpush1.msra.mxu0 0.0
    %1430 = vmatprep.subr.mxu0 0.0
    %1431 = vmatpush1.msra.mxu0 0.0
    %1432 = vmatprep.subr.mxu0 0.0
    %1433 = vmatpush1.msra.mxu0 0.0
    %1434 = vmatprep.subr.mxu0 0.0
    %1435 = vmatpush1.msra.mxu0 0.0
    %1436 = vmatprep.subr.mxu0 0.0
    %1437 = vmatpush1.msra.mxu0 0.0
    %1438 = vmatprep.subr.mxu0 0.0
    %1439 = vmatpush1.msra.mxu0 0.0
    %1440 = vmatprep.subr.mxu0 0.0
    %1441 = vmatpush1.msra.mxu0 0.0
    %1442 = vmatprep.subr.mxu0 0.0
    %1443 = vmatpush1.msra.mxu0 0.0
    %1444 = vmatprep.subr.mxu0 0.0
    %1445 = vmatpush1.msra.mxu0 0.0
    %1446 = vmatprep.subr.mxu0 0.0
    %1447 = vmatpush1.msra.mxu0 0.0
    %1448 = vmatprep.subr.mxu0 0.0
    %1449 = vmatpush1.msra.mxu0 0.0
    %1450 = vmatprep.subr.mxu0 0.0
    %1451 = vmatpush1.msra.mxu0 0.0
    %1452 = vmatprep.subr.mxu0 0.0
    %1453 = vmatpush1.msra.mxu0 0.0
    %1454 = vmatprep.subr.mxu0 0.0
    %1455 = vmatpush1.msra.mxu0 0.0
    %1456 = vmatprep.mubr.f32.mxu0 0.0
    %1457 = vmatmul.mubr.f32.gmra.mrb[0].mxu0 %v1303
    %v1458 = vpop.f32.mrb[0].mxu0
    %v1459 = vadd.f32 %v1301, %v1458
    %v1460 = vpop.f32.mrb[0].mxu0
    %1461 = vmatprep.mubr.f32.mxu0 0.0
    %1462 = vmatmul.mubr.f32.gmra.mrb[0].mxu0 %v1306
    %v1463 = vpop.f32.mrb[0].mxu0
    %v1464 = vadd.f32 %v1301, %v1463
    %v1465 = vpop.f32.mrb[0].mxu0
    %1466 = vmatprep.mubr.f32.mxu0 0.0
    %1467 = vmatmul.mubr.f32.gmra.mrb[0].mxu0 %v1309
    %v1468 = vpop.f32.mrb[0].mxu0
    %v1469 = vadd.f32 %v1301, %v1468
    %v1470 = vpop.f32.mrb[0].mxu0
    %1471 = vmatprep.mubr.f32.mxu0 0.0
    %1472 = vmatmul.mubr.f32.gmra.mrb[0].mxu0 %v1312
    %v1473 = vpop.f32.mrb[0].mxu0
    %v1474 = vadd.f32 %v1301, %v1473
    %v1475 = vpop.f32.mrb[0].mxu0
    %1476 = vmatprep.mubr.f32.mxu0 0.0
    %1477 = vmatmul.mubr.f32.gmra.mrb[0].mxu0 %v1315
    %v1478 = vpop.f32.mrb[0].mxu0
    %v1479 = vadd.f32 %v1301, %v1478
    %v1480 = vpop.f32.mrb[0].mxu0
    %1481 = vmatprep.mubr.f32.mxu0 0.0
    %1482 = vmatmul.mubr.f32.gmra.mrb[0].mxu0 %v1318
    %v1483 = vpop.f32.mrb[0].mxu0
    %v1484 = vadd.f32 %v1301, %v1483
    %v1485 = vpop.f32.mrb[0].mxu0
    %1486 = vmatprep.mubr.f32.mxu0 0.0
    %1487 = vmatmul.mubr.f32.gmra.mrb[0].mxu0 %v1321
    %v1488 = vpop.f32.mrb[0].mxu0
    %v1489 = vadd.f32 %v1301, %v1488
    %v1490 = vpop.f32.mrb[0].mxu0
    %1491 = vmatprep.mubr.f32.mxu0 0.0
    %1492 = vmatmul.mubr.f32.gmra.mrb[0].mxu0 %v1324
    %v1493 = vpop.f32.mrb[0].mxu0
    %v1494 = vadd.f32 %v1301, %v1493
    %v1495 = vpop.f32.mrb[0].mxu0
    %1496 = vmatprep.mubr.f32.mxu0 0.0
    %1497 = vmatmul.mubr.f32.gmra.mrb[0].mxu0 %v1327
    %v1498 = vpop.f32.mrb[0].mxu0
    %v1499 = vadd.f32 %v1301, %v1498
    %v1500 = vpop.f32.mrb[0].mxu0
    %1501 = vmatprep.mubr.f32.mxu0 0.0
    %1502 = vmatmul.mubr.f32.gmra.mrb[0].mxu0 %v1330
    %v1503 = vpop.f32.mrb[0].mxu0
    %v1504 = vadd.f32 %v1301, %v1503
    %v1505 = vpop.f32.mrb[0].mxu0
    %1506 = vmatprep.mubr.f32.mxu0 0.0
    %1507 = vmatmul.mubr.f32.gmra.mrb[0].mxu0 %v1333
    %v1508 = vpop.f32.mrb[0].mxu0
    %v1509 = vadd.f32 %v1301, %v1508
    %v1510 = vpop.f32.mrb[0].mxu0
    %1511 = vmatprep.mubr.f32.mxu0 0.0
    %1512 = vmatmul.mubr.f32.gmra.mrb[0].mxu0 %v1336
    %v1513 = vpop.f32.mrb[0].mxu0
    %v1514 = vadd.f32 %v1301, %v1513
    %v1515 = vpop.f32.mrb[0].mxu0
    %1516 = vmatprep.mubr.f32.mxu0 0.0
    %1517 = vmatmul.mubr.f32.gmra.mrb[0].mxu0 %v1339
    %v1518 = vpop.f32.mrb[0].mxu0
    %v1519 = vadd.f32 %v1301, %v1518
    %v1520 = vpop.f32.mrb[0].mxu0
    %1521 = vmatprep.mubr.f32.mxu0 0.0
    %1522 = vmatmul.mubr.f32.gmra.mrb[0].mxu0 %v1342
    %v1523 = vpop.f32.mrb[0].mxu0
    %v1524 = vadd.f32 %v1301, %v1523
    %v1525 = vpop.f32.mrb[0].mxu0
    %1526 = vmatprep.mubr.f32.mxu0 0.0
    %1527 = vmatmul.mubr.f32.gmra.mrb[0].mxu0 %v1345
    %v1528 = vpop.f32.mrb[0].mxu0
    %v1529 = vadd.f32 %v1301, %v1528
    %v1530 = vpop.f32.mrb[0].mxu0
    %1531 = vmatprep.mubr.f32.mxu0 0.0
    %1532 = vmatmul.mubr.f32.gmra.mrb[0].mxu0 %v1348
    %v1533 = vpop.f32.mrb[0].mxu0
    %v1534 = vadd.f32 %v1301, %v1533
    %v1535 = vpop.f32.mrb[0].mxu0
    %1536 = vmatprep.mubr.f32.mxu0 0.0
    %1537 = vmatmul.mubr.f32.gmra.mrb[0].mxu0 %v1351
    %v1538 = vpop.f32.mrb[0].mxu0
    %v1539 = vadd.f32 %v1301, %v1538
    %v1540 = vpop.f32.mrb[0].mxu0
    %1541 = vmatprep.mubr.f32.mxu0 0.0
    %1542 = vmatmul.mubr.f32.gmra.mrb[0].mxu0 %v1354
    %v1543 = vpop.f32.mrb[0].mxu0
    %v1544 = vadd.f32 %v1301, %v1543
    %v1545 = vpop.f32.mrb[0].mxu0
    %1546 = vmatprep.mubr.f32.mxu0 0.0
    %1547 = vmatmul.mubr.f32.gmra.mrb[0].mxu0 %v1357
    %v1548 = vpop.f32.mrb[0].mxu0
    %v1549 = vadd.f32 %v1301, %v1548
    %v1550 = vpop.f32.mrb[0].mxu0
    %1551 = vmatprep.mubr.f32.mxu0 0.0
    %1552 = vmatmul.mubr.f32.gmra.mrb[0].mxu0 %v1360
    %v1553 = vpop.f32.mrb[0].mxu0
    %v1554 = vadd.f32 %v1301, %v1553
    %v1555 = vpop.f32.mrb[0].mxu0
    %1556 = vmatprep.mubr.f32.mxu0 0.0
    %1557 = vmatmul.mubr.f32.gmra.mrb[0].mxu0 %v1363
    %v1558 = vpop.f32.mrb[0].mxu0
    %v1559 = vadd.f32 %v1301, %v1558
    %v1560 = vpop.f32.mrb[0].mxu0
    %1561 = vmatprep.mubr.f32.mxu0 0.0
    %1562 = vmatmul.mubr.f32.gmra.mrb[0].mxu0 %v1366
    %v1563 = vpop.f32.mrb[0].mxu0
    %v1564 = vadd.f32 %v1301, %v1563
    %v1565 = vpop.f32.mrb[0].mxu0
    %1566 = vmatprep.mubr.f32.mxu0 0.0
    %1567 = vmatmul.mubr.f32.gmra.mrb[0].mxu0 %v1369
    %v1568 = vpop.f32.mrb[0].mxu0
    %v1569 = vadd.f32 %v1301, %v1568
    %v1570 = vpop.f32.mrb[0].mxu0
    %1571 = vmatprep.mubr.f32.mxu0 0.0
    %1572 = vmatmul.mubr.f32.gmra.mrb[0].mxu0 %v1372
    %v1573 = vpop.f32.mrb[0].mxu0
    %v1574 = vadd.f32 %v1301, %v1573
    %v1575 = vpop.f32.mrb[0].mxu0
    %1576 = vmatprep.mubr.f32.mxu0 0.0
    %1577 = vmatmul.mubr.f32.gmra.mrb[0].mxu0 %v1375
    %v1578 = vpop.f32.mrb[0].mxu0
    %v1579 = vadd.f32 %v1301, %v1578
    %v1580 = vpop.f32.mrb[0].mxu0
    %1581 = vmatprep.mubr.f32.mxu0 0.0
    %1582 = vmatmul.mubr.f32.gmra.mrb[0].mxu0 %v1378
    %v1583 = vpop.f32.mrb[0].mxu0
    %v1584 = vadd.f32 %v1301, %v1583
    %v1585 = vpop.f32.mrb[0].mxu0
    %1586 = vmatprep.mubr.f32.mxu0 0.0
    %1587 = vmatmul.mubr.f32.gmra.mrb[0].mxu0 %v1381
    %v1588 = vpop.f32.mrb[0].mxu0
    %v1589 = vadd.f32 %v1301, %v1588
    %v1590 = vpop.f32.mrb[0].mxu0
    %1591 = vmatprep.mubr.f32.mxu0 0.0
    %1592 = vmatmul.mubr.f32.gmra.mrb[0].mxu0 %v1384
    %v1593 = vpop.f32.mrb[0].mxu0
    %v1594 = vadd.f32 %v1301, %v1593
    %v1595 = vpop.f32.mrb[0].mxu0
    %1596 = vmatprep.mubr.f32.mxu0 0.0
    %1597 = vmatmul.mubr.f32.gmra.mrb[0].mxu0 %v1387
    %v1598 = vpop.f32.mrb[0].mxu0
    %v1599 = vadd.f32 %v1301, %v1598
    %v1600 = vpop.f32.mrb[0].mxu0
    %1601 = vmatprep.mubr.f32.mxu0 0.0
    %1602 = vmatmul.mubr.f32.gmra.mrb[0].mxu0 %v1390
    %v1603 = vpop.f32.mrb[0].mxu0
    %v1604 = vadd.f32 %v1301, %v1603
    %v1605 = vpop.f32.mrb[0].mxu0
    %1606 = vdwg.mxu0
    %v1607 = vsel %vm972, %v1459, 0.0
    %v1608 = vsel %vm972, %v1464, 0.0
    %v1609 = vadd.f32 %v1607, %v1608
    %v1610 = vsel %vm972, %v1469, 0.0
    %v1611 = vadd.f32 %v1609, %v1610
    %v1612 = vsel %vm972, %v1474, 0.0
    %v1613 = vadd.f32 %v1611, %v1612
    %v1614 = vsel %vm972, %v1479, 0.0
    %v1615 = vadd.f32 %v1613, %v1614
    %v1616 = vsel %vm972, %v1484, 0.0
    %v1617 = vadd.f32 %v1615, %v1616
    %v1618 = vsel %vm972, %v1489, 0.0
    %v1619 = vadd.f32 %v1617, %v1618
    %v1620 = vsel %vm972, %v1494, 0.0
    %v1621 = vadd.f32 %v1619, %v1620
    %v1622 = vsel %vm972, %v1499, 0.0
    %v1623 = vadd.f32 %v1621, %v1622
    %v1624 = vsel %vm972, %v1504, 0.0
    %v1625 = vadd.f32 %v1623, %v1624
    %v1626 = vsel %vm972, %v1509, 0.0
    %v1627 = vadd.f32 %v1625, %v1626
    %v1628 = vsel %vm972, %v1514, 0.0
    %v1629 = vadd.f32 %v1627, %v1628
    %v1630 = vsel %vm972, %v1519, 0.0
    %v1631 = vadd.f32 %v1629, %v1630
    %v1632 = vsel %vm972, %v1524, 0.0
    %v1633 = vadd.f32 %v1631, %v1632
    %v1634 = vsel %vm972, %v1529, 0.0
    %v1635 = vadd.f32 %v1633, %v1634
    %v1636 = vsel %vm972, %v1534, 0.0
    %v1637 = vadd.f32 %v1635, %v1636
    %v1638 = vsel %vm972, %v1539, 0.0
    %v1639 = vadd.f32 %v1637, %v1638
    %v1640 = vsel %vm972, %v1544, 0.0
    %v1641 = vadd.f32 %v1639, %v1640
    %v1642 = vsel %vm972, %v1549, 0.0
    %v1643 = vadd.f32 %v1641, %v1642
    %v1644 = vsel %vm972, %v1554, 0.0
    %v1645 = vadd.f32 %v1643, %v1644
    %v1646 = vsel %vm972, %v1559, 0.0
    %v1647 = vadd.f32 %v1645, %v1646
    %v1648 = vsel %vm972, %v1564, 0.0
    %v1649 = vadd.f32 %v1647, %v1648
    %v1650 = vsel %vm972, %v1569, 0.0
    %v1651 = vadd.f32 %v1649, %v1650
    %v1652 = vsel %vm972, %v1574, 0.0
    %v1653 = vadd.f32 %v1651, %v1652
    %v1654 = vsel %vm972, %v1579, 0.0
    %v1655 = vadd.f32 %v1653, %v1654
    %v1656 = vsel %vm972, %v1584, 0.0
    %v1657 = vadd.f32 %v1655, %v1656
    %v1658 = vsel %vm972, %v1589, 0.0
    %v1659 = vadd.f32 %v1657, %v1658
    %v1660 = vsel %vm972, %v1594, 0.0
    %v1661 = vadd.f32 %v1659, %v1660
    %v1662 = vsel %vm972, %v1599, 0.0
    %v1663 = vadd.f32 %v1661, %v1662
    %v1664 = vsel %vm972, %v1604, 0.0
    %v1665 = vadd.f32 %v1663, %v1664
    %v1666 = vrot.slane %v1665, 4
    %v1667 = vadd.f32 %v1665, %v1666
    %v1668 = vrot.slane %v1667, 2
    %v1669 = vadd.f32 %v1667, %v1668
    %v1670 = vrot.slane %v1669, 1
    %v1671 = vadd.f32 %v1669, %v1670
    %v1672 = vmul.f32 %v1671, %v1038
    %v1673 = vsub.f32 %v1459, %v1672
    %v1674 = vsub.f32 %v1464, %v1672
    %v1675 = vsub.f32 %v1469, %v1672
    %v1676 = vsub.f32 %v1474, %v1672
    %v1677 = vsub.f32 %v1479, %v1672
    %v1678 = vsub.f32 %v1484, %v1672
    %v1679 = vsub.f32 %v1489, %v1672
    %v1680 = vsub.f32 %v1494, %v1672
    %v1681 = vsub.f32 %v1499, %v1672
    %v1682 = vsub.f32 %v1504, %v1672
    %v1683 = vsub.f32 %v1509, %v1672
    %v1684 = vsub.f32 %v1514, %v1672
    %v1685 = vsub.f32 %v1519, %v1672
    %v1686 = vsub.f32 %v1524, %v1672
    %v1687 = vsub.f32 %v1529, %v1672
    %v1688 = vsub.f32 %v1534, %v1672
    %v1689 = vsub.f32 %v1539, %v1672
    %v1690 = vsub.f32 %v1544, %v1672
    %v1691 = vsub.f32 %v1549, %v1672
    %v1692 = vsub.f32 %v1554, %v1672
    %v1693 = vsub.f32 %v1559, %v1672
    %v1694 = vsub.f32 %v1564, %v1672
    %v1695 = vsub.f32 %v1569, %v1672
    %v1696 = vsub.f32 %v1574, %v1672
    %v1697 = vsub.f32 %v1579, %v1672
    %v1698 = vsub.f32 %v1584, %v1672
    %v1699 = vsub.f32 %v1589, %v1672
    %v1700 = vsub.f32 %v1594, %v1672
    %v1701 = vsub.f32 %v1599, %v1672
    %v1702 = vsub.f32 %v1604, %v1672
    %v1703 = vmul.f32 %v1673, %v1673
    %v1704 = vmul.f32 %v1674, %v1674
    %v1705 = vmul.f32 %v1675, %v1675
    %v1706 = vmul.f32 %v1676, %v1676
    %v1707 = vmul.f32 %v1677, %v1677
    %v1708 = vmul.f32 %v1678, %v1678
    %v1709 = vmul.f32 %v1679, %v1679
    %v1710 = vmul.f32 %v1680, %v1680
    %v1711 = vmul.f32 %v1681, %v1681
    %v1712 = vmul.f32 %v1682, %v1682
    %v1713 = vmul.f32 %v1683, %v1683
    %v1714 = vmul.f32 %v1684, %v1684
    %v1715 = vmul.f32 %v1685, %v1685
    %v1716 = vmul.f32 %v1686, %v1686
    %v1717 = vmul.f32 %v1687, %v1687
    %v1718 = vmul.f32 %v1688, %v1688
    %v1719 = vmul.f32 %v1689, %v1689
    %v1720 = vmul.f32 %v1690, %v1690
    %v1721 = vmul.f32 %v1691, %v1691
    %v1722 = vmul.f32 %v1692, %v1692
    %v1723 = vmul.f32 %v1693, %v1693
    %v1724 = vmul.f32 %v1694, %v1694
    %v1725 = vmul.f32 %v1695, %v1695
    %v1726 = vmul.f32 %v1696, %v1696
    %v1727 = vmul.f32 %v1697, %v1697
    %v1728 = vmul.f32 %v1698, %v1698
    %v1729 = vmul.f32 %v1699, %v1699
    %v1730 = vmul.f32 %v1700, %v1700
    %v1731 = vmul.f32 %v1701, %v1701
    %v1732 = vmul.f32 %v1702, %v1702
    %v1733 = vsel %vm972, %v1703, 0.0
    %v1734 = vsel %vm972, %v1704, 0.0
    %v1735 = vadd.f32 %v1733, %v1734
    %v1736 = vsel %vm972, %v1705, 0.0
    %v1737 = vadd.f32 %v1735, %v1736
    %v1738 = vsel %vm972, %v1706, 0.0
    %v1739 = vadd.f32 %v1737, %v1738
    %v1740 = vsel %vm972, %v1707, 0.0
    %v1741 = vadd.f32 %v1739, %v1740
    %v1742 = vsel %vm972, %v1708, 0.0
    %v1743 = vadd.f32 %v1741, %v1742
    %v1744 = vsel %vm972, %v1709, 0.0
    %v1745 = vadd.f32 %v1743, %v1744
    %v1746 = vsel %vm972, %v1710, 0.0
    %v1747 = vadd.f32 %v1745, %v1746
    %v1748 = vsel %vm972, %v1711, 0.0
    %v1749 = vadd.f32 %v1747, %v1748
    %v1750 = vsel %vm972, %v1712, 0.0
    %v1751 = vadd.f32 %v1749, %v1750
    %v1752 = vsel %vm972, %v1713, 0.0
    %v1753 = vadd.f32 %v1751, %v1752
    %v1754 = vsel %vm972, %v1714, 0.0
    %v1755 = vadd.f32 %v1753, %v1754
    %v1756 = vsel %vm972, %v1715, 0.0
    %v1757 = vadd.f32 %v1755, %v1756
    %v1758 = vsel %vm972, %v1716, 0.0
    %v1759 = vadd.f32 %v1757, %v1758
    %v1760 = vsel %vm972, %v1717, 0.0
    %v1761 = vadd.f32 %v1759, %v1760
    %v1762 = vsel %vm972, %v1718, 0.0
    %v1763 = vadd.f32 %v1761, %v1762
    %v1764 = vsel %vm972, %v1719, 0.0
    %v1765 = vadd.f32 %v1763, %v1764
    %v1766 = vsel %vm972, %v1720, 0.0
    %v1767 = vadd.f32 %v1765, %v1766
    %v1768 = vsel %vm972, %v1721, 0.0
    %v1769 = vadd.f32 %v1767, %v1768
    %v1770 = vsel %vm972, %v1722, 0.0
    %v1771 = vadd.f32 %v1769, %v1770
    %v1772 = vsel %vm972, %v1723, 0.0
    %v1773 = vadd.f32 %v1771, %v1772
    %v1774 = vsel %vm972, %v1724, 0.0
    %v1775 = vadd.f32 %v1773, %v1774
    %v1776 = vsel %vm972, %v1725, 0.0
    %v1777 = vadd.f32 %v1775, %v1776
    %v1778 = vsel %vm972, %v1726, 0.0
    %v1779 = vadd.f32 %v1777, %v1778
    %v1780 = vsel %vm972, %v1727, 0.0
    %v1781 = vadd.f32 %v1779, %v1780
    %v1782 = vsel %vm972, %v1728, 0.0
    %v1783 = vadd.f32 %v1781, %v1782
    %v1784 = vsel %vm972, %v1729, 0.0
    %v1785 = vadd.f32 %v1783, %v1784
    %v1786 = vsel %vm972, %v1730, 0.0
    %v1787 = vadd.f32 %v1785, %v1786
    %v1788 = vsel %vm972, %v1731, 0.0
    %v1789 = vadd.f32 %v1787, %v1788
    %v1790 = vsel %vm972, %v1732, 0.0
    %v1791 = vadd.f32 %v1789, %v1790
    %v1792 = vrot.slane %v1791, 4
    %v1793 = vadd.f32 %v1791, %v1792
    %v1794 = vrot.slane %v1793, 2
    %v1795 = vadd.f32 %v1793, %v1794
    %v1796 = vrot.slane %v1795, 1
    %v1797 = vadd.f32 %v1795, %v1796
    %v1798 = vmul.f32 %v1797, %v1038
    %v1799 = vadd.f32 %v1798, 1e-05
    %v1800 = vrsqrt.pop %v1799
    %v1801 = vmul.f32 %v1673, %v1800
    %v1802 = vmul.f32 %v1674, %v1800
    %v1803 = vmul.f32 %v1675, %v1800
    %v1804 = vmul.f32 %v1676, %v1800
    %v1805 = vmul.f32 %v1677, %v1800
    %v1806 = vmul.f32 %v1678, %v1800
    %v1807 = vmul.f32 %v1679, %v1800
    %v1808 = vmul.f32 %v1680, %v1800
    %v1809 = vmul.f32 %v1681, %v1800
    %v1810 = vmul.f32 %v1682, %v1800
    %v1811 = vmul.f32 %v1683, %v1800
    %v1812 = vmul.f32 %v1684, %v1800
    %v1813 = vmul.f32 %v1685, %v1800
    %v1814 = vmul.f32 %v1686, %v1800
    %v1815 = vmul.f32 %v1687, %v1800
    %v1816 = vmul.f32 %v1688, %v1800
    %v1817 = vmul.f32 %v1689, %v1800
    %v1818 = vmul.f32 %v1690, %v1800
    %v1819 = vmul.f32 %v1691, %v1800
    %v1820 = vmul.f32 %v1692, %v1800
    %v1821 = vmul.f32 %v1693, %v1800
    %v1822 = vmul.f32 %v1694, %v1800
    %v1823 = vmul.f32 %v1695, %v1800
    %v1824 = vmul.f32 %v1696, %v1800
    %v1825 = vmul.f32 %v1697, %v1800
    %v1826 = vmul.f32 %v1698, %v1800
    %v1827 = vmul.f32 %v1699, %v1800
    %v1828 = vmul.f32 %v1700, %v1800
    %v1829 = vmul.f32 %v1701, %v1800
    %v1830 = vmul.f32 %v1702, %v1800
    %v1831 = vlaneseq
    %v1832 = vshrl.u32 %v1831, 7
    %v1833 = vsub.s32 4, %v1832
    %v1834 = vrot.slane %v296, %v1833
    %v1835 = vmul.f32 %v1801, %v1834
    %v1836 = vmul.f32 %v1802, %v1834
    %v1837 = vmul.f32 %v1803, %v1834
    %v1838 = vmul.f32 %v1804, %v1834
    %v1839 = vmul.f32 %v1805, %v1834
    %v1840 = vmul.f32 %v1806, %v1834
    %v1841 = vmul.f32 %v1807, %v1834
    %v1842 = vmul.f32 %v1808, %v1834
    %v1843 = vmul.f32 %v1809, %v1834
    %v1844 = vmul.f32 %v1810, %v1834
    %v1845 = vmul.f32 %v1811, %v1834
    %v1846 = vmul.f32 %v1812, %v1834
    %v1847 = vmul.f32 %v1813, %v1834
    %v1848 = vmul.f32 %v1814, %v1834
    %v1849 = vmul.f32 %v1815, %v1834
    %v1850 = vmul.f32 %v1816, %v1834
    %v1851 = vmul.f32 %v1817, %v1834
    %v1852 = vmul.f32 %v1818, %v1834
    %v1853 = vmul.f32 %v1819, %v1834
    %v1854 = vmul.f32 %v1820, %v1834
    %v1855 = vmul.f32 %v1821, %v1834
    %v1856 = vmul.f32 %v1822, %v1834
    %v1857 = vmul.f32 %v1823, %v1834
    %v1858 = vmul.f32 %v1824, %v1834
    %v1859 = vmul.f32 %v1825, %v1834
    %v1860 = vmul.f32 %v1826, %v1834
    %v1861 = vmul.f32 %v1827, %v1834
    %v1862 = vmul.f32 %v1828, %v1834
    %v1863 = vmul.f32 %v1829, %v1834
    %v1864 = vmul.f32 %v1830, %v1834
    %v1865 = vlaneseq
    %v1866 = vshrl.u32 %v1865, 7
    %v1867 = vsub.s32 5, %v1866
    %v1868 = vrot.slane %v296, %v1867
    %v1869 = vadd.f32 %v1835, %v1868
    %v1870 = vadd.f32 %v1836, %v1868
    %v1871 = vadd.f32 %v1837, %v1868
    %v1872 = vadd.f32 %v1838, %v1868
    %v1873 = vadd.f32 %v1839, %v1868
    %v1874 = vadd.f32 %v1840, %v1868
    %v1875 = vadd.f32 %v1841, %v1868
    %v1876 = vadd.f32 %v1842, %v1868
    %v1877 = vadd.f32 %v1843, %v1868
    %v1878 = vadd.f32 %v1844, %v1868
    %v1879 = vadd.f32 %v1845, %v1868
    %v1880 = vadd.f32 %v1846, %v1868
    %v1881 = vadd.f32 %v1847, %v1868
    %v1882 = vadd.f32 %v1848, %v1868
    %v1883 = vadd.f32 %v1849, %v1868
    %v1884 = vadd.f32 %v1850, %v1868
    %v1885 = vadd.f32 %v1851, %v1868
    %v1886 = vadd.f32 %v1852, %v1868
    %v1887 = vadd.f32 %v1853, %v1868
    %v1888 = vadd.f32 %v1854, %v1868
    %v1889 = vadd.f32 %v1855, %v1868
    %v1890 = vadd.f32 %v1856, %v1868
    %v1891 = vadd.f32 %v1857, %v1868
    %v1892 = vadd.f32 %v1858, %v1868
    %v1893 = vadd.f32 %v1859, %v1868
    %v1894 = vadd.f32 %v1860, %v1868
    %v1895 = vadd.f32 %v1861, %v1868
    %v1896 = vadd.f32 %v1862, %v1868
    %v1897 = vadd.f32 %v1863, %v1868
    %v1898 = vadd.f32 %v1864, %v1868
    %v1899 = vmax.f32 %v1869, 0.0
    %v1900 = vmax.f32 %v1870, 0.0
    %v1901 = vmax.f32 %v1871, 0.0
    %v1902 = vmax.f32 %v1872, 0.0
    %v1903 = vmax.f32 %v1873, 0.0
    %v1904 = vmax.f32 %v1874, 0.0
    %v1905 = vmax.f32 %v1875, 0.0
    %v1906 = vmax.f32 %v1876, 0.0
    %v1907 = vmax.f32 %v1877, 0.0
    %v1908 = vmax.f32 %v1878, 0.0
    %v1909 = vmax.f32 %v1879, 0.0
    %v1910 = vmax.f32 %v1880, 0.0
    %v1911 = vmax.f32 %v1881, 0.0
    %v1912 = vmax.f32 %v1882, 0.0
    %v1913 = vmax.f32 %v1883, 0.0
    %v1914 = vmax.f32 %v1884, 0.0
    %v1915 = vmax.f32 %v1885, 0.0
    %v1916 = vmax.f32 %v1886, 0.0
    %v1917 = vmax.f32 %v1887, 0.0
    %v1918 = vmax.f32 %v1888, 0.0
    %v1919 = vmax.f32 %v1889, 0.0
    %v1920 = vmax.f32 %v1890, 0.0
    %v1921 = vmax.f32 %v1891, 0.0
    %v1922 = vmax.f32 %v1892, 0.0
    %v1923 = vmax.f32 %v1893, 0.0
    %v1924 = vmax.f32 %v1894, 0.0
    %v1925 = vmax.f32 %v1895, 0.0
    %v1926 = vmax.f32 %v1896, 0.0
    %v1927 = vmax.f32 %v1897, 0.0
    %v1928 = vmax.f32 %v1898, 0.0
    %v1929 = vsel %vm972, %v1899, 0.0
    %v1930 = vsel %vm972, %v1900, 0.0
    %v1931 = vadd.f32 %v1929, %v1930
    %v1932 = vsel %vm972, %v1901, 0.0
    %v1933 = vadd.f32 %v1931, %v1932
    %v1934 = vsel %vm972, %v1902, 0.0
    %v1935 = vadd.f32 %v1933, %v1934
    %v1936 = vsel %vm972, %v1903, 0.0
    %v1937 = vadd.f32 %v1935, %v1936
    %v1938 = vsel %vm972, %v1904, 0.0
    %v1939 = vadd.f32 %v1937, %v1938
    %v1940 = vsel %vm972, %v1905, 0.0
    %v1941 = vadd.f32 %v1939, %v1940
    %v1942 = vsel %vm972, %v1906, 0.0
    %v1943 = vadd.f32 %v1941, %v1942
    %v1944 = vsel %vm972, %v1907, 0.0
    %v1945 = vadd.f32 %v1943, %v1944
    %v1946 = vsel %vm972, %v1908, 0.0
    %v1947 = vadd.f32 %v1945, %v1946
    %v1948 = vsel %vm972, %v1909, 0.0
    %v1949 = vadd.f32 %v1947, %v1948
    %v1950 = vsel %vm972, %v1910, 0.0
    %v1951 = vadd.f32 %v1949, %v1950
    %v1952 = vsel %vm972, %v1911, 0.0
    %v1953 = vadd.f32 %v1951, %v1952
    %v1954 = vsel %vm972, %v1912, 0.0
    %v1955 = vadd.f32 %v1953, %v1954
    %v1956 = vsel %vm972, %v1913, 0.0
    %v1957 = vadd.f32 %v1955, %v1956
    %v1958 = vsel %vm972, %v1914, 0.0
    %v1959 = vadd.f32 %v1957, %v1958
    %v1960 = vsel %vm972, %v1915, 0.0
    %v1961 = vadd.f32 %v1959, %v1960
    %v1962 = vsel %vm972, %v1916, 0.0
    %v1963 = vadd.f32 %v1961, %v1962
    %v1964 = vsel %vm972, %v1917, 0.0
    %v1965 = vadd.f32 %v1963, %v1964
    %v1966 = vsel %vm972, %v1918, 0.0
    %v1967 = vadd.f32 %v1965, %v1966
    %v1968 = vsel %vm972, %v1919, 0.0
    %v1969 = vadd.f32 %v1967, %v1968
    %v1970 = vsel %vm972, %v1920, 0.0
    %v1971 = vadd.f32 %v1969, %v1970
    %v1972 = vsel %vm972, %v1921, 0.0
    %v1973 = vadd.f32 %v1971, %v1972
    %v1974 = vsel %vm972, %v1922, 0.0
    %v1975 = vadd.f32 %v1973, %v1974
    %v1976 = vsel %vm972, %v1923, 0.0
    %v1977 = vadd.f32 %v1975, %v1976
    %v1978 = vsel %vm972, %v1924, 0.0
    %v1979 = vadd.f32 %v1977, %v1978
    %v1980 = vsel %vm972, %v1925, 0.0
    %v1981 = vadd.f32 %v1979, %v1980
    %v1982 = vsel %vm972, %v1926, 0.0
    %v1983 = vadd.f32 %v1981, %v1982
    %v1984 = vsel %vm972, %v1927, 0.0
    %v1985 = vadd.f32 %v1983, %v1984
    %v1986 = vsel %vm972, %v1928, 0.0
    %v1987 = vadd.f32 %v1985, %v1986
    %v1988 = vrot.slane %v1987, 4
    %v1989 = vadd.f32 %v1987, %v1988
    %v1990 = vrot.slane %v1989, 2
    %v1991 = vadd.f32 %v1989, %v1990
    %v1992 = vrot.slane %v1991, 1
    %v1993 = vadd.f32 %v1991, %v1992
    %v1994 = vmul.f32 %v1993, %v1038
    %v1995 = vsub.f32 %v1899, %v1994
    %v1996 = vsub.f32 %v1900, %v1994
    %v1997 = vsub.f32 %v1901, %v1994
    %v1998 = vsub.f32 %v1902, %v1994
    %v1999 = vsub.f32 %v1903, %v1994
    %v2000 = vsub.f32 %v1904, %v1994
    %v2001 = vsub.f32 %v1905, %v1994
    %v2002 = vsub.f32 %v1906, %v1994
    %v2003 = vsub.f32 %v1907, %v1994
    %v2004 = vsub.f32 %v1908, %v1994
    %v2005 = vsub.f32 %v1909, %v1994
    %v2006 = vsub.f32 %v1910, %v1994
    %v2007 = vsub.f32 %v1911, %v1994
    %v2008 = vsub.f32 %v1912, %v1994
    %v2009 = vsub.f32 %v1913, %v1994
    %v2010 = vsub.f32 %v1914, %v1994
    %v2011 = vsub.f32 %v1915, %v1994
    %v2012 = vsub.f32 %v1916, %v1994
    %v2013 = vsub.f32 %v1917, %v1994
    %v2014 = vsub.f32 %v1918, %v1994
    %v2015 = vsub.f32 %v1919, %v1994
    %v2016 = vsub.f32 %v1920, %v1994
    %v2017 = vsub.f32 %v1921, %v1994
    %v2018 = vsub.f32 %v1922, %v1994
    %v2019 = vsub.f32 %v1923, %v1994
    %v2020 = vsub.f32 %v1924, %v1994
    %v2021 = vsub.f32 %v1925, %v1994
    %v2022 = vsub.f32 %v1926, %v1994
    %v2023 = vsub.f32 %v1927, %v1994
    %v2024 = vsub.f32 %v1928, %v1994
    %v2025 = vmul.f32 %v1995, %v1995
    %v2026 = vmul.f32 %v1996, %v1996
    %v2027 = vmul.f32 %v1997, %v1997
    %v2028 = vmul.f32 %v1998, %v1998
    %v2029 = vmul.f32 %v1999, %v1999
    %v2030 = vmul.f32 %v2000, %v2000
    %v2031 = vmul.f32 %v2001, %v2001
    %v2032 = vmul.f32 %v2002, %v2002
    %v2033 = vmul.f32 %v2003, %v2003
    %v2034 = vmul.f32 %v2004, %v2004
    %v2035 = vmul.f32 %v2005, %v2005
    %v2036 = vmul.f32 %v2006, %v2006
    %v2037 = vmul.f32 %v2007, %v2007
    %v2038 = vmul.f32 %v2008, %v2008
    %v2039 = vmul.f32 %v2009, %v2009
    %v2040 = vmul.f32 %v2010, %v2010
    %v2041 = vmul.f32 %v2011, %v2011
    %v2042 = vmul.f32 %v2012, %v2012
    %v2043 = vmul.f32 %v2013, %v2013
    %v2044 = vmul.f32 %v2014, %v2014
    %v2045 = vmul.f32 %v2015, %v2015
    %v2046 = vmul.f32 %v2016, %v2016
    %v2047 = vmul.f32 %v2017, %v2017
    %v2048 = vmul.f32 %v2018, %v2018
    %v2049 = vmul.f32 %v2019, %v2019
    %v2050 = vmul.f32 %v2020, %v2020
    %v2051 = vmul.f32 %v2021, %v2021
    %v2052 = vmul.f32 %v2022, %v2022
    %v2053 = vmul.f32 %v2023, %v2023
    %v2054 = vmul.f32 %v2024, %v2024
    %v2055 = vsel %vm972, %v2025, 0.0
    %v2056 = vsel %vm972, %v2026, 0.0
    %v2057 = vadd.f32 %v2055, %v2056
    %v2058 = vsel %vm972, %v2027, 0.0
    %v2059 = vadd.f32 %v2057, %v2058
    %v2060 = vsel %vm972, %v2028, 0.0
    %v2061 = vadd.f32 %v2059, %v2060
    %v2062 = vsel %vm972, %v2029, 0.0
    %v2063 = vadd.f32 %v2061, %v2062
    %v2064 = vsel %vm972, %v2030, 0.0
    %v2065 = vadd.f32 %v2063, %v2064
    %v2066 = vsel %vm972, %v2031, 0.0
    %v2067 = vadd.f32 %v2065, %v2066
    %v2068 = vsel %vm972, %v2032, 0.0
    %v2069 = vadd.f32 %v2067, %v2068
    %v2070 = vsel %vm972, %v2033, 0.0
    %v2071 = vadd.f32 %v2069, %v2070
    %v2072 = vsel %vm972, %v2034, 0.0
    %v2073 = vadd.f32 %v2071, %v2072
    %v2074 = vsel %vm972, %v2035, 0.0
    %v2075 = vadd.f32 %v2073, %v2074
    %v2076 = vsel %vm972, %v2036, 0.0
    %v2077 = vadd.f32 %v2075, %v2076
    %v2078 = vsel %vm972, %v2037, 0.0
    %v2079 = vadd.f32 %v2077, %v2078
    %v2080 = vsel %vm972, %v2038, 0.0
    %v2081 = vadd.f32 %v2079, %v2080
    %v2082 = vsel %vm972, %v2039, 0.0
    %v2083 = vadd.f32 %v2081, %v2082
    %v2084 = vsel %vm972, %v2040, 0.0
    %v2085 = vadd.f32 %v2083, %v2084
    %v2086 = vsel %vm972, %v2041, 0.0
    %v2087 = vadd.f32 %v2085, %v2086
    %v2088 = vsel %vm972, %v2042, 0.0
    %v2089 = vadd.f32 %v2087, %v2088
    %v2090 = vsel %vm972, %v2043, 0.0
    %v2091 = vadd.f32 %v2089, %v2090
    %v2092 = vsel %vm972, %v2044, 0.0
    %v2093 = vadd.f32 %v2091, %v2092
    %v2094 = vsel %vm972, %v2045, 0.0
    %v2095 = vadd.f32 %v2093, %v2094
    %v2096 = vsel %vm972, %v2046, 0.0
    %v2097 = vadd.f32 %v2095, %v2096
    %v2098 = vsel %vm972, %v2047, 0.0
    %v2099 = vadd.f32 %v2097, %v2098
    %v2100 = vsel %vm972, %v2048, 0.0
    %v2101 = vadd.f32 %v2099, %v2100
    %v2102 = vsel %vm972, %v2049, 0.0
    %v2103 = vadd.f32 %v2101, %v2102
    %v2104 = vsel %vm972, %v2050, 0.0
    %v2105 = vadd.f32 %v2103, %v2104
    %v2106 = vsel %vm972, %v2051, 0.0
    %v2107 = vadd.f32 %v2105, %v2106
    %v2108 = vsel %vm972, %v2052, 0.0
    %v2109 = vadd.f32 %v2107, %v2108
    %v2110 = vsel %vm972, %v2053, 0.0
    %v2111 = vadd.f32 %v2109, %v2110
    %v2112 = vsel %vm972, %v2054, 0.0
    %v2113 = vadd.f32 %v2111, %v2112
    %v2114 = vrot.slane %v2113, 4
    %v2115 = vadd.f32 %v2113, %v2114
    %v2116 = vrot.slane %v2115, 2
    %v2117 = vadd.f32 %v2115, %v2116
    %v2118 = vrot.slane %v2117, 1
    %v2119 = vadd.f32 %v2117, %v2118
    %v2120 = vmul.f32 %v2119, %v1038
    %v2121 = vadd.f32 %v2120, 1e-05
    %v2122 = vrsqrt.pop %v2121
    %v2123 = vmul.f32 %v1995, %v2122
    %v2124 = vmul.f32 %v1996, %v2122
    %v2125 = vmul.f32 %v1997, %v2122
    %v2126 = vmul.f32 %v1998, %v2122
    %v2127 = vmul.f32 %v1999, %v2122
    %v2128 = vmul.f32 %v2000, %v2122
    %v2129 = vmul.f32 %v2001, %v2122
    %v2130 = vmul.f32 %v2002, %v2122
    %v2131 = vmul.f32 %v2003, %v2122
    %v2132 = vmul.f32 %v2004, %v2122
    %v2133 = vmul.f32 %v2005, %v2122
    %v2134 = vmul.f32 %v2006, %v2122
    %v2135 = vmul.f32 %v2007, %v2122
    %v2136 = vmul.f32 %v2008, %v2122
    %v2137 = vmul.f32 %v2009, %v2122
    %v2138 = vmul.f32 %v2010, %v2122
    %v2139 = vmul.f32 %v2011, %v2122
    %v2140 = vmul.f32 %v2012, %v2122
    %v2141 = vmul.f32 %v2013, %v2122
    %v2142 = vmul.f32 %v2014, %v2122
    %v2143 = vmul.f32 %v2015, %v2122
    %v2144 = vmul.f32 %v2016, %v2122
    %v2145 = vmul.f32 %v2017, %v2122
    %v2146 = vmul.f32 %v2018, %v2122
    %v2147 = vmul.f32 %v2019, %v2122
    %v2148 = vmul.f32 %v2020, %v2122
    %v2149 = vmul.f32 %v2021, %v2122
    %v2150 = vmul.f32 %v2022, %v2122
    %v2151 = vmul.f32 %v2023, %v2122
    %v2152 = vmul.f32 %v2024, %v2122
    %v2153 = vlaneseq
    %v2154 = vshrl.u32 %v2153, 7
    %v2155 = vsub.s32 6, %v2154
    %v2156 = vrot.slane %v296, %v2155
    %v2157 = vmul.f32 %v2123, %v2156
    %v2158 = vmul.f32 %v2124, %v2156
    %v2159 = vmul.f32 %v2125, %v2156
    %v2160 = vmul.f32 %v2126, %v2156
    %v2161 = vmul.f32 %v2127, %v2156
    %v2162 = vmul.f32 %v2128, %v2156
    %v2163 = vmul.f32 %v2129, %v2156
    %v2164 = vmul.f32 %v2130, %v2156
    %v2165 = vmul.f32 %v2131, %v2156
    %v2166 = vmul.f32 %v2132, %v2156
    %v2167 = vmul.f32 %v2133, %v2156
    %v2168 = vmul.f32 %v2134, %v2156
    %v2169 = vmul.f32 %v2135, %v2156
    %v2170 = vmul.f32 %v2136, %v2156
    %v2171 = vmul.f32 %v2137, %v2156
    %v2172 = vmul.f32 %v2138, %v2156
    %v2173 = vmul.f32 %v2139, %v2156
    %v2174 = vmul.f32 %v2140, %v2156
    %v2175 = vmul.f32 %v2141, %v2156
    %v2176 = vmul.f32 %v2142, %v2156
    %v2177 = vmul.f32 %v2143, %v2156
    %v2178 = vmul.f32 %v2144, %v2156
    %v2179 = vmul.f32 %v2145, %v2156
    %v2180 = vmul.f32 %v2146, %v2156
    %v2181 = vmul.f32 %v2147, %v2156
    %v2182 = vmul.f32 %v2148, %v2156
    %v2183 = vmul.f32 %v2149, %v2156
    %v2184 = vmul.f32 %v2150, %v2156
    %v2185 = vmul.f32 %v2151, %v2156
    %v2186 = vmul.f32 %v2152, %v2156
    %v2187 = vlaneseq
    %v2188 = vshrl.u32 %v2187, 7
    %v2189 = vsub.s32 7, %v2188
    %v2190 = vrot.slane %v296, %v2189
    %v2191 = vadd.f32 %v2157, %v2190
    %v2192 = vadd.f32 %v2158, %v2190
    %v2193 = vadd.f32 %v2159, %v2190
    %v2194 = vadd.f32 %v2160, %v2190
    %v2195 = vadd.f32 %v2161, %v2190
    %v2196 = vadd.f32 %v2162, %v2190
    %v2197 = vadd.f32 %v2163, %v2190
    %v2198 = vadd.f32 %v2164, %v2190
    %v2199 = vadd.f32 %v2165, %v2190
    %v2200 = vadd.f32 %v2166, %v2190
    %v2201 = vadd.f32 %v2167, %v2190
    %v2202 = vadd.f32 %v2168, %v2190
    %v2203 = vadd.f32 %v2169, %v2190
    %v2204 = vadd.f32 %v2170, %v2190
    %v2205 = vadd.f32 %v2171, %v2190
    %v2206 = vadd.f32 %v2172, %v2190
    %v2207 = vadd.f32 %v2173, %v2190
    %v2208 = vadd.f32 %v2174, %v2190
    %v2209 = vadd.f32 %v2175, %v2190
    %v2210 = vadd.f32 %v2176, %v2190
    %v2211 = vadd.f32 %v2177, %v2190
    %v2212 = vadd.f32 %v2178, %v2190
    %v2213 = vadd.f32 %v2179, %v2190
    %v2214 = vadd.f32 %v2180, %v2190
    %v2215 = vadd.f32 %v2181, %v2190
    %v2216 = vadd.f32 %v2182, %v2190
    %v2217 = vadd.f32 %v2183, %v2190
    %v2218 = vadd.f32 %v2184, %v2190
    %v2219 = vadd.f32 %v2185, %v2190
    %v2220 = vadd.f32 %v2186, %v2190
    %v2221 = vmax.f32 %v2191, 0.0
    %v2222 = vmax.f32 %v2192, 0.0
    %v2223 = vmax.f32 %v2193, 0.0
    %v2224 = vmax.f32 %v2194, 0.0
    %v2225 = vmax.f32 %v2195, 0.0
    %v2226 = vmax.f32 %v2196, 0.0
    %v2227 = vmax.f32 %v2197, 0.0
    %v2228 = vmax.f32 %v2198, 0.0
    %v2229 = vmax.f32 %v2199, 0.0
    %v2230 = vmax.f32 %v2200, 0.0
    %v2231 = vmax.f32 %v2201, 0.0
    %v2232 = vmax.f32 %v2202, 0.0
    %v2233 = vmax.f32 %v2203, 0.0
    %v2234 = vmax.f32 %v2204, 0.0
    %v2235 = vmax.f32 %v2205, 0.0
    %v2236 = vmax.f32 %v2206, 0.0
    %v2237 = vmax.f32 %v2207, 0.0
    %v2238 = vmax.f32 %v2208, 0.0
    %v2239 = vmax.f32 %v2209, 0.0
    %v2240 = vmax.f32 %v2210, 0.0
    %v2241 = vmax.f32 %v2211, 0.0
    %v2242 = vmax.f32 %v2212, 0.0
    %v2243 = vmax.f32 %v2213, 0.0
    %v2244 = vmax.f32 %v2214, 0.0
    %v2245 = vmax.f32 %v2215, 0.0
    %v2246 = vmax.f32 %v2216, 0.0
    %v2247 = vmax.f32 %v2217, 0.0
    %v2248 = vmax.f32 %v2218, 0.0
    %v2249 = vmax.f32 %v2219, 0.0
    %v2250 = vmax.f32 %v2220, 0.0
    %2251 = vmatprep.subr.mxu0 0.0
    %2252 = vmatpush1.msra.mxu0 %v2221
    %2253 = vmatprep.subr.mxu0 0.0
    %2254 = vmatpush1.msra.mxu0 %v2222
    %2255 = vmatprep.subr.mxu0 0.0
    %2256 = vmatpush1.msra.mxu0 %v2223
    %2257 = vmatprep.subr.mxu0 0.0
    %2258 = vmatpush1.msra.mxu0 %v2224
    %2259 = vmatprep.subr.mxu0 0.0
    %2260 = vmatpush1.msra.mxu0 %v2225
    %2261 = vmatprep.subr.mxu0 0.0
    %2262 = vmatpush1.msra.mxu0 %v2226
    %2263 = vmatprep.subr.mxu0 0.0
    %2264 = vmatpush1.msra.mxu0 %v2227
    %2265 = vmatprep.subr.mxu0 0.0
    %2266 = vmatpush1.msra.mxu0 %v2228
    %2267 = vmatprep.subr.mxu0 0.0
    %2268 = vmatpush1.msra.mxu0 %v2229
    %2269 = vmatprep.subr.mxu0 0.0
    %2270 = vmatpush1.msra.mxu0 %v2230
    %2271 = vmatprep.subr.mxu0 0.0
    %2272 = vmatpush1.msra.mxu0 %v2231
    %2273 = vmatprep.subr.mxu0 0.0
    %2274 = vmatpush1.msra.mxu0 %v2232
    %2275 = vmatprep.subr.mxu0 0.0
    %2276 = vmatpush1.msra.mxu0 %v2233
    %2277 = vmatprep.subr.mxu0 0.0
    %2278 = vmatpush1.msra.mxu0 %v2234
    %2279 = vmatprep.subr.mxu0 0.0
    %2280 = vmatpush1.msra.mxu0 %v2235
    %2281 = vmatprep.subr.mxu0 0.0
    %2282 = vmatpush1.msra.mxu0 %v2236
    %2283 = vmatprep.subr.mxu0 0.0
    %2284 = vmatpush1.msra.mxu0 %v2237
    %2285 = vmatprep.subr.mxu0 0.0
    %2286 = vmatpush1.msra.mxu0 %v2238
    %2287 = vmatprep.subr.mxu0 0.0
    %2288 = vmatpush1.msra.mxu0 %v2239
    %2289 = vmatprep.subr.mxu0 0.0
    %2290 = vmatpush1.msra.mxu0 %v2240
    %2291 = vmatprep.subr.mxu0 0.0
    %2292 = vmatpush1.msra.mxu0 %v2241
    %2293 = vmatprep.subr.mxu0 0.0
    %2294 = vmatpush1.msra.mxu0 %v2242
    %2295 = vmatprep.subr.mxu0 0.0
    %2296 = vmatpush1.msra.mxu0 %v2243
    %2297 = vmatprep.subr.mxu0 0.0
    %2298 = vmatpush1.msra.mxu0 %v2244
    %2299 = vmatprep.subr.mxu0 0.0
    %2300 = vmatpush1.msra.mxu0 %v2245
    %2301 = vmatprep.subr.mxu0 0.0
    %2302 = vmatpush1.msra.mxu0 %v2246
    %2303 = vmatprep.subr.mxu0 0.0
    %2304 = vmatpush1.msra.mxu0 %v2247
    %2305 = vmatprep.subr.mxu0 0.0
    %2306 = vmatpush1.msra.mxu0 %v2248
    %2307 = vmatprep.subr.mxu0 0.0
    %2308 = vmatpush1.msra.mxu0 %v2249
    %2309 = vmatprep.subr.mxu0 0.0
    %2310 = vmatpush1.msra.mxu0 %v2250
    %2311 = vmatprep.subr.mxu0 0.0
    %2312 = vmatpush1.msra.mxu0 0.0
    %2313 = vmatprep.subr.mxu0 0.0
    %2314 = vmatpush1.msra.mxu0 0.0
    %2315 = vmatprep.mubr.f32.mxu0 %v97
    %2316 = vmatmul.mubr.f32.gmra.mrb[0].mxu0 %v86
    %v2317 = vpop.f32.mrb[0].mxu0
    %v2318 = vadd.f32 0.0, %v2317
    %v2319 = vpop.f32.mrb[0].mxu0
    %2320 = vmatprep.mubr.f32.mxu0 %v100
    %2321 = vmatmul.mubr.f32.gmra.mrb[0].mxu0 %v88
    %v2322 = vpop.f32.mrb[0].mxu0
    %v2323 = vadd.f32 0.0, %v2322
    %v2324 = vpop.f32.mrb[0].mxu0
    %2325 = vmatprep.mubr.f32.mxu0 %v103
    %2326 = vmatmul.mubr.f32.gmra.mrb[0].mxu0 %v90
    %v2327 = vpop.f32.mrb[0].mxu0
    %v2328 = vadd.f32 0.0, %v2327
    %v2329 = vpop.f32.mrb[0].mxu0
    %2330 = vmatprep.mubr.f32.mxu0 %v106
    %2331 = vmatmul.mubr.f32.gmra.mrb[0].mxu0 %v92
    %v2332 = vpop.f32.mrb[0].mxu0
    %v2333 = vadd.f32 0.0, %v2332
    %v2334 = vpop.f32.mrb[0].mxu0
    %2335 = vdwg.mxu0
    %v2336 = vld [vmem:[%s11] sm:$0xff]
    %v2337 = vld [vmem:[%s11 + $0x8] sm:$0xff]
    %v2339 = vsel %vm972, %v2318, 0
    %v2342 = vsel %vm972, %v2323, 0
    %v2345 = vsel %vm972, %v2328, 0
    %v2348 = vsel %vm972, %v2333, 0
    %2350 = vmatprep.subr.mxu0 0.0
    %2351 = vmatpush1.msra.mxu0 %v2336
    %2352 = vmatprep.subr.mxu0 0.0
    %2353 = vmatpush1.msra.mxu0 %v2337
    %2354 = vmatprep.subr.mxu0 0.0
    %2355 = vmatpush1.msra.mxu0 0.0
    %2356 = vmatprep.subr.mxu0 0.0
    %2357 = vmatpush1.msra.mxu0 0.0
    %2358 = vmatprep.subr.mxu0 0.0
    %2359 = vmatpush1.msra.mxu0 0.0
    %2360 = vmatprep.subr.mxu0 0.0
    %2361 = vmatpush1.msra.mxu0 0.0
    %2362 = vmatprep.subr.mxu0 0.0
    %2363 = vmatpush1.msra.mxu0 0.0
    %2364 = vmatprep.subr.mxu0 0.0
    %2365 = vmatpush1.msra.mxu0 0.0
    %2366 = vmatprep.subr.mxu0 0.0
    %2367 = vmatpush1.msra.mxu0 0.0
    %2368 = vmatprep.subr.mxu0 0.0
    %2369 = vmatpush1.msra.mxu0 0.0
    %2370 = vmatprep.subr.mxu0 0.0
    %2371 = vmatpush1.msra.mxu0 0.0
    %2372 = vmatprep.subr.mxu0 0.0
    %2373 = vmatpush1.msra.mxu0 0.0
    %2374 = vmatprep.subr.mxu0 0.0
    %2375 = vmatpush1.msra.mxu0 0.0
    %2376 = vmatprep.subr.mxu0 0.0
    %2377 = vmatpush1.msra.mxu0 0.0
    %2378 = vmatprep.subr.mxu0 0.0
    %2379 = vmatpush1.msra.mxu0 0.0
    %2380 = vmatprep.subr.mxu0 0.0
    %2381 = vmatpush1.msra.mxu0 0.0
    %2382 = vmatprep.subr.mxu0 0.0
    %2383 = vmatpush1.msra.mxu0 0.0
    %2384 = vmatprep.subr.mxu0 0.0
    %2385 = vmatpush1.msra.mxu0 0.0
    %2386 = vmatprep.subr.mxu0 0.0
    %2387 = vmatpush1.msra.mxu0 0.0
    %2388 = vmatprep.subr.mxu0 0.0
    %2389 = vmatpush1.msra.mxu0 0.0
    %2390 = vmatprep.subr.mxu0 0.0
    %2391 = vmatpush1.msra.mxu0 0.0
    %2392 = vmatprep.subr.mxu0 0.0
    %2393 = vmatpush1.msra.mxu0 0.0
    %2394 = vmatprep.subr.mxu0 0.0
    %2395 = vmatpush1.msra.mxu0 0.0
    %2396 = vmatprep.subr.mxu0 0.0
    %2397 = vmatpush1.msra.mxu0 0.0
    %2398 = vmatprep.subr.mxu0 0.0
    %2399 = vmatpush1.msra.mxu0 0.0
    %2400 = vmatprep.subr.mxu0 0.0
    %2401 = vmatpush1.msra.mxu0 0.0
    %2402 = vmatprep.subr.mxu0 0.0
    %2403 = vmatpush1.msra.mxu0 0.0
    %2404 = vmatprep.subr.mxu0 0.0
    %2405 = vmatpush1.msra.mxu0 0.0
    %2406 = vmatprep.subr.mxu0 0.0
    %2407 = vmatpush1.msra.mxu0 0.0
    %2408 = vmatprep.subr.mxu0 0.0
    %2409 = vmatpush1.msra.mxu0 0.0
    %2410 = vmatprep.subr.mxu0 0.0
    %2411 = vmatpush1.msra.mxu0 0.0
    %2412 = vmatprep.subr.mxu0 0.0
    %2413 = vmatpush1.msra.mxu0 0.0
    %2414 = vmatprep.mubr.f32.mxu0 0.0
    %2415 = vmatmul.mubr.f32.gmra.mrb[0].mxu0 %v2339
    %v2416 = vpop.f32.mrb[0].mxu0
    %v2417 = vadd.f32 0.0, %v2416
    %v2418 = vpop.f32.mrb[0].mxu0
    %2419 = vmatprep.mubr.f32.mxu0 0.0
    %2420 = vmatmul.mubr.f32.gmra.mrb[0].mxu0 %v2342
    %v2421 = vpop.f32.mrb[0].mxu0
    %v2422 = vadd.f32 0.0, %v2421
    %v2423 = vpop.f32.mrb[0].mxu0
    %2424 = vmatprep.mubr.f32.mxu0 0.0
    %2425 = vmatmul.mubr.f32.gmra.mrb[0].mxu0 %v2345
    %v2426 = vpop.f32.mrb[0].mxu0
    %v2427 = vadd.f32 0.0, %v2426
    %v2428 = vpop.f32.mrb[0].mxu0
    %2429 = vmatprep.mubr.f32.mxu0 0.0
    %2430 = vmatmul.mubr.f32.gmra.mrb[0].mxu0 %v2348
    %v2431 = vpop.f32.mrb[0].mxu0
    %v2432 = vadd.f32 0.0, %v2431
    %v2433 = vpop.f32.mrb[0].mxu0
    %2434 = vdwg.mxu0
    %v2435 = vadd.f32 %v278, %v2417
    %v2436 = vadd.f32 %v283, %v2422
    %v2437 = vadd.f32 %v288, %v2427
    %v2438 = vadd.f32 %v293, %v2432
    %v2439 = vlaneseq
    %v2440 = vshrl.u32 %v2439, 7
    %v2441 = vsub.s32 1, %v2440
    %v2442 = vrot.slane %v94, %v2441
    %v2443 = vadd.f32 %v2435, %v2442
    %v2444 = vadd.f32 %v2436, %v2442
    %v2445 = vadd.f32 %v2437, %v2442
    %v2446 = vadd.f32 %v2438, %v2442
    %v2447 = vld [vmem:[%s9] sm:$0xff]
    %v2448 = vld [vmem:[%s3] sm:$0xff]
    %v2449 = vld [vmem:[%s3 + $0x8] sm:$0xff]
    %v2450 = vld [vmem:[%s3 + $0x10] sm:$0xff]
    %v2451 = vld [vmem:[%s3 + $0x18] sm:$0xff]
    %v2452 = vld [vmem:[%s3 + $0x20] sm:$0xff]
    %v2453 = vld [vmem:[%s3 + $0x28] sm:$0xff]
    %v2454 = vld [vmem:[%s3 + $0x30] sm:$0xff]
    %v2455 = vld [vmem:[%s3 + $0x38] sm:$0xff]
    %v2456 = vld [vmem:[%s3 + $0x40] sm:$0xff]
    %v2457 = vld [vmem:[%s3 + $0x48] sm:$0xff]
    %v2458 = vld [vmem:[%s3 + $0x50] sm:$0xff]
    %v2459 = vld [vmem:[%s3 + $0x58] sm:$0xff]
    %v2460 = vld [vmem:[%s3 + $0x60] sm:$0xff]
    %v2461 = vld [vmem:[%s3 + $0x68] sm:$0xff]
    %v2462 = vld [vmem:[%s3 + $0x70] sm:$0xff]
    %v2463 = vld [vmem:[%s3 + $0x78] sm:$0xff]
    %v2464 = vld [vmem:[%s3 + $0x80] sm:$0xff]
    %v2465 = vld [vmem:[%s3 + $0x88] sm:$0xff]
    %v2466 = vld [vmem:[%s3 + $0x90] sm:$0xff]
    %v2467 = vld [vmem:[%s3 + $0x98] sm:$0xff]
    %v2468 = vld [vmem:[%s3 + $0xa0] sm:$0xff]
    %v2469 = vld [vmem:[%s3 + $0xa8] sm:$0xff]
    %v2470 = vld [vmem:[%s3 + $0xb0] sm:$0xff]
    %v2471 = vld [vmem:[%s3 + $0xb8] sm:$0xff]
    %v2472 = vld [vmem:[%s3 + $0xc0] sm:$0xff]
    %v2473 = vld [vmem:[%s3 + $0xc8] sm:$0xff]
    %v2474 = vld [vmem:[%s3 + $0xd0] sm:$0xff]
    %v2475 = vld [vmem:[%s3 + $0xd8] sm:$0xff]
    %v2476 = vld [vmem:[%s3 + $0xe0] sm:$0xff]
    %v2477 = vld [vmem:[%s3 + $0xe8] sm:$0xff]
    %v2478 = vld [vmem:[%s3 + $0xf0] sm:$0xff]
    %v2479 = vld [vmem:[%s3 + $0xf8] sm:$0xff]
    %v2480 = vld [vmem:[%s3 + $0x100] sm:$0xff]
    %v2481 = vld [vmem:[%s3 + $0x108] sm:$0xff]
    %v2482 = vld [vmem:[%s3 + $0x110] sm:$0xff]
    %v2483 = vld [vmem:[%s3 + $0x118] sm:$0xff]
    %v2484 = vld [vmem:[%s3 + $0x120] sm:$0xff]
    %v2485 = vld [vmem:[%s3 + $0x128] sm:$0xff]
    %v2486 = vld [vmem:[%s3 + $0x130] sm:$0xff]
    %v2487 = vld [vmem:[%s3 + $0x138] sm:$0xff]
    %v2488 = vld [vmem:[%s3 + $0x140] sm:$0xff]
    %v2489 = vld [vmem:[%s3 + $0x148] sm:$0xff]
    %v2490 = vld [vmem:[%s3 + $0x150] sm:$0xff]
    %v2491 = vld [vmem:[%s3 + $0x158] sm:$0xff]
    %v2492 = vld [vmem:[%s3 + $0x160] sm:$0xff]
    %v2493 = vld [vmem:[%s3 + $0x168] sm:$0xff]
    %v2494 = vld [vmem:[%s3 + $0x170] sm:$0xff]
    %v2495 = vld [vmem:[%s3 + $0x178] sm:$0xff]
    %v2496 = vld [vmem:[%s3 + $0x180] sm:$0xff]
    %v2497 = vld [vmem:[%s3 + $0x188] sm:$0xff]
    %v2498 = vld [vmem:[%s3 + $0x190] sm:$0xff]
    %v2499 = vld [vmem:[%s3 + $0x198] sm:$0xff]
    %v2500 = vld [vmem:[%s3 + $0x1a0] sm:$0xff]
    %v2501 = vld [vmem:[%s3 + $0x1a8] sm:$0xff]
    %v2502 = vld [vmem:[%s3 + $0x1b0] sm:$0xff]
    %v2503 = vld [vmem:[%s3 + $0x1b8] sm:$0xff]
    %v2504 = vld [vmem:[%s3 + $0x1c0] sm:$0xff]
    %v2505 = vld [vmem:[%s3 + $0x1c8] sm:$0xff]
    %v2506 = vld [vmem:[%s3 + $0x1d0] sm:$0xff]
    %v2507 = vld [vmem:[%s3 + $0x1d8] sm:$0xff]
    %v2509 = vsel %vm95, %v2449, 0
    %v2512 = vsel %vm95, %v2451, 0
    %v2515 = vsel %vm95, %v2453, 0
    %v2518 = vsel %vm95, %v2455, 0
    %v2521 = vsel %vm95, %v2457, 0
    %v2524 = vsel %vm95, %v2459, 0
    %v2527 = vsel %vm95, %v2461, 0
    %v2530 = vsel %vm95, %v2463, 0
    %v2533 = vsel %vm95, %v2465, 0
    %v2536 = vsel %vm95, %v2467, 0
    %v2539 = vsel %vm95, %v2469, 0
    %v2542 = vsel %vm95, %v2471, 0
    %v2545 = vsel %vm95, %v2473, 0
    %v2548 = vsel %vm95, %v2475, 0
    %v2551 = vsel %vm95, %v2477, 0
    %v2554 = vsel %vm95, %v2479, 0
    %v2557 = vsel %vm95, %v2481, 0
    %v2560 = vsel %vm95, %v2483, 0
    %v2563 = vsel %vm95, %v2485, 0
    %v2566 = vsel %vm95, %v2487, 0
    %v2569 = vsel %vm95, %v2489, 0
    %v2572 = vsel %vm95, %v2491, 0
    %v2575 = vsel %vm95, %v2493, 0
    %v2578 = vsel %vm95, %v2495, 0
    %v2581 = vsel %vm95, %v2497, 0
    %v2584 = vsel %vm95, %v2499, 0
    %v2587 = vsel %vm95, %v2501, 0
    %v2590 = vsel %vm95, %v2503, 0
    %v2593 = vsel %vm95, %v2505, 0
    %v2596 = vsel %vm95, %v2507, 0
    %2598 = vmatprep.subr.mxu0 0.0
    %2599 = vmatpush1.msra.mxu0 %v2221
    %2600 = vmatprep.subr.mxu0 0.0
    %2601 = vmatpush1.msra.mxu0 %v2222
    %2602 = vmatprep.subr.mxu0 0.0
    %2603 = vmatpush1.msra.mxu0 %v2223
    %2604 = vmatprep.subr.mxu0 0.0
    %2605 = vmatpush1.msra.mxu0 %v2224
    %2606 = vmatprep.subr.mxu0 0.0
    %2607 = vmatpush1.msra.mxu0 %v2225
    %2608 = vmatprep.subr.mxu0 0.0
    %2609 = vmatpush1.msra.mxu0 %v2226
    %2610 = vmatprep.subr.mxu0 0.0
    %2611 = vmatpush1.msra.mxu0 %v2227
    %2612 = vmatprep.subr.mxu0 0.0
    %2613 = vmatpush1.msra.mxu0 %v2228
    %2614 = vmatprep.subr.mxu0 0.0
    %2615 = vmatpush1.msra.mxu0 %v2229
    %2616 = vmatprep.subr.mxu0 0.0
    %2617 = vmatpush1.msra.mxu0 %v2230
    %2618 = vmatprep.subr.mxu0 0.0
    %2619 = vmatpush1.msra.mxu0 %v2231
    %2620 = vmatprep.subr.mxu0 0.0
    %2621 = vmatpush1.msra.mxu0 %v2232
    %2622 = vmatprep.subr.mxu0 0.0
    %2623 = vmatpush1.msra.mxu0 %v2233
    %2624 = vmatprep.subr.mxu0 0.0
    %2625 = vmatpush1.msra.mxu0 %v2234
    %2626 = vmatprep.subr.mxu0 0.0
    %2627 = vmatpush1.msra.mxu0 %v2235
    %2628 = vmatprep.subr.mxu0 0.0
    %2629 = vmatpush1.msra.mxu0 %v2236
    %2630 = vmatprep.subr.mxu0 0.0
    %2631 = vmatpush1.msra.mxu0 %v2237
    %2632 = vmatprep.subr.mxu0 0.0
    %2633 = vmatpush1.msra.mxu0 %v2238
    %2634 = vmatprep.subr.mxu0 0.0
    %2635 = vmatpush1.msra.mxu0 %v2239
    %2636 = vmatprep.subr.mxu0 0.0
    %2637 = vmatpush1.msra.mxu0 %v2240
    %2638 = vmatprep.subr.mxu0 0.0
    %2639 = vmatpush1.msra.mxu0 %v2241
    %2640 = vmatprep.subr.mxu0 0.0
    %2641 = vmatpush1.msra.mxu0 %v2242
    %2642 = vmatprep.subr.mxu0 0.0
    %2643 = vmatpush1.msra.mxu0 %v2243
    %2644 = vmatprep.subr.mxu0 0.0
    %2645 = vmatpush1.msra.mxu0 %v2244
    %2646 = vmatprep.subr.mxu0 0.0
    %2647 = vmatpush1.msra.mxu0 %v2245
    %2648 = vmatprep.subr.mxu0 0.0
    %2649 = vmatpush1.msra.mxu0 %v2246
    %2650 = vmatprep.subr.mxu0 0.0
    %2651 = vmatpush1.msra.mxu0 %v2247
    %2652 = vmatprep.subr.mxu0 0.0
    %2653 = vmatpush1.msra.mxu0 %v2248
    %2654 = vmatprep.subr.mxu0 0.0
    %2655 = vmatpush1.msra.mxu0 %v2249
    %2656 = vmatprep.subr.mxu0 0.0
    %2657 = vmatpush1.msra.mxu0 %v2250
    %2658 = vmatprep.subr.mxu0 0.0
    %2659 = vmatpush1.msra.mxu0 0.0
    %2660 = vmatprep.subr.mxu0 0.0
    %2661 = vmatpush1.msra.mxu0 0.0
    %2662 = vmatprep.mubr.f32.mxu0 %v2509
    %2663 = vmatmul.mubr.f32.gmra.mrb[0].mxu0 %v2448
    %v2664 = vpop.f32.mrb[0].mxu0
    %v2665 = vadd.f32 0.0, %v2664
    %v2666 = vpop.f32.mrb[0].mxu0
    %2667 = vmatprep.mubr.f32.mxu0 %v2512
    %2668 = vmatmul.mubr.f32.gmra.mrb[0].mxu0 %v2450
    %v2669 = vpop.f32.mrb[0].mxu0
    %v2670 = vadd.f32 0.0, %v2669
    %v2671 = vpop.f32.mrb[0].mxu0
    %2672 = vmatprep.mubr.f32.mxu0 %v2515
    %2673 = vmatmul.mubr.f32.gmra.mrb[0].mxu0 %v2452
    %v2674 = vpop.f32.mrb[0].mxu0
    %v2675 = vadd.f32 0.0, %v2674
    %v2676 = vpop.f32.mrb[0].mxu0
    %2677 = vmatprep.mubr.f32.mxu0 %v2518
    %2678 = vmatmul.mubr.f32.gmra.mrb[0].mxu0 %v2454
    %v2679 = vpop.f32.mrb[0].mxu0
    %v2680 = vadd.f32 0.0, %v2679
    %v2681 = vpop.f32.mrb[0].mxu0
    %2682 = vmatprep.mubr.f32.mxu0 %v2521
    %2683 = vmatmul.mubr.f32.gmra.mrb[0].mxu0 %v2456
    %v2684 = vpop.f32.mrb[0].mxu0
    %v2685 = vadd.f32 0.0, %v2684
    %v2686 = vpop.f32.mrb[0].mxu0
    %2687 = vmatprep.mubr.f32.mxu0 %v2524
    %2688 = vmatmul.mubr.f32.gmra.mrb[0].mxu0 %v2458
    %v2689 = vpop.f32.mrb[0].mxu0
    %v2690 = vadd.f32 0.0, %v2689
    %v2691 = vpop.f32.mrb[0].mxu0
    %2692 = vmatprep.mubr.f32.mxu0 %v2527
    %2693 = vmatmul.mubr.f32.gmra.mrb[0].mxu0 %v2460
    %v2694 = vpop.f32.mrb[0].mxu0
    %v2695 = vadd.f32 0.0, %v2694
    %v2696 = vpop.f32.mrb[0].mxu0
    %2697 = vmatprep.mubr.f32.mxu0 %v2530
    %2698 = vmatmul.mubr.f32.gmra.mrb[0].mxu0 %v2462
    %v2699 = vpop.f32.mrb[0].mxu0
    %v2700 = vadd.f32 0.0, %v2699
    %v2701 = vpop.f32.mrb[0].mxu0
    %2702 = vmatprep.mubr.f32.mxu0 %v2533
    %2703 = vmatmul.mubr.f32.gmra.mrb[0].mxu0 %v2464
    %v2704 = vpop.f32.mrb[0].mxu0
    %v2705 = vadd.f32 0.0, %v2704
    %v2706 = vpop.f32.mrb[0].mxu0
    %2707 = vmatprep.mubr.f32.mxu0 %v2536
    %2708 = vmatmul.mubr.f32.gmra.mrb[0].mxu0 %v2466
    %v2709 = vpop.f32.mrb[0].mxu0
    %v2710 = vadd.f32 0.0, %v2709
    %v2711 = vpop.f32.mrb[0].mxu0
    %2712 = vmatprep.mubr.f32.mxu0 %v2539
    %2713 = vmatmul.mubr.f32.gmra.mrb[0].mxu0 %v2468
    %v2714 = vpop.f32.mrb[0].mxu0
    %v2715 = vadd.f32 0.0, %v2714
    %v2716 = vpop.f32.mrb[0].mxu0
    %2717 = vmatprep.mubr.f32.mxu0 %v2542
    %2718 = vmatmul.mubr.f32.gmra.mrb[0].mxu0 %v2470
    %v2719 = vpop.f32.mrb[0].mxu0
    %v2720 = vadd.f32 0.0, %v2719
    %v2721 = vpop.f32.mrb[0].mxu0
    %2722 = vmatprep.mubr.f32.mxu0 %v2545
    %2723 = vmatmul.mubr.f32.gmra.mrb[0].mxu0 %v2472
    %v2724 = vpop.f32.mrb[0].mxu0
    %v2725 = vadd.f32 0.0, %v2724
    %v2726 = vpop.f32.mrb[0].mxu0
    %2727 = vmatprep.mubr.f32.mxu0 %v2548
    %2728 = vmatmul.mubr.f32.gmra.mrb[0].mxu0 %v2474
    %v2729 = vpop.f32.mrb[0].mxu0
    %v2730 = vadd.f32 0.0, %v2729
    %v2731 = vpop.f32.mrb[0].mxu0
    %2732 = vmatprep.mubr.f32.mxu0 %v2551
    %2733 = vmatmul.mubr.f32.gmra.mrb[0].mxu0 %v2476
    %v2734 = vpop.f32.mrb[0].mxu0
    %v2735 = vadd.f32 0.0, %v2734
    %v2736 = vpop.f32.mrb[0].mxu0
    %2737 = vmatprep.mubr.f32.mxu0 %v2554
    %2738 = vmatmul.mubr.f32.gmra.mrb[0].mxu0 %v2478
    %v2739 = vpop.f32.mrb[0].mxu0
    %v2740 = vadd.f32 0.0, %v2739
    %v2741 = vpop.f32.mrb[0].mxu0
    %2742 = vmatprep.mubr.f32.mxu0 %v2557
    %2743 = vmatmul.mubr.f32.gmra.mrb[0].mxu0 %v2480
    %v2744 = vpop.f32.mrb[0].mxu0
    %v2745 = vadd.f32 0.0, %v2744
    %v2746 = vpop.f32.mrb[0].mxu0
    %2747 = vmatprep.mubr.f32.mxu0 %v2560
    %2748 = vmatmul.mubr.f32.gmra.mrb[0].mxu0 %v2482
    %v2749 = vpop.f32.mrb[0].mxu0
    %v2750 = vadd.f32 0.0, %v2749
    %v2751 = vpop.f32.mrb[0].mxu0
    %2752 = vmatprep.mubr.f32.mxu0 %v2563
    %2753 = vmatmul.mubr.f32.gmra.mrb[0].mxu0 %v2484
    %v2754 = vpop.f32.mrb[0].mxu0
    %v2755 = vadd.f32 0.0, %v2754
    %v2756 = vpop.f32.mrb[0].mxu0
    %2757 = vmatprep.mubr.f32.mxu0 %v2566
    %2758 = vmatmul.mubr.f32.gmra.mrb[0].mxu0 %v2486
    %v2759 = vpop.f32.mrb[0].mxu0
    %v2760 = vadd.f32 0.0, %v2759
    %v2761 = vpop.f32.mrb[0].mxu0
    %2762 = vmatprep.mubr.f32.mxu0 %v2569
    %2763 = vmatmul.mubr.f32.gmra.mrb[0].mxu0 %v2488
    %v2764 = vpop.f32.mrb[0].mxu0
    %v2765 = vadd.f32 0.0, %v2764
    %v2766 = vpop.f32.mrb[0].mxu0
    %2767 = vmatprep.mubr.f32.mxu0 %v2572
    %2768 = vmatmul.mubr.f32.gmra.mrb[0].mxu0 %v2490
    %v2769 = vpop.f32.mrb[0].mxu0
    %v2770 = vadd.f32 0.0, %v2769
    %v2771 = vpop.f32.mrb[0].mxu0
    %2772 = vmatprep.mubr.f32.mxu0 %v2575
    %2773 = vmatmul.mubr.f32.gmra.mrb[0].mxu0 %v2492
    %v2774 = vpop.f32.mrb[0].mxu0
    %v2775 = vadd.f32 0.0, %v2774
    %v2776 = vpop.f32.mrb[0].mxu0
    %2777 = vmatprep.mubr.f32.mxu0 %v2578
    %2778 = vmatmul.mubr.f32.gmra.mrb[0].mxu0 %v2494
    %v2779 = vpop.f32.mrb[0].mxu0
    %v2780 = vadd.f32 0.0, %v2779
    %v2781 = vpop.f32.mrb[0].mxu0
    %2782 = vmatprep.mubr.f32.mxu0 %v2581
    %2783 = vmatmul.mubr.f32.gmra.mrb[0].mxu0 %v2496
    %v2784 = vpop.f32.mrb[0].mxu0
    %v2785 = vadd.f32 0.0, %v2784
    %v2786 = vpop.f32.mrb[0].mxu0
    %2787 = vmatprep.mubr.f32.mxu0 %v2584
    %2788 = vmatmul.mubr.f32.gmra.mrb[0].mxu0 %v2498
    %v2789 = vpop.f32.mrb[0].mxu0
    %v2790 = vadd.f32 0.0, %v2789
    %v2791 = vpop.f32.mrb[0].mxu0
    %2792 = vmatprep.mubr.f32.mxu0 %v2587
    %2793 = vmatmul.mubr.f32.gmra.mrb[0].mxu0 %v2500
    %v2794 = vpop.f32.mrb[0].mxu0
    %v2795 = vadd.f32 0.0, %v2794
    %v2796 = vpop.f32.mrb[0].mxu0
    %2797 = vmatprep.mubr.f32.mxu0 %v2590
    %2798 = vmatmul.mubr.f32.gmra.mrb[0].mxu0 %v2502
    %v2799 = vpop.f32.mrb[0].mxu0
    %v2800 = vadd.f32 0.0, %v2799
    %v2801 = vpop.f32.mrb[0].mxu0
    %2802 = vmatprep.mubr.f32.mxu0 %v2593
    %2803 = vmatmul.mubr.f32.gmra.mrb[0].mxu0 %v2504
    %v2804 = vpop.f32.mrb[0].mxu0
    %v2805 = vadd.f32 0.0, %v2804
    %v2806 = vpop.f32.mrb[0].mxu0
    %2807 = vmatprep.mubr.f32.mxu0 %v2596
    %2808 = vmatmul.mubr.f32.gmra.mrb[0].mxu0 %v2506
    %v2809 = vpop.f32.mrb[0].mxu0
    %v2810 = vadd.f32 0.0, %v2809
    %v2811 = vpop.f32.mrb[0].mxu0
    %2812 = vdwg.mxu0
    %v2813 = vld [vmem:[%s7] sm:$0xff]
    %v2814 = vld [vmem:[%s7 + $0x8] sm:$0xff]
    %v2815 = vlaneseq
    %v2816 = vshrl.u32 %v2815, 7
    %v2817 = vsub.s32 0, %v2816
    %v2818 = vrot.slane %v2447, %v2817
    %v2820 = vsel %vm972, %v2665, 0
    %v2823 = vsel %vm972, %v2670, 0
    %v2826 = vsel %vm972, %v2675, 0
    %v2829 = vsel %vm972, %v2680, 0
    %v2832 = vsel %vm972, %v2685, 0
    %v2835 = vsel %vm972, %v2690, 0
    %v2838 = vsel %vm972, %v2695, 0
    %v2841 = vsel %vm972, %v2700, 0
    %v2844 = vsel %vm972, %v2705, 0
    %v2847 = vsel %vm972, %v2710, 0
    %v2850 = vsel %vm972, %v2715, 0
    %v2853 = vsel %vm972, %v2720, 0
    %v2856 = vsel %vm972, %v2725, 0
    %v2859 = vsel %vm972, %v2730, 0
    %v2862 = vsel %vm972, %v2735, 0
    %v2865 = vsel %vm972, %v2740, 0
    %v2868 = vsel %vm972, %v2745, 0
    %v2871 = vsel %vm972, %v2750, 0
    %v2874 = vsel %vm972, %v2755, 0
    %v2877 = vsel %vm972, %v2760, 0
    %v2880 = vsel %vm972, %v2765, 0
    %v2883 = vsel %vm972, %v2770, 0
    %v2886 = vsel %vm972, %v2775, 0
    %v2889 = vsel %vm972, %v2780, 0
    %v2892 = vsel %vm972, %v2785, 0
    %v2895 = vsel %vm972, %v2790, 0
    %v2898 = vsel %vm972, %v2795, 0
    %v2901 = vsel %vm972, %v2800, 0
    %v2904 = vsel %vm972, %v2805, 0
    %v2907 = vsel %vm972, %v2810, 0
    %2909 = vmatprep.subr.mxu0 0.0
    %2910 = vmatpush1.msra.mxu0 %v2813
    %2911 = vmatprep.subr.mxu0 0.0
    %2912 = vmatpush1.msra.mxu0 %v2814
    %2913 = vmatprep.subr.mxu0 0.0
    %2914 = vmatpush1.msra.mxu0 0.0
    %2915 = vmatprep.subr.mxu0 0.0
    %2916 = vmatpush1.msra.mxu0 0.0
    %2917 = vmatprep.subr.mxu0 0.0
    %2918 = vmatpush1.msra.mxu0 0.0
    %2919 = vmatprep.subr.mxu0 0.0
    %2920 = vmatpush1.msra.mxu0 0.0
    %2921 = vmatprep.subr.mxu0 0.0
    %2922 = vmatpush1.msra.mxu0 0.0
    %2923 = vmatprep.subr.mxu0 0.0
    %2924 = vmatpush1.msra.mxu0 0.0
    %2925 = vmatprep.subr.mxu0 0.0
    %2926 = vmatpush1.msra.mxu0 0.0
    %2927 = vmatprep.subr.mxu0 0.0
    %2928 = vmatpush1.msra.mxu0 0.0
    %2929 = vmatprep.subr.mxu0 0.0
    %2930 = vmatpush1.msra.mxu0 0.0
    %2931 = vmatprep.subr.mxu0 0.0
    %2932 = vmatpush1.msra.mxu0 0.0
    %2933 = vmatprep.subr.mxu0 0.0
    %2934 = vmatpush1.msra.mxu0 0.0
    %2935 = vmatprep.subr.mxu0 0.0
    %2936 = vmatpush1.msra.mxu0 0.0
    %2937 = vmatprep.subr.mxu0 0.0
    %2938 = vmatpush1.msra.mxu0 0.0
    %2939 = vmatprep.subr.mxu0 0.0
    %2940 = vmatpush1.msra.mxu0 0.0
    %2941 = vmatprep.subr.mxu0 0.0
    %2942 = vmatpush1.msra.mxu0 0.0
    %2943 = vmatprep.subr.mxu0 0.0
    %2944 = vmatpush1.msra.mxu0 0.0
    %2945 = vmatprep.subr.mxu0 0.0
    %2946 = vmatpush1.msra.mxu0 0.0
    %2947 = vmatprep.subr.mxu0 0.0
    %2948 = vmatpush1.msra.mxu0 0.0
    %2949 = vmatprep.subr.mxu0 0.0
    %2950 = vmatpush1.msra.mxu0 0.0
    %2951 = vmatprep.subr.mxu0 0.0
    %2952 = vmatpush1.msra.mxu0 0.0
    %2953 = vmatprep.subr.mxu0 0.0
    %2954 = vmatpush1.msra.mxu0 0.0
    %2955 = vmatprep.subr.mxu0 0.0
    %2956 = vmatpush1.msra.mxu0 0.0
    %2957 = vmatprep.subr.mxu0 0.0
    %2958 = vmatpush1.msra.mxu0 0.0
    %2959 = vmatprep.subr.mxu0 0.0
    %2960 = vmatpush1.msra.mxu0 0.0
    %2961 = vmatprep.subr.mxu0 0.0
    %2962 = vmatpush1.msra.mxu0 0.0
    %2963 = vmatprep.subr.mxu0 0.0
    %2964 = vmatpush1.msra.mxu0 0.0
    %2965 = vmatprep.subr.mxu0 0.0
    %2966 = vmatpush1.msra.mxu0 0.0
    %2967 = vmatprep.subr.mxu0 0.0
    %2968 = vmatpush1.msra.mxu0 0.0
    %2969 = vmatprep.subr.mxu0 0.0
    %2970 = vmatpush1.msra.mxu0 0.0
    %2971 = vmatprep.subr.mxu0 0.0
    %2972 = vmatpush1.msra.mxu0 0.0
    %2973 = vmatprep.mubr.f32.mxu0 0.0
    %2974 = vmatmul.mubr.f32.gmra.mrb[0].mxu0 %v2820
    %v2975 = vpop.f32.mrb[0].mxu0
    %v2976 = vadd.f32 %v2818, %v2975
    %v2977 = vpop.f32.mrb[0].mxu0
    %2978 = vmatprep.mubr.f32.mxu0 0.0
    %2979 = vmatmul.mubr.f32.gmra.mrb[0].mxu0 %v2823
    %v2980 = vpop.f32.mrb[0].mxu0
    %v2981 = vadd.f32 %v2818, %v2980
    %v2982 = vpop.f32.mrb[0].mxu0
    %2983 = vmatprep.mubr.f32.mxu0 0.0
    %2984 = vmatmul.mubr.f32.gmra.mrb[0].mxu0 %v2826
    %v2985 = vpop.f32.mrb[0].mxu0
    %v2986 = vadd.f32 %v2818, %v2985
    %v2987 = vpop.f32.mrb[0].mxu0
    %2988 = vmatprep.mubr.f32.mxu0 0.0
    %2989 = vmatmul.mubr.f32.gmra.mrb[0].mxu0 %v2829
    %v2990 = vpop.f32.mrb[0].mxu0
    %v2991 = vadd.f32 %v2818, %v2990
    %v2992 = vpop.f32.mrb[0].mxu0
    %2993 = vmatprep.mubr.f32.mxu0 0.0
    %2994 = vmatmul.mubr.f32.gmra.mrb[0].mxu0 %v2832
    %v2995 = vpop.f32.mrb[0].mxu0
    %v2996 = vadd.f32 %v2818, %v2995
    %v2997 = vpop.f32.mrb[0].mxu0
    %2998 = vmatprep.mubr.f32.mxu0 0.0
    %2999 = vmatmul.mubr.f32.gmra.mrb[0].mxu0 %v2835
    %v3000 = vpop.f32.mrb[0].mxu0
    %v3001 = vadd.f32 %v2818, %v3000
    %v3002 = vpop.f32.mrb[0].mxu0
    %3003 = vmatprep.mubr.f32.mxu0 0.0
    %3004 = vmatmul.mubr.f32.gmra.mrb[0].mxu0 %v2838
    %v3005 = vpop.f32.mrb[0].mxu0
    %v3006 = vadd.f32 %v2818, %v3005
    %v3007 = vpop.f32.mrb[0].mxu0
    %3008 = vmatprep.mubr.f32.mxu0 0.0
    %3009 = vmatmul.mubr.f32.gmra.mrb[0].mxu0 %v2841
    %v3010 = vpop.f32.mrb[0].mxu0
    %v3011 = vadd.f32 %v2818, %v3010
    %v3012 = vpop.f32.mrb[0].mxu0
    %3013 = vmatprep.mubr.f32.mxu0 0.0
    %3014 = vmatmul.mubr.f32.gmra.mrb[0].mxu0 %v2844
    %v3015 = vpop.f32.mrb[0].mxu0
    %v3016 = vadd.f32 %v2818, %v3015
    %v3017 = vpop.f32.mrb[0].mxu0
    %3018 = vmatprep.mubr.f32.mxu0 0.0
    %3019 = vmatmul.mubr.f32.gmra.mrb[0].mxu0 %v2847
    %v3020 = vpop.f32.mrb[0].mxu0
    %v3021 = vadd.f32 %v2818, %v3020
    %v3022 = vpop.f32.mrb[0].mxu0
    %3023 = vmatprep.mubr.f32.mxu0 0.0
    %3024 = vmatmul.mubr.f32.gmra.mrb[0].mxu0 %v2850
    %v3025 = vpop.f32.mrb[0].mxu0
    %v3026 = vadd.f32 %v2818, %v3025
    %v3027 = vpop.f32.mrb[0].mxu0
    %3028 = vmatprep.mubr.f32.mxu0 0.0
    %3029 = vmatmul.mubr.f32.gmra.mrb[0].mxu0 %v2853
    %v3030 = vpop.f32.mrb[0].mxu0
    %v3031 = vadd.f32 %v2818, %v3030
    %v3032 = vpop.f32.mrb[0].mxu0
    %3033 = vmatprep.mubr.f32.mxu0 0.0
    %3034 = vmatmul.mubr.f32.gmra.mrb[0].mxu0 %v2856
    %v3035 = vpop.f32.mrb[0].mxu0
    %v3036 = vadd.f32 %v2818, %v3035
    %v3037 = vpop.f32.mrb[0].mxu0
    %3038 = vmatprep.mubr.f32.mxu0 0.0
    %3039 = vmatmul.mubr.f32.gmra.mrb[0].mxu0 %v2859
    %v3040 = vpop.f32.mrb[0].mxu0
    %v3041 = vadd.f32 %v2818, %v3040
    %v3042 = vpop.f32.mrb[0].mxu0
    %3043 = vmatprep.mubr.f32.mxu0 0.0
    %3044 = vmatmul.mubr.f32.gmra.mrb[0].mxu0 %v2862
    %v3045 = vpop.f32.mrb[0].mxu0
    %v3046 = vadd.f32 %v2818, %v3045
    %v3047 = vpop.f32.mrb[0].mxu0
    %3048 = vmatprep.mubr.f32.mxu0 0.0
    %3049 = vmatmul.mubr.f32.gmra.mrb[0].mxu0 %v2865
    %v3050 = vpop.f32.mrb[0].mxu0
    %v3051 = vadd.f32 %v2818, %v3050
    %v3052 = vpop.f32.mrb[0].mxu0
    %3053 = vmatprep.mubr.f32.mxu0 0.0
    %3054 = vmatmul.mubr.f32.gmra.mrb[0].mxu0 %v2868
    %v3055 = vpop.f32.mrb[0].mxu0
    %v3056 = vadd.f32 %v2818, %v3055
    %v3057 = vpop.f32.mrb[0].mxu0
    %3058 = vmatprep.mubr.f32.mxu0 0.0
    %3059 = vmatmul.mubr.f32.gmra.mrb[0].mxu0 %v2871
    %v3060 = vpop.f32.mrb[0].mxu0
    %v3061 = vadd.f32 %v2818, %v3060
    %v3062 = vpop.f32.mrb[0].mxu0
    %3063 = vmatprep.mubr.f32.mxu0 0.0
    %3064 = vmatmul.mubr.f32.gmra.mrb[0].mxu0 %v2874
    %v3065 = vpop.f32.mrb[0].mxu0
    %v3066 = vadd.f32 %v2818, %v3065
    %v3067 = vpop.f32.mrb[0].mxu0
    %3068 = vmatprep.mubr.f32.mxu0 0.0
    %3069 = vmatmul.mubr.f32.gmra.mrb[0].mxu0 %v2877
    %v3070 = vpop.f32.mrb[0].mxu0
    %v3071 = vadd.f32 %v2818, %v3070
    %v3072 = vpop.f32.mrb[0].mxu0
    %3073 = vmatprep.mubr.f32.mxu0 0.0
    %3074 = vmatmul.mubr.f32.gmra.mrb[0].mxu0 %v2880
    %v3075 = vpop.f32.mrb[0].mxu0
    %v3076 = vadd.f32 %v2818, %v3075
    %v3077 = vpop.f32.mrb[0].mxu0
    %3078 = vmatprep.mubr.f32.mxu0 0.0
    %3079 = vmatmul.mubr.f32.gmra.mrb[0].mxu0 %v2883
    %v3080 = vpop.f32.mrb[0].mxu0
    %v3081 = vadd.f32 %v2818, %v3080
    %v3082 = vpop.f32.mrb[0].mxu0
    %3083 = vmatprep.mubr.f32.mxu0 0.0
    %3084 = vmatmul.mubr.f32.gmra.mrb[0].mxu0 %v2886
    %v3085 = vpop.f32.mrb[0].mxu0
    %v3086 = vadd.f32 %v2818, %v3085
    %v3087 = vpop.f32.mrb[0].mxu0
    %3088 = vmatprep.mubr.f32.mxu0 0.0
    %3089 = vmatmul.mubr.f32.gmra.mrb[0].mxu0 %v2889
    %v3090 = vpop.f32.mrb[0].mxu0
    %v3091 = vadd.f32 %v2818, %v3090
    %v3092 = vpop.f32.mrb[0].mxu0
    %3093 = vmatprep.mubr.f32.mxu0 0.0
    %3094 = vmatmul.mubr.f32.gmra.mrb[0].mxu0 %v2892
    %v3095 = vpop.f32.mrb[0].mxu0
    %v3096 = vadd.f32 %v2818, %v3095
    %v3097 = vpop.f32.mrb[0].mxu0
    %3098 = vmatprep.mubr.f32.mxu0 0.0
    %3099 = vmatmul.mubr.f32.gmra.mrb[0].mxu0 %v2895
    %v3100 = vpop.f32.mrb[0].mxu0
    %v3101 = vadd.f32 %v2818, %v3100
    %v3102 = vpop.f32.mrb[0].mxu0
    %3103 = vmatprep.mubr.f32.mxu0 0.0
    %3104 = vmatmul.mubr.f32.gmra.mrb[0].mxu0 %v2898
    %v3105 = vpop.f32.mrb[0].mxu0
    %v3106 = vadd.f32 %v2818, %v3105
    %v3107 = vpop.f32.mrb[0].mxu0
    %3108 = vmatprep.mubr.f32.mxu0 0.0
    %3109 = vmatmul.mubr.f32.gmra.mrb[0].mxu0 %v2901
    %v3110 = vpop.f32.mrb[0].mxu0
    %v3111 = vadd.f32 %v2818, %v3110
    %v3112 = vpop.f32.mrb[0].mxu0
    %3113 = vmatprep.mubr.f32.mxu0 0.0
    %3114 = vmatmul.mubr.f32.gmra.mrb[0].mxu0 %v2904
    %v3115 = vpop.f32.mrb[0].mxu0
    %v3116 = vadd.f32 %v2818, %v3115
    %v3117 = vpop.f32.mrb[0].mxu0
    %3118 = vmatprep.mubr.f32.mxu0 0.0
    %3119 = vmatmul.mubr.f32.gmra.mrb[0].mxu0 %v2907
    %v3120 = vpop.f32.mrb[0].mxu0
    %v3121 = vadd.f32 %v2818, %v3120
    %v3122 = vpop.f32.mrb[0].mxu0
    %3123 = vdwg.mxu0
    %v3124 = vsel %vm972, %v2976, 0.0
    %v3125 = vsel %vm972, %v2981, 0.0
    %v3126 = vadd.f32 %v3124, %v3125
    %v3127 = vsel %vm972, %v2986, 0.0
    %v3128 = vadd.f32 %v3126, %v3127
    %v3129 = vsel %vm972, %v2991, 0.0
    %v3130 = vadd.f32 %v3128, %v3129
    %v3131 = vsel %vm972, %v2996, 0.0
    %v3132 = vadd.f32 %v3130, %v3131
    %v3133 = vsel %vm972, %v3001, 0.0
    %v3134 = vadd.f32 %v3132, %v3133
    %v3135 = vsel %vm972, %v3006, 0.0
    %v3136 = vadd.f32 %v3134, %v3135
    %v3137 = vsel %vm972, %v3011, 0.0
    %v3138 = vadd.f32 %v3136, %v3137
    %v3139 = vsel %vm972, %v3016, 0.0
    %v3140 = vadd.f32 %v3138, %v3139
    %v3141 = vsel %vm972, %v3021, 0.0
    %v3142 = vadd.f32 %v3140, %v3141
    %v3143 = vsel %vm972, %v3026, 0.0
    %v3144 = vadd.f32 %v3142, %v3143
    %v3145 = vsel %vm972, %v3031, 0.0
    %v3146 = vadd.f32 %v3144, %v3145
    %v3147 = vsel %vm972, %v3036, 0.0
    %v3148 = vadd.f32 %v3146, %v3147
    %v3149 = vsel %vm972, %v3041, 0.0
    %v3150 = vadd.f32 %v3148, %v3149
    %v3151 = vsel %vm972, %v3046, 0.0
    %v3152 = vadd.f32 %v3150, %v3151
    %v3153 = vsel %vm972, %v3051, 0.0
    %v3154 = vadd.f32 %v3152, %v3153
    %v3155 = vsel %vm972, %v3056, 0.0
    %v3156 = vadd.f32 %v3154, %v3155
    %v3157 = vsel %vm972, %v3061, 0.0
    %v3158 = vadd.f32 %v3156, %v3157
    %v3159 = vsel %vm972, %v3066, 0.0
    %v3160 = vadd.f32 %v3158, %v3159
    %v3161 = vsel %vm972, %v3071, 0.0
    %v3162 = vadd.f32 %v3160, %v3161
    %v3163 = vsel %vm972, %v3076, 0.0
    %v3164 = vadd.f32 %v3162, %v3163
    %v3165 = vsel %vm972, %v3081, 0.0
    %v3166 = vadd.f32 %v3164, %v3165
    %v3167 = vsel %vm972, %v3086, 0.0
    %v3168 = vadd.f32 %v3166, %v3167
    %v3169 = vsel %vm972, %v3091, 0.0
    %v3170 = vadd.f32 %v3168, %v3169
    %v3171 = vsel %vm972, %v3096, 0.0
    %v3172 = vadd.f32 %v3170, %v3171
    %v3173 = vsel %vm972, %v3101, 0.0
    %v3174 = vadd.f32 %v3172, %v3173
    %v3175 = vsel %vm972, %v3106, 0.0
    %v3176 = vadd.f32 %v3174, %v3175
    %v3177 = vsel %vm972, %v3111, 0.0
    %v3178 = vadd.f32 %v3176, %v3177
    %v3179 = vsel %vm972, %v3116, 0.0
    %v3180 = vadd.f32 %v3178, %v3179
    %v3181 = vsel %vm972, %v3121, 0.0
    %v3182 = vadd.f32 %v3180, %v3181
    %v3183 = vrot.slane %v3182, 4
    %v3184 = vadd.f32 %v3182, %v3183
    %v3185 = vrot.slane %v3184, 2
    %v3186 = vadd.f32 %v3184, %v3185
    %v3187 = vrot.slane %v3186, 1
    %v3188 = vadd.f32 %v3186, %v3187
    %v3189 = vmul.f32 %v3188, %v1038
    %v3190 = vsub.f32 %v2976, %v3189
    %v3191 = vsub.f32 %v2981, %v3189
    %v3192 = vsub.f32 %v2986, %v3189
    %v3193 = vsub.f32 %v2991, %v3189
    %v3194 = vsub.f32 %v2996, %v3189
    %v3195 = vsub.f32 %v3001, %v3189
    %v3196 = vsub.f32 %v3006, %v3189
    %v3197 = vsub.f32 %v3011, %v3189
    %v3198 = vsub.f32 %v3016, %v3189
    %v3199 = vsub.f32 %v3021, %v3189
    %v3200 = vsub.f32 %v3026, %v3189
    %v3201 = vsub.f32 %v3031, %v3189
    %v3202 = vsub.f32 %v3036, %v3189
    %v3203 = vsub.f32 %v3041, %v3189
    %v3204 = vsub.f32 %v3046, %v3189
    %v3205 = vsub.f32 %v3051, %v3189
    %v3206 = vsub.f32 %v3056, %v3189
    %v3207 = vsub.f32 %v3061, %v3189
    %v3208 = vsub.f32 %v3066, %v3189
    %v3209 = vsub.f32 %v3071, %v3189
    %v3210 = vsub.f32 %v3076, %v3189
    %v3211 = vsub.f32 %v3081, %v3189
    %v3212 = vsub.f32 %v3086, %v3189
    %v3213 = vsub.f32 %v3091, %v3189
    %v3214 = vsub.f32 %v3096, %v3189
    %v3215 = vsub.f32 %v3101, %v3189
    %v3216 = vsub.f32 %v3106, %v3189
    %v3217 = vsub.f32 %v3111, %v3189
    %v3218 = vsub.f32 %v3116, %v3189
    %v3219 = vsub.f32 %v3121, %v3189
    %v3220 = vmul.f32 %v3190, %v3190
    %v3221 = vmul.f32 %v3191, %v3191
    %v3222 = vmul.f32 %v3192, %v3192
    %v3223 = vmul.f32 %v3193, %v3193
    %v3224 = vmul.f32 %v3194, %v3194
    %v3225 = vmul.f32 %v3195, %v3195
    %v3226 = vmul.f32 %v3196, %v3196
    %v3227 = vmul.f32 %v3197, %v3197
    %v3228 = vmul.f32 %v3198, %v3198
    %v3229 = vmul.f32 %v3199, %v3199
    %v3230 = vmul.f32 %v3200, %v3200
    %v3231 = vmul.f32 %v3201, %v3201
    %v3232 = vmul.f32 %v3202, %v3202
    %v3233 = vmul.f32 %v3203, %v3203
    %v3234 = vmul.f32 %v3204, %v3204
    %v3235 = vmul.f32 %v3205, %v3205
    %v3236 = vmul.f32 %v3206, %v3206
    %v3237 = vmul.f32 %v3207, %v3207
    %v3238 = vmul.f32 %v3208, %v3208
    %v3239 = vmul.f32 %v3209, %v3209
    %v3240 = vmul.f32 %v3210, %v3210
    %v3241 = vmul.f32 %v3211, %v3211
    %v3242 = vmul.f32 %v3212, %v3212
    %v3243 = vmul.f32 %v3213, %v3213
    %v3244 = vmul.f32 %v3214, %v3214
    %v3245 = vmul.f32 %v3215, %v3215
    %v3246 = vmul.f32 %v3216, %v3216
    %v3247 = vmul.f32 %v3217, %v3217
    %v3248 = vmul.f32 %v3218, %v3218
    %v3249 = vmul.f32 %v3219, %v3219
    %v3250 = vsel %vm972, %v3220, 0.0
    %v3251 = vsel %vm972, %v3221, 0.0
    %v3252 = vadd.f32 %v3250, %v3251
    %v3253 = vsel %vm972, %v3222, 0.0
    %v3254 = vadd.f32 %v3252, %v3253
    %v3255 = vsel %vm972, %v3223, 0.0
    %v3256 = vadd.f32 %v3254, %v3255
    %v3257 = vsel %vm972, %v3224, 0.0
    %v3258 = vadd.f32 %v3256, %v3257
    %v3259 = vsel %vm972, %v3225, 0.0
    %v3260 = vadd.f32 %v3258, %v3259
    %v3261 = vsel %vm972, %v3226, 0.0
    %v3262 = vadd.f32 %v3260, %v3261
    %v3263 = vsel %vm972, %v3227, 0.0
    %v3264 = vadd.f32 %v3262, %v3263
    %v3265 = vsel %vm972, %v3228, 0.0
    %v3266 = vadd.f32 %v3264, %v3265
    %v3267 = vsel %vm972, %v3229, 0.0
    %v3268 = vadd.f32 %v3266, %v3267
    %v3269 = vsel %vm972, %v3230, 0.0
    %v3270 = vadd.f32 %v3268, %v3269
    %v3271 = vsel %vm972, %v3231, 0.0
    %v3272 = vadd.f32 %v3270, %v3271
    %v3273 = vsel %vm972, %v3232, 0.0
    %v3274 = vadd.f32 %v3272, %v3273
    %v3275 = vsel %vm972, %v3233, 0.0
    %v3276 = vadd.f32 %v3274, %v3275
    %v3277 = vsel %vm972, %v3234, 0.0
    %v3278 = vadd.f32 %v3276, %v3277
    %v3279 = vsel %vm972, %v3235, 0.0
    %v3280 = vadd.f32 %v3278, %v3279
    %v3281 = vsel %vm972, %v3236, 0.0
    %v3282 = vadd.f32 %v3280, %v3281
    %v3283 = vsel %vm972, %v3237, 0.0
    %v3284 = vadd.f32 %v3282, %v3283
    %v3285 = vsel %vm972, %v3238, 0.0
    %v3286 = vadd.f32 %v3284, %v3285
    %v3287 = vsel %vm972, %v3239, 0.0
    %v3288 = vadd.f32 %v3286, %v3287
    %v3289 = vsel %vm972, %v3240, 0.0
    %v3290 = vadd.f32 %v3288, %v3289
    %v3291 = vsel %vm972, %v3241, 0.0
    %v3292 = vadd.f32 %v3290, %v3291
    %v3293 = vsel %vm972, %v3242, 0.0
    %v3294 = vadd.f32 %v3292, %v3293
    %v3295 = vsel %vm972, %v3243, 0.0
    %v3296 = vadd.f32 %v3294, %v3295
    %v3297 = vsel %vm972, %v3244, 0.0
    %v3298 = vadd.f32 %v3296, %v3297
    %v3299 = vsel %vm972, %v3245, 0.0
    %v3300 = vadd.f32 %v3298, %v3299
    %v3301 = vsel %vm972, %v3246, 0.0
    %v3302 = vadd.f32 %v3300, %v3301
    %v3303 = vsel %vm972, %v3247, 0.0
    %v3304 = vadd.f32 %v3302, %v3303
    %v3305 = vsel %vm972, %v3248, 0.0
    %v3306 = vadd.f32 %v3304, %v3305
    %v3307 = vsel %vm972, %v3249, 0.0
    %v3308 = vadd.f32 %v3306, %v3307
    %v3309 = vrot.slane %v3308, 4
    %v3310 = vadd.f32 %v3308, %v3309
    %v3311 = vrot.slane %v3310, 2
    %v3312 = vadd.f32 %v3310, %v3311
    %v3313 = vrot.slane %v3312, 1
    %v3314 = vadd.f32 %v3312, %v3313
    %v3315 = vmul.f32 %v3314, %v1038
    %v3316 = vadd.f32 %v3315, 1e-05
    %v3317 = vrsqrt.pop %v3316
    %v3318 = vmul.f32 %v3190, %v3317
    %v3319 = vmul.f32 %v3191, %v3317
    %v3320 = vmul.f32 %v3192, %v3317
    %v3321 = vmul.f32 %v3193, %v3317
    %v3322 = vmul.f32 %v3194, %v3317
    %v3323 = vmul.f32 %v3195, %v3317
    %v3324 = vmul.f32 %v3196, %v3317
    %v3325 = vmul.f32 %v3197, %v3317
    %v3326 = vmul.f32 %v3198, %v3317
    %v3327 = vmul.f32 %v3199, %v3317
    %v3328 = vmul.f32 %v3200, %v3317
    %v3329 = vmul.f32 %v3201, %v3317
    %v3330 = vmul.f32 %v3202, %v3317
    %v3331 = vmul.f32 %v3203, %v3317
    %v3332 = vmul.f32 %v3204, %v3317
    %v3333 = vmul.f32 %v3205, %v3317
    %v3334 = vmul.f32 %v3206, %v3317
    %v3335 = vmul.f32 %v3207, %v3317
    %v3336 = vmul.f32 %v3208, %v3317
    %v3337 = vmul.f32 %v3209, %v3317
    %v3338 = vmul.f32 %v3210, %v3317
    %v3339 = vmul.f32 %v3211, %v3317
    %v3340 = vmul.f32 %v3212, %v3317
    %v3341 = vmul.f32 %v3213, %v3317
    %v3342 = vmul.f32 %v3214, %v3317
    %v3343 = vmul.f32 %v3215, %v3317
    %v3344 = vmul.f32 %v3216, %v3317
    %v3345 = vmul.f32 %v3217, %v3317
    %v3346 = vmul.f32 %v3218, %v3317
    %v3347 = vmul.f32 %v3219, %v3317
    %v3348 = vlaneseq
    %v3349 = vshrl.u32 %v3348, 7
    %v3350 = vsub.s32 2, %v3349
    %v3351 = vrot.slane %v2447, %v3350
    %v3352 = vmul.f32 %v3318, %v3351
    %v3353 = vmul.f32 %v3319, %v3351
    %v3354 = vmul.f32 %v3320, %v3351
    %v3355 = vmul.f32 %v3321, %v3351
    %v3356 = vmul.f32 %v3322, %v3351
    %v3357 = vmul.f32 %v3323, %v3351
    %v3358 = vmul.f32 %v3324, %v3351
    %v3359 = vmul.f32 %v3325, %v3351
    %v3360 = vmul.f32 %v3326, %v3351
    %v3361 = vmul.f32 %v3327, %v3351
    %v3362 = vmul.f32 %v3328, %v3351
    %v3363 = vmul.f32 %v3329, %v3351
    %v3364 = vmul.f32 %v3330, %v3351
    %v3365 = vmul.f32 %v3331, %v3351
    %v3366 = vmul.f32 %v3332, %v3351
    %v3367 = vmul.f32 %v3333, %v3351
    %v3368 = vmul.f32 %v3334, %v3351
    %v3369 = vmul.f32 %v3335, %v3351
    %v3370 = vmul.f32 %v3336, %v3351
    %v3371 = vmul.f32 %v3337, %v3351
    %v3372 = vmul.f32 %v3338, %v3351
    %v3373 = vmul.f32 %v3339, %v3351
    %v3374 = vmul.f32 %v3340, %v3351
    %v3375 = vmul.f32 %v3341, %v3351
    %v3376 = vmul.f32 %v3342, %v3351
    %v3377 = vmul.f32 %v3343, %v3351
    %v3378 = vmul.f32 %v3344, %v3351
    %v3379 = vmul.f32 %v3345, %v3351
    %v3380 = vmul.f32 %v3346, %v3351
    %v3381 = vmul.f32 %v3347, %v3351
    %v3382 = vlaneseq
    %v3383 = vshrl.u32 %v3382, 7
    %v3384 = vsub.s32 3, %v3383
    %v3385 = vrot.slane %v2447, %v3384
    %v3386 = vadd.f32 %v3352, %v3385
    %v3387 = vadd.f32 %v3353, %v3385
    %v3388 = vadd.f32 %v3354, %v3385
    %v3389 = vadd.f32 %v3355, %v3385
    %v3390 = vadd.f32 %v3356, %v3385
    %v3391 = vadd.f32 %v3357, %v3385
    %v3392 = vadd.f32 %v3358, %v3385
    %v3393 = vadd.f32 %v3359, %v3385
    %v3394 = vadd.f32 %v3360, %v3385
    %v3395 = vadd.f32 %v3361, %v3385
    %v3396 = vadd.f32 %v3362, %v3385
    %v3397 = vadd.f32 %v3363, %v3385
    %v3398 = vadd.f32 %v3364, %v3385
    %v3399 = vadd.f32 %v3365, %v3385
    %v3400 = vadd.f32 %v3366, %v3385
    %v3401 = vadd.f32 %v3367, %v3385
    %v3402 = vadd.f32 %v3368, %v3385
    %v3403 = vadd.f32 %v3369, %v3385
    %v3404 = vadd.f32 %v3370, %v3385
    %v3405 = vadd.f32 %v3371, %v3385
    %v3406 = vadd.f32 %v3372, %v3385
    %v3407 = vadd.f32 %v3373, %v3385
    %v3408 = vadd.f32 %v3374, %v3385
    %v3409 = vadd.f32 %v3375, %v3385
    %v3410 = vadd.f32 %v3376, %v3385
    %v3411 = vadd.f32 %v3377, %v3385
    %v3412 = vadd.f32 %v3378, %v3385
    %v3413 = vadd.f32 %v3379, %v3385
    %v3414 = vadd.f32 %v3380, %v3385
    %v3415 = vadd.f32 %v3381, %v3385
    %v3416 = vmax.f32 %v3386, 0.0
    %v3417 = vmax.f32 %v3387, 0.0
    %v3418 = vmax.f32 %v3388, 0.0
    %v3419 = vmax.f32 %v3389, 0.0
    %v3420 = vmax.f32 %v3390, 0.0
    %v3421 = vmax.f32 %v3391, 0.0
    %v3422 = vmax.f32 %v3392, 0.0
    %v3423 = vmax.f32 %v3393, 0.0
    %v3424 = vmax.f32 %v3394, 0.0
    %v3425 = vmax.f32 %v3395, 0.0
    %v3426 = vmax.f32 %v3396, 0.0
    %v3427 = vmax.f32 %v3397, 0.0
    %v3428 = vmax.f32 %v3398, 0.0
    %v3429 = vmax.f32 %v3399, 0.0
    %v3430 = vmax.f32 %v3400, 0.0
    %v3431 = vmax.f32 %v3401, 0.0
    %v3432 = vmax.f32 %v3402, 0.0
    %v3433 = vmax.f32 %v3403, 0.0
    %v3434 = vmax.f32 %v3404, 0.0
    %v3435 = vmax.f32 %v3405, 0.0
    %v3436 = vmax.f32 %v3406, 0.0
    %v3437 = vmax.f32 %v3407, 0.0
    %v3438 = vmax.f32 %v3408, 0.0
    %v3439 = vmax.f32 %v3409, 0.0
    %v3440 = vmax.f32 %v3410, 0.0
    %v3441 = vmax.f32 %v3411, 0.0
    %v3442 = vmax.f32 %v3412, 0.0
    %v3443 = vmax.f32 %v3413, 0.0
    %v3444 = vmax.f32 %v3414, 0.0
    %v3445 = vmax.f32 %v3415, 0.0
    %v3446 = vld [vmem:[%s8] sm:$0xff]
    %v3447 = vld [vmem:[%s8 + $0x8] sm:$0xff]
    %v3448 = vlaneseq
    %v3449 = vshrl.u32 %v3448, 7
    %v3450 = vsub.s32 1, %v3449
    %v3451 = vrot.slane %v2447, %v3450
    %v3453 = vsel %vm972, %v3416, 0
    %v3456 = vsel %vm972, %v3417, 0
    %v3459 = vsel %vm972, %v3418, 0
    %v3462 = vsel %vm972, %v3419, 0
    %v3465 = vsel %vm972, %v3420, 0
    %v3468 = vsel %vm972, %v3421, 0
    %v3471 = vsel %vm972, %v3422, 0
    %v3474 = vsel %vm972, %v3423, 0
    %v3477 = vsel %vm972, %v3424, 0
    %v3480 = vsel %vm972, %v3425, 0
    %v3483 = vsel %vm972, %v3426, 0
    %v3486 = vsel %vm972, %v3427, 0
    %v3489 = vsel %vm972, %v3428, 0
    %v3492 = vsel %vm972, %v3429, 0
    %v3495 = vsel %vm972, %v3430, 0
    %v3498 = vsel %vm972, %v3431, 0
    %v3501 = vsel %vm972, %v3432, 0
    %v3504 = vsel %vm972, %v3433, 0
    %v3507 = vsel %vm972, %v3434, 0
    %v3510 = vsel %vm972, %v3435, 0
    %v3513 = vsel %vm972, %v3436, 0
    %v3516 = vsel %vm972, %v3437, 0
    %v3519 = vsel %vm972, %v3438, 0
    %v3522 = vsel %vm972, %v3439, 0
    %v3525 = vsel %vm972, %v3440, 0
    %v3528 = vsel %vm972, %v3441, 0
    %v3531 = vsel %vm972, %v3442, 0
    %v3534 = vsel %vm972, %v3443, 0
    %v3537 = vsel %vm972, %v3444, 0
    %v3540 = vsel %vm972, %v3445, 0
    %3542 = vmatprep.subr.mxu0 0.0
    %3543 = vmatpush1.msra.mxu0 %v3446
    %3544 = vmatprep.subr.mxu0 0.0
    %3545 = vmatpush1.msra.mxu0 %v3447
    %3546 = vmatprep.subr.mxu0 0.0
    %3547 = vmatpush1.msra.mxu0 0.0
    %3548 = vmatprep.subr.mxu0 0.0
    %3549 = vmatpush1.msra.mxu0 0.0
    %3550 = vmatprep.subr.mxu0 0.0
    %3551 = vmatpush1.msra.mxu0 0.0
    %3552 = vmatprep.subr.mxu0 0.0
    %3553 = vmatpush1.msra.mxu0 0.0
    %3554 = vmatprep.subr.mxu0 0.0
    %3555 = vmatpush1.msra.mxu0 0.0
    %3556 = vmatprep.subr.mxu0 0.0
    %3557 = vmatpush1.msra.mxu0 0.0
    %3558 = vmatprep.subr.mxu0 0.0
    %3559 = vmatpush1.msra.mxu0 0.0
    %3560 = vmatprep.subr.mxu0 0.0
    %3561 = vmatpush1.msra.mxu0 0.0
    %3562 = vmatprep.subr.mxu0 0.0
    %3563 = vmatpush1.msra.mxu0 0.0
    %3564 = vmatprep.subr.mxu0 0.0
    %3565 = vmatpush1.msra.mxu0 0.0
    %3566 = vmatprep.subr.mxu0 0.0
    %3567 = vmatpush1.msra.mxu0 0.0
    %3568 = vmatprep.subr.mxu0 0.0
    %3569 = vmatpush1.msra.mxu0 0.0
    %3570 = vmatprep.subr.mxu0 0.0
    %3571 = vmatpush1.msra.mxu0 0.0
    %3572 = vmatprep.subr.mxu0 0.0
    %3573 = vmatpush1.msra.mxu0 0.0
    %3574 = vmatprep.subr.mxu0 0.0
    %3575 = vmatpush1.msra.mxu0 0.0
    %3576 = vmatprep.subr.mxu0 0.0
    %3577 = vmatpush1.msra.mxu0 0.0
    %3578 = vmatprep.subr.mxu0 0.0
    %3579 = vmatpush1.msra.mxu0 0.0
    %3580 = vmatprep.subr.mxu0 0.0
    %3581 = vmatpush1.msra.mxu0 0.0
    %3582 = vmatprep.subr.mxu0 0.0
    %3583 = vmatpush1.msra.mxu0 0.0
    %3584 = vmatprep.subr.mxu0 0.0
    %3585 = vmatpush1.msra.mxu0 0.0
    %3586 = vmatprep.subr.mxu0 0.0
    %3587 = vmatpush1.msra.mxu0 0.0
    %3588 = vmatprep.subr.mxu0 0.0
    %3589 = vmatpush1.msra.mxu0 0.0
    %3590 = vmatprep.subr.mxu0 0.0
    %3591 = vmatpush1.msra.mxu0 0.0
    %3592 = vmatprep.subr.mxu0 0.0
    %3593 = vmatpush1.msra.mxu0 0.0
    %3594 = vmatprep.subr.mxu0 0.0
    %3595 = vmatpush1.msra.mxu0 0.0
    %3596 = vmatprep.subr.mxu0 0.0
    %3597 = vmatpush1.msra.mxu0 0.0
    %3598 = vmatprep.subr.mxu0 0.0
    %3599 = vmatpush1.msra.mxu0 0.0
    %3600 = vmatprep.subr.mxu0 0.0
    %3601 = vmatpush1.msra.mxu0 0.0
    %3602 = vmatprep.subr.mxu0 0.0
    %3603 = vmatpush1.msra.mxu0 0.0
    %3604 = vmatprep.subr.mxu0 0.0
    %3605 = vmatpush1.msra.mxu0 0.0
    %3606 = vmatprep.mubr.f32.mxu0 0.0
    %3607 = vmatmul.mubr.f32.gmra.mrb[0].mxu0 %v3453
    %v3608 = vpop.f32.mrb[0].mxu0
    %v3609 = vadd.f32 %v3451, %v3608
    %v3610 = vpop.f32.mrb[0].mxu0
    %3611 = vmatprep.mubr.f32.mxu0 0.0
    %3612 = vmatmul.mubr.f32.gmra.mrb[0].mxu0 %v3456
    %v3613 = vpop.f32.mrb[0].mxu0
    %v3614 = vadd.f32 %v3451, %v3613
    %v3615 = vpop.f32.mrb[0].mxu0
    %3616 = vmatprep.mubr.f32.mxu0 0.0
    %3617 = vmatmul.mubr.f32.gmra.mrb[0].mxu0 %v3459
    %v3618 = vpop.f32.mrb[0].mxu0
    %v3619 = vadd.f32 %v3451, %v3618
    %v3620 = vpop.f32.mrb[0].mxu0
    %3621 = vmatprep.mubr.f32.mxu0 0.0
    %3622 = vmatmul.mubr.f32.gmra.mrb[0].mxu0 %v3462
    %v3623 = vpop.f32.mrb[0].mxu0
    %v3624 = vadd.f32 %v3451, %v3623
    %v3625 = vpop.f32.mrb[0].mxu0
    %3626 = vmatprep.mubr.f32.mxu0 0.0
    %3627 = vmatmul.mubr.f32.gmra.mrb[0].mxu0 %v3465
    %v3628 = vpop.f32.mrb[0].mxu0
    %v3629 = vadd.f32 %v3451, %v3628
    %v3630 = vpop.f32.mrb[0].mxu0
    %3631 = vmatprep.mubr.f32.mxu0 0.0
    %3632 = vmatmul.mubr.f32.gmra.mrb[0].mxu0 %v3468
    %v3633 = vpop.f32.mrb[0].mxu0
    %v3634 = vadd.f32 %v3451, %v3633
    %v3635 = vpop.f32.mrb[0].mxu0
    %3636 = vmatprep.mubr.f32.mxu0 0.0
    %3637 = vmatmul.mubr.f32.gmra.mrb[0].mxu0 %v3471
    %v3638 = vpop.f32.mrb[0].mxu0
    %v3639 = vadd.f32 %v3451, %v3638
    %v3640 = vpop.f32.mrb[0].mxu0
    %3641 = vmatprep.mubr.f32.mxu0 0.0
    %3642 = vmatmul.mubr.f32.gmra.mrb[0].mxu0 %v3474
    %v3643 = vpop.f32.mrb[0].mxu0
    %v3644 = vadd.f32 %v3451, %v3643
    %v3645 = vpop.f32.mrb[0].mxu0
    %3646 = vmatprep.mubr.f32.mxu0 0.0
    %3647 = vmatmul.mubr.f32.gmra.mrb[0].mxu0 %v3477
    %v3648 = vpop.f32.mrb[0].mxu0
    %v3649 = vadd.f32 %v3451, %v3648
    %v3650 = vpop.f32.mrb[0].mxu0
    %3651 = vmatprep.mubr.f32.mxu0 0.0
    %3652 = vmatmul.mubr.f32.gmra.mrb[0].mxu0 %v3480
    %v3653 = vpop.f32.mrb[0].mxu0
    %v3654 = vadd.f32 %v3451, %v3653
    %v3655 = vpop.f32.mrb[0].mxu0
    %3656 = vmatprep.mubr.f32.mxu0 0.0
    %3657 = vmatmul.mubr.f32.gmra.mrb[0].mxu0 %v3483
    %v3658 = vpop.f32.mrb[0].mxu0
    %v3659 = vadd.f32 %v3451, %v3658
    %v3660 = vpop.f32.mrb[0].mxu0
    %3661 = vmatprep.mubr.f32.mxu0 0.0
    %3662 = vmatmul.mubr.f32.gmra.mrb[0].mxu0 %v3486
    %v3663 = vpop.f32.mrb[0].mxu0
    %v3664 = vadd.f32 %v3451, %v3663
    %v3665 = vpop.f32.mrb[0].mxu0
    %3666 = vmatprep.mubr.f32.mxu0 0.0
    %3667 = vmatmul.mubr.f32.gmra.mrb[0].mxu0 %v3489
    %v3668 = vpop.f32.mrb[0].mxu0
    %v3669 = vadd.f32 %v3451, %v3668
    %v3670 = vpop.f32.mrb[0].mxu0
    %3671 = vmatprep.mubr.f32.mxu0 0.0
    %3672 = vmatmul.mubr.f32.gmra.mrb[0].mxu0 %v3492
    %v3673 = vpop.f32.mrb[0].mxu0
    %v3674 = vadd.f32 %v3451, %v3673
    %v3675 = vpop.f32.mrb[0].mxu0
    %3676 = vmatprep.mubr.f32.mxu0 0.0
    %3677 = vmatmul.mubr.f32.gmra.mrb[0].mxu0 %v3495
    %v3678 = vpop.f32.mrb[0].mxu0
    %v3679 = vadd.f32 %v3451, %v3678
    %v3680 = vpop.f32.mrb[0].mxu0
    %3681 = vmatprep.mubr.f32.mxu0 0.0
    %3682 = vmatmul.mubr.f32.gmra.mrb[0].mxu0 %v3498
    %v3683 = vpop.f32.mrb[0].mxu0
    %v3684 = vadd.f32 %v3451, %v3683
    %v3685 = vpop.f32.mrb[0].mxu0
    %3686 = vmatprep.mubr.f32.mxu0 0.0
    %3687 = vmatmul.mubr.f32.gmra.mrb[0].mxu0 %v3501
    %v3688 = vpop.f32.mrb[0].mxu0
    %v3689 = vadd.f32 %v3451, %v3688
    %v3690 = vpop.f32.mrb[0].mxu0
    %3691 = vmatprep.mubr.f32.mxu0 0.0
    %3692 = vmatmul.mubr.f32.gmra.mrb[0].mxu0 %v3504
    %v3693 = vpop.f32.mrb[0].mxu0
    %v3694 = vadd.f32 %v3451, %v3693
    %v3695 = vpop.f32.mrb[0].mxu0
    %3696 = vmatprep.mubr.f32.mxu0 0.0
    %3697 = vmatmul.mubr.f32.gmra.mrb[0].mxu0 %v3507
    %v3698 = vpop.f32.mrb[0].mxu0
    %v3699 = vadd.f32 %v3451, %v3698
    %v3700 = vpop.f32.mrb[0].mxu0
    %3701 = vmatprep.mubr.f32.mxu0 0.0
    %3702 = vmatmul.mubr.f32.gmra.mrb[0].mxu0 %v3510
    %v3703 = vpop.f32.mrb[0].mxu0
    %v3704 = vadd.f32 %v3451, %v3703
    %v3705 = vpop.f32.mrb[0].mxu0
    %3706 = vmatprep.mubr.f32.mxu0 0.0
    %3707 = vmatmul.mubr.f32.gmra.mrb[0].mxu0 %v3513
    %v3708 = vpop.f32.mrb[0].mxu0
    %v3709 = vadd.f32 %v3451, %v3708
    %v3710 = vpop.f32.mrb[0].mxu0
    %3711 = vmatprep.mubr.f32.mxu0 0.0
    %3712 = vmatmul.mubr.f32.gmra.mrb[0].mxu0 %v3516
    %v3713 = vpop.f32.mrb[0].mxu0
    %v3714 = vadd.f32 %v3451, %v3713
    %v3715 = vpop.f32.mrb[0].mxu0
    %3716 = vmatprep.mubr.f32.mxu0 0.0
    %3717 = vmatmul.mubr.f32.gmra.mrb[0].mxu0 %v3519
    %v3718 = vpop.f32.mrb[0].mxu0
    %v3719 = vadd.f32 %v3451, %v3718
    %v3720 = vpop.f32.mrb[0].mxu0
    %3721 = vmatprep.mubr.f32.mxu0 0.0
    %3722 = vmatmul.mubr.f32.gmra.mrb[0].mxu0 %v3522
    %v3723 = vpop.f32.mrb[0].mxu0
    %v3724 = vadd.f32 %v3451, %v3723
    %v3725 = vpop.f32.mrb[0].mxu0
    %3726 = vmatprep.mubr.f32.mxu0 0.0
    %3727 = vmatmul.mubr.f32.gmra.mrb[0].mxu0 %v3525
    %v3728 = vpop.f32.mrb[0].mxu0
    %v3729 = vadd.f32 %v3451, %v3728
    %v3730 = vpop.f32.mrb[0].mxu0
    %3731 = vmatprep.mubr.f32.mxu0 0.0
    %3732 = vmatmul.mubr.f32.gmra.mrb[0].mxu0 %v3528
    %v3733 = vpop.f32.mrb[0].mxu0
    %v3734 = vadd.f32 %v3451, %v3733
    %v3735 = vpop.f32.mrb[0].mxu0
    %3736 = vmatprep.mubr.f32.mxu0 0.0
    %3737 = vmatmul.mubr.f32.gmra.mrb[0].mxu0 %v3531
    %v3738 = vpop.f32.mrb[0].mxu0
    %v3739 = vadd.f32 %v3451, %v3738
    %v3740 = vpop.f32.mrb[0].mxu0
    %3741 = vmatprep.mubr.f32.mxu0 0.0
    %3742 = vmatmul.mubr.f32.gmra.mrb[0].mxu0 %v3534
    %v3743 = vpop.f32.mrb[0].mxu0
    %v3744 = vadd.f32 %v3451, %v3743
    %v3745 = vpop.f32.mrb[0].mxu0
    %3746 = vmatprep.mubr.f32.mxu0 0.0
    %3747 = vmatmul.mubr.f32.gmra.mrb[0].mxu0 %v3537
    %v3748 = vpop.f32.mrb[0].mxu0
    %v3749 = vadd.f32 %v3451, %v3748
    %v3750 = vpop.f32.mrb[0].mxu0
    %3751 = vmatprep.mubr.f32.mxu0 0.0
    %3752 = vmatmul.mubr.f32.gmra.mrb[0].mxu0 %v3540
    %v3753 = vpop.f32.mrb[0].mxu0
    %v3754 = vadd.f32 %v3451, %v3753
    %v3755 = vpop.f32.mrb[0].mxu0
    %3756 = vdwg.mxu0
    %v3757 = vsel %vm972, %v3609, 0.0
    %v3758 = vsel %vm972, %v3614, 0.0
    %v3759 = vadd.f32 %v3757, %v3758
    %v3760 = vsel %vm972, %v3619, 0.0
    %v3761 = vadd.f32 %v3759, %v3760
    %v3762 = vsel %vm972, %v3624, 0.0
    %v3763 = vadd.f32 %v3761, %v3762
    %v3764 = vsel %vm972, %v3629, 0.0
    %v3765 = vadd.f32 %v3763, %v3764
    %v3766 = vsel %vm972, %v3634, 0.0
    %v3767 = vadd.f32 %v3765, %v3766
    %v3768 = vsel %vm972, %v3639, 0.0
    %v3769 = vadd.f32 %v3767, %v3768
    %v3770 = vsel %vm972, %v3644, 0.0
    %v3771 = vadd.f32 %v3769, %v3770
    %v3772 = vsel %vm972, %v3649, 0.0
    %v3773 = vadd.f32 %v3771, %v3772
    %v3774 = vsel %vm972, %v3654, 0.0
    %v3775 = vadd.f32 %v3773, %v3774
    %v3776 = vsel %vm972, %v3659, 0.0
    %v3777 = vadd.f32 %v3775, %v3776
    %v3778 = vsel %vm972, %v3664, 0.0
    %v3779 = vadd.f32 %v3777, %v3778
    %v3780 = vsel %vm972, %v3669, 0.0
    %v3781 = vadd.f32 %v3779, %v3780
    %v3782 = vsel %vm972, %v3674, 0.0
    %v3783 = vadd.f32 %v3781, %v3782
    %v3784 = vsel %vm972, %v3679, 0.0
    %v3785 = vadd.f32 %v3783, %v3784
    %v3786 = vsel %vm972, %v3684, 0.0
    %v3787 = vadd.f32 %v3785, %v3786
    %v3788 = vsel %vm972, %v3689, 0.0
    %v3789 = vadd.f32 %v3787, %v3788
    %v3790 = vsel %vm972, %v3694, 0.0
    %v3791 = vadd.f32 %v3789, %v3790
    %v3792 = vsel %vm972, %v3699, 0.0
    %v3793 = vadd.f32 %v3791, %v3792
    %v3794 = vsel %vm972, %v3704, 0.0
    %v3795 = vadd.f32 %v3793, %v3794
    %v3796 = vsel %vm972, %v3709, 0.0
    %v3797 = vadd.f32 %v3795, %v3796
    %v3798 = vsel %vm972, %v3714, 0.0
    %v3799 = vadd.f32 %v3797, %v3798
    %v3800 = vsel %vm972, %v3719, 0.0
    %v3801 = vadd.f32 %v3799, %v3800
    %v3802 = vsel %vm972, %v3724, 0.0
    %v3803 = vadd.f32 %v3801, %v3802
    %v3804 = vsel %vm972, %v3729, 0.0
    %v3805 = vadd.f32 %v3803, %v3804
    %v3806 = vsel %vm972, %v3734, 0.0
    %v3807 = vadd.f32 %v3805, %v3806
    %v3808 = vsel %vm972, %v3739, 0.0
    %v3809 = vadd.f32 %v3807, %v3808
    %v3810 = vsel %vm972, %v3744, 0.0
    %v3811 = vadd.f32 %v3809, %v3810
    %v3812 = vsel %vm972, %v3749, 0.0
    %v3813 = vadd.f32 %v3811, %v3812
    %v3814 = vsel %vm972, %v3754, 0.0
    %v3815 = vadd.f32 %v3813, %v3814
    %v3816 = vrot.slane %v3815, 4
    %v3817 = vadd.f32 %v3815, %v3816
    %v3818 = vrot.slane %v3817, 2
    %v3819 = vadd.f32 %v3817, %v3818
    %v3820 = vrot.slane %v3819, 1
    %v3821 = vadd.f32 %v3819, %v3820
    %v3822 = vmul.f32 %v3821, %v1038
    %v3823 = vsub.f32 %v3609, %v3822
    %v3824 = vsub.f32 %v3614, %v3822
    %v3825 = vsub.f32 %v3619, %v3822
    %v3826 = vsub.f32 %v3624, %v3822
    %v3827 = vsub.f32 %v3629, %v3822
    %v3828 = vsub.f32 %v3634, %v3822
    %v3829 = vsub.f32 %v3639, %v3822
    %v3830 = vsub.f32 %v3644, %v3822
    %v3831 = vsub.f32 %v3649, %v3822
    %v3832 = vsub.f32 %v3654, %v3822
    %v3833 = vsub.f32 %v3659, %v3822
    %v3834 = vsub.f32 %v3664, %v3822
    %v3835 = vsub.f32 %v3669, %v3822
    %v3836 = vsub.f32 %v3674, %v3822
    %v3837 = vsub.f32 %v3679, %v3822
    %v3838 = vsub.f32 %v3684, %v3822
    %v3839 = vsub.f32 %v3689, %v3822
    %v3840 = vsub.f32 %v3694, %v3822
    %v3841 = vsub.f32 %v3699, %v3822
    %v3842 = vsub.f32 %v3704, %v3822
    %v3843 = vsub.f32 %v3709, %v3822
    %v3844 = vsub.f32 %v3714, %v3822
    %v3845 = vsub.f32 %v3719, %v3822
    %v3846 = vsub.f32 %v3724, %v3822
    %v3847 = vsub.f32 %v3729, %v3822
    %v3848 = vsub.f32 %v3734, %v3822
    %v3849 = vsub.f32 %v3739, %v3822
    %v3850 = vsub.f32 %v3744, %v3822
    %v3851 = vsub.f32 %v3749, %v3822
    %v3852 = vsub.f32 %v3754, %v3822
    %v3853 = vmul.f32 %v3823, %v3823
    %v3854 = vmul.f32 %v3824, %v3824
    %v3855 = vmul.f32 %v3825, %v3825
    %v3856 = vmul.f32 %v3826, %v3826
    %v3857 = vmul.f32 %v3827, %v3827
    %v3858 = vmul.f32 %v3828, %v3828
    %v3859 = vmul.f32 %v3829, %v3829
    %v3860 = vmul.f32 %v3830, %v3830
    %v3861 = vmul.f32 %v3831, %v3831
    %v3862 = vmul.f32 %v3832, %v3832
    %v3863 = vmul.f32 %v3833, %v3833
    %v3864 = vmul.f32 %v3834, %v3834
    %v3865 = vmul.f32 %v3835, %v3835
    %v3866 = vmul.f32 %v3836, %v3836
    %v3867 = vmul.f32 %v3837, %v3837
    %v3868 = vmul.f32 %v3838, %v3838
    %v3869 = vmul.f32 %v3839, %v3839
    %v3870 = vmul.f32 %v3840, %v3840
    %v3871 = vmul.f32 %v3841, %v3841
    %v3872 = vmul.f32 %v3842, %v3842
    %v3873 = vmul.f32 %v3843, %v3843
    %v3874 = vmul.f32 %v3844, %v3844
    %v3875 = vmul.f32 %v3845, %v3845
    %v3876 = vmul.f32 %v3846, %v3846
    %v3877 = vmul.f32 %v3847, %v3847
    %v3878 = vmul.f32 %v3848, %v3848
    %v3879 = vmul.f32 %v3849, %v3849
    %v3880 = vmul.f32 %v3850, %v3850
    %v3881 = vmul.f32 %v3851, %v3851
    %v3882 = vmul.f32 %v3852, %v3852
    %v3883 = vsel %vm972, %v3853, 0.0
    %v3884 = vsel %vm972, %v3854, 0.0
    %v3885 = vadd.f32 %v3883, %v3884
    %v3886 = vsel %vm972, %v3855, 0.0
    %v3887 = vadd.f32 %v3885, %v3886
    %v3888 = vsel %vm972, %v3856, 0.0
    %v3889 = vadd.f32 %v3887, %v3888
    %v3890 = vsel %vm972, %v3857, 0.0
    %v3891 = vadd.f32 %v3889, %v3890
    %v3892 = vsel %vm972, %v3858, 0.0
    %v3893 = vadd.f32 %v3891, %v3892
    %v3894 = vsel %vm972, %v3859, 0.0
    %v3895 = vadd.f32 %v3893, %v3894
    %v3896 = vsel %vm972, %v3860, 0.0
    %v3897 = vadd.f32 %v3895, %v3896
    %v3898 = vsel %vm972, %v3861, 0.0
    %v3899 = vadd.f32 %v3897, %v3898
    %v3900 = vsel %vm972, %v3862, 0.0
    %v3901 = vadd.f32 %v3899, %v3900
    %v3902 = vsel %vm972, %v3863, 0.0
    %v3903 = vadd.f32 %v3901, %v3902
    %v3904 = vsel %vm972, %v3864, 0.0
    %v3905 = vadd.f32 %v3903, %v3904
    %v3906 = vsel %vm972, %v3865, 0.0
    %v3907 = vadd.f32 %v3905, %v3906
    %v3908 = vsel %vm972, %v3866, 0.0
    %v3909 = vadd.f32 %v3907, %v3908
    %v3910 = vsel %vm972, %v3867, 0.0
    %v3911 = vadd.f32 %v3909, %v3910
    %v3912 = vsel %vm972, %v3868, 0.0
    %v3913 = vadd.f32 %v3911, %v3912
    %v3914 = vsel %vm972, %v3869, 0.0
    %v3915 = vadd.f32 %v3913, %v3914
    %v3916 = vsel %vm972, %v3870, 0.0
    %v3917 = vadd.f32 %v3915, %v3916
    %v3918 = vsel %vm972, %v3871, 0.0
    %v3919 = vadd.f32 %v3917, %v3918
    %v3920 = vsel %vm972, %v3872, 0.0
    %v3921 = vadd.f32 %v3919, %v3920
    %v3922 = vsel %vm972, %v3873, 0.0
    %v3923 = vadd.f32 %v3921, %v3922
    %v3924 = vsel %vm972, %v3874, 0.0
    %v3925 = vadd.f32 %v3923, %v3924
    %v3926 = vsel %vm972, %v3875, 0.0
    %v3927 = vadd.f32 %v3925, %v3926
    %v3928 = vsel %vm972, %v3876, 0.0
    %v3929 = vadd.f32 %v3927, %v3928
    %v3930 = vsel %vm972, %v3877, 0.0
    %v3931 = vadd.f32 %v3929, %v3930
    %v3932 = vsel %vm972, %v3878, 0.0
    %v3933 = vadd.f32 %v3931, %v3932
    %v3934 = vsel %vm972, %v3879, 0.0
    %v3935 = vadd.f32 %v3933, %v3934
    %v3936 = vsel %vm972, %v3880, 0.0
    %v3937 = vadd.f32 %v3935, %v3936
    %v3938 = vsel %vm972, %v3881, 0.0
    %v3939 = vadd.f32 %v3937, %v3938
    %v3940 = vsel %vm972, %v3882, 0.0
    %v3941 = vadd.f32 %v3939, %v3940
    %v3942 = vrot.slane %v3941, 4
    %v3943 = vadd.f32 %v3941, %v3942
    %v3944 = vrot.slane %v3943, 2
    %v3945 = vadd.f32 %v3943, %v3944
    %v3946 = vrot.slane %v3945, 1
    %v3947 = vadd.f32 %v3945, %v3946
    %v3948 = vmul.f32 %v3947, %v1038
    %v3949 = vadd.f32 %v3948, 1e-05
    %v3950 = vrsqrt.pop %v3949
    %v3951 = vmul.f32 %v3823, %v3950
    %v3952 = vmul.f32 %v3824, %v3950
    %v3953 = vmul.f32 %v3825, %v3950
    %v3954 = vmul.f32 %v3826, %v3950
    %v3955 = vmul.f32 %v3827, %v3950
    %v3956 = vmul.f32 %v3828, %v3950
    %v3957 = vmul.f32 %v3829, %v3950
    %v3958 = vmul.f32 %v3830, %v3950
    %v3959 = vmul.f32 %v3831, %v3950
    %v3960 = vmul.f32 %v3832, %v3950
    %v3961 = vmul.f32 %v3833, %v3950
    %v3962 = vmul.f32 %v3834, %v3950
    %v3963 = vmul.f32 %v3835, %v3950
    %v3964 = vmul.f32 %v3836, %v3950
    %v3965 = vmul.f32 %v3837, %v3950
    %v3966 = vmul.f32 %v3838, %v3950
    %v3967 = vmul.f32 %v3839, %v3950
    %v3968 = vmul.f32 %v3840, %v3950
    %v3969 = vmul.f32 %v3841, %v3950
    %v3970 = vmul.f32 %v3842, %v3950
    %v3971 = vmul.f32 %v3843, %v3950
    %v3972 = vmul.f32 %v3844, %v3950
    %v3973 = vmul.f32 %v3845, %v3950
    %v3974 = vmul.f32 %v3846, %v3950
    %v3975 = vmul.f32 %v3847, %v3950
    %v3976 = vmul.f32 %v3848, %v3950
    %v3977 = vmul.f32 %v3849, %v3950
    %v3978 = vmul.f32 %v3850, %v3950
    %v3979 = vmul.f32 %v3851, %v3950
    %v3980 = vmul.f32 %v3852, %v3950
    %v3981 = vlaneseq
    %v3982 = vshrl.u32 %v3981, 7
    %v3983 = vsub.s32 4, %v3982
    %v3984 = vrot.slane %v2447, %v3983
    %v3985 = vmul.f32 %v3951, %v3984
    %v3986 = vmul.f32 %v3952, %v3984
    %v3987 = vmul.f32 %v3953, %v3984
    %v3988 = vmul.f32 %v3954, %v3984
    %v3989 = vmul.f32 %v3955, %v3984
    %v3990 = vmul.f32 %v3956, %v3984
    %v3991 = vmul.f32 %v3957, %v3984
    %v3992 = vmul.f32 %v3958, %v3984
    %v3993 = vmul.f32 %v3959, %v3984
    %v3994 = vmul.f32 %v3960, %v3984
    %v3995 = vmul.f32 %v3961, %v3984
    %v3996 = vmul.f32 %v3962, %v3984
    %v3997 = vmul.f32 %v3963, %v3984
    %v3998 = vmul.f32 %v3964, %v3984
    %v3999 = vmul.f32 %v3965, %v3984
    %v4000 = vmul.f32 %v3966, %v3984
    %v4001 = vmul.f32 %v3967, %v3984
    %v4002 = vmul.f32 %v3968, %v3984
    %v4003 = vmul.f32 %v3969, %v3984
    %v4004 = vmul.f32 %v3970, %v3984
    %v4005 = vmul.f32 %v3971, %v3984
    %v4006 = vmul.f32 %v3972, %v3984
    %v4007 = vmul.f32 %v3973, %v3984
    %v4008 = vmul.f32 %v3974, %v3984
    %v4009 = vmul.f32 %v3975, %v3984
    %v4010 = vmul.f32 %v3976, %v3984
    %v4011 = vmul.f32 %v3977, %v3984
    %v4012 = vmul.f32 %v3978, %v3984
    %v4013 = vmul.f32 %v3979, %v3984
    %v4014 = vmul.f32 %v3980, %v3984
    %v4015 = vlaneseq
    %v4016 = vshrl.u32 %v4015, 7
    %v4017 = vsub.s32 5, %v4016
    %v4018 = vrot.slane %v2447, %v4017
    %v4019 = vadd.f32 %v3985, %v4018
    %v4020 = vadd.f32 %v3986, %v4018
    %v4021 = vadd.f32 %v3987, %v4018
    %v4022 = vadd.f32 %v3988, %v4018
    %v4023 = vadd.f32 %v3989, %v4018
    %v4024 = vadd.f32 %v3990, %v4018
    %v4025 = vadd.f32 %v3991, %v4018
    %v4026 = vadd.f32 %v3992, %v4018
    %v4027 = vadd.f32 %v3993, %v4018
    %v4028 = vadd.f32 %v3994, %v4018
    %v4029 = vadd.f32 %v3995, %v4018
    %v4030 = vadd.f32 %v3996, %v4018
    %v4031 = vadd.f32 %v3997, %v4018
    %v4032 = vadd.f32 %v3998, %v4018
    %v4033 = vadd.f32 %v3999, %v4018
    %v4034 = vadd.f32 %v4000, %v4018
    %v4035 = vadd.f32 %v4001, %v4018
    %v4036 = vadd.f32 %v4002, %v4018
    %v4037 = vadd.f32 %v4003, %v4018
    %v4038 = vadd.f32 %v4004, %v4018
    %v4039 = vadd.f32 %v4005, %v4018
    %v4040 = vadd.f32 %v4006, %v4018
    %v4041 = vadd.f32 %v4007, %v4018
    %v4042 = vadd.f32 %v4008, %v4018
    %v4043 = vadd.f32 %v4009, %v4018
    %v4044 = vadd.f32 %v4010, %v4018
    %v4045 = vadd.f32 %v4011, %v4018
    %v4046 = vadd.f32 %v4012, %v4018
    %v4047 = vadd.f32 %v4013, %v4018
    %v4048 = vadd.f32 %v4014, %v4018
    %v4049 = vmax.f32 %v4019, 0.0
    %v4050 = vmax.f32 %v4020, 0.0
    %v4051 = vmax.f32 %v4021, 0.0
    %v4052 = vmax.f32 %v4022, 0.0
    %v4053 = vmax.f32 %v4023, 0.0
    %v4054 = vmax.f32 %v4024, 0.0
    %v4055 = vmax.f32 %v4025, 0.0
    %v4056 = vmax.f32 %v4026, 0.0
    %v4057 = vmax.f32 %v4027, 0.0
    %v4058 = vmax.f32 %v4028, 0.0
    %v4059 = vmax.f32 %v4029, 0.0
    %v4060 = vmax.f32 %v4030, 0.0
    %v4061 = vmax.f32 %v4031, 0.0
    %v4062 = vmax.f32 %v4032, 0.0
    %v4063 = vmax.f32 %v4033, 0.0
    %v4064 = vmax.f32 %v4034, 0.0
    %v4065 = vmax.f32 %v4035, 0.0
    %v4066 = vmax.f32 %v4036, 0.0
    %v4067 = vmax.f32 %v4037, 0.0
    %v4068 = vmax.f32 %v4038, 0.0
    %v4069 = vmax.f32 %v4039, 0.0
    %v4070 = vmax.f32 %v4040, 0.0
    %v4071 = vmax.f32 %v4041, 0.0
    %v4072 = vmax.f32 %v4042, 0.0
    %v4073 = vmax.f32 %v4043, 0.0
    %v4074 = vmax.f32 %v4044, 0.0
    %v4075 = vmax.f32 %v4045, 0.0
    %v4076 = vmax.f32 %v4046, 0.0
    %v4077 = vmax.f32 %v4047, 0.0
    %v4078 = vmax.f32 %v4048, 0.0
    %v4079 = vsel %vm972, %v4049, 0.0
    %v4080 = vsel %vm972, %v4050, 0.0
    %v4081 = vadd.f32 %v4079, %v4080
    %v4082 = vsel %vm972, %v4051, 0.0
    %v4083 = vadd.f32 %v4081, %v4082
    %v4084 = vsel %vm972, %v4052, 0.0
    %v4085 = vadd.f32 %v4083, %v4084
    %v4086 = vsel %vm972, %v4053, 0.0
    %v4087 = vadd.f32 %v4085, %v4086
    %v4088 = vsel %vm972, %v4054, 0.0
    %v4089 = vadd.f32 %v4087, %v4088
    %v4090 = vsel %vm972, %v4055, 0.0
    %v4091 = vadd.f32 %v4089, %v4090
    %v4092 = vsel %vm972, %v4056, 0.0
    %v4093 = vadd.f32 %v4091, %v4092
    %v4094 = vsel %vm972, %v4057, 0.0
    %v4095 = vadd.f32 %v4093, %v4094
    %v4096 = vsel %vm972, %v4058, 0.0
    %v4097 = vadd.f32 %v4095, %v4096
    %v4098 = vsel %vm972, %v4059, 0.0
    %v4099 = vadd.f32 %v4097, %v4098
    %v4100 = vsel %vm972, %v4060, 0.0
    %v4101 = vadd.f32 %v4099, %v4100
    %v4102 = vsel %vm972, %v4061, 0.0
    %v4103 = vadd.f32 %v4101, %v4102
    %v4104 = vsel %vm972, %v4062, 0.0
    %v4105 = vadd.f32 %v4103, %v4104
    %v4106 = vsel %vm972, %v4063, 0.0
    %v4107 = vadd.f32 %v4105, %v4106
    %v4108 = vsel %vm972, %v4064, 0.0
    %v4109 = vadd.f32 %v4107, %v4108
    %v4110 = vsel %vm972, %v4065, 0.0
    %v4111 = vadd.f32 %v4109, %v4110
    %v4112 = vsel %vm972, %v4066, 0.0
    %v4113 = vadd.f32 %v4111, %v4112
    %v4114 = vsel %vm972, %v4067, 0.0
    %v4115 = vadd.f32 %v4113, %v4114
    %v4116 = vsel %vm972, %v4068, 0.0
    %v4117 = vadd.f32 %v4115, %v4116
    %v4118 = vsel %vm972, %v4069, 0.0
    %v4119 = vadd.f32 %v4117, %v4118
    %v4120 = vsel %vm972, %v4070, 0.0
    %v4121 = vadd.f32 %v4119, %v4120
    %v4122 = vsel %vm972, %v4071, 0.0
    %v4123 = vadd.f32 %v4121, %v4122
    %v4124 = vsel %vm972, %v4072, 0.0
    %v4125 = vadd.f32 %v4123, %v4124
    %v4126 = vsel %vm972, %v4073, 0.0
    %v4127 = vadd.f32 %v4125, %v4126
    %v4128 = vsel %vm972, %v4074, 0.0
    %v4129 = vadd.f32 %v4127, %v4128
    %v4130 = vsel %vm972, %v4075, 0.0
    %v4131 = vadd.f32 %v4129, %v4130
    %v4132 = vsel %vm972, %v4076, 0.0
    %v4133 = vadd.f32 %v4131, %v4132
    %v4134 = vsel %vm972, %v4077, 0.0
    %v4135 = vadd.f32 %v4133, %v4134
    %v4136 = vsel %vm972, %v4078, 0.0
    %v4137 = vadd.f32 %v4135, %v4136
    %v4138 = vrot.slane %v4137, 4
    %v4139 = vadd.f32 %v4137, %v4138
    %v4140 = vrot.slane %v4139, 2
    %v4141 = vadd.f32 %v4139, %v4140
    %v4142 = vrot.slane %v4141, 1
    %v4143 = vadd.f32 %v4141, %v4142
    %v4144 = vmul.f32 %v4143, %v1038
    %v4145 = vsub.f32 %v4049, %v4144
    %v4146 = vsub.f32 %v4050, %v4144
    %v4147 = vsub.f32 %v4051, %v4144
    %v4148 = vsub.f32 %v4052, %v4144
    %v4149 = vsub.f32 %v4053, %v4144
    %v4150 = vsub.f32 %v4054, %v4144
    %v4151 = vsub.f32 %v4055, %v4144
    %v4152 = vsub.f32 %v4056, %v4144
    %v4153 = vsub.f32 %v4057, %v4144
    %v4154 = vsub.f32 %v4058, %v4144
    %v4155 = vsub.f32 %v4059, %v4144
    %v4156 = vsub.f32 %v4060, %v4144
    %v4157 = vsub.f32 %v4061, %v4144
    %v4158 = vsub.f32 %v4062, %v4144
    %v4159 = vsub.f32 %v4063, %v4144
    %v4160 = vsub.f32 %v4064, %v4144
    %v4161 = vsub.f32 %v4065, %v4144
    %v4162 = vsub.f32 %v4066, %v4144
    %v4163 = vsub.f32 %v4067, %v4144
    %v4164 = vsub.f32 %v4068, %v4144
    %v4165 = vsub.f32 %v4069, %v4144
    %v4166 = vsub.f32 %v4070, %v4144
    %v4167 = vsub.f32 %v4071, %v4144
    %v4168 = vsub.f32 %v4072, %v4144
    %v4169 = vsub.f32 %v4073, %v4144
    %v4170 = vsub.f32 %v4074, %v4144
    %v4171 = vsub.f32 %v4075, %v4144
    %v4172 = vsub.f32 %v4076, %v4144
    %v4173 = vsub.f32 %v4077, %v4144
    %v4174 = vsub.f32 %v4078, %v4144
    %v4175 = vmul.f32 %v4145, %v4145
    %v4176 = vmul.f32 %v4146, %v4146
    %v4177 = vmul.f32 %v4147, %v4147
    %v4178 = vmul.f32 %v4148, %v4148
    %v4179 = vmul.f32 %v4149, %v4149
    %v4180 = vmul.f32 %v4150, %v4150
    %v4181 = vmul.f32 %v4151, %v4151
    %v4182 = vmul.f32 %v4152, %v4152
    %v4183 = vmul.f32 %v4153, %v4153
    %v4184 = vmul.f32 %v4154, %v4154
    %v4185 = vmul.f32 %v4155, %v4155
    %v4186 = vmul.f32 %v4156, %v4156
    %v4187 = vmul.f32 %v4157, %v4157
    %v4188 = vmul.f32 %v4158, %v4158
    %v4189 = vmul.f32 %v4159, %v4159
    %v4190 = vmul.f32 %v4160, %v4160
    %v4191 = vmul.f32 %v4161, %v4161
    %v4192 = vmul.f32 %v4162, %v4162
    %v4193 = vmul.f32 %v4163, %v4163
    %v4194 = vmul.f32 %v4164, %v4164
    %v4195 = vmul.f32 %v4165, %v4165
    %v4196 = vmul.f32 %v4166, %v4166
    %v4197 = vmul.f32 %v4167, %v4167
    %v4198 = vmul.f32 %v4168, %v4168
    %v4199 = vmul.f32 %v4169, %v4169
    %v4200 = vmul.f32 %v4170, %v4170
    %v4201 = vmul.f32 %v4171, %v4171
    %v4202 = vmul.f32 %v4172, %v4172
    %v4203 = vmul.f32 %v4173, %v4173
    %v4204 = vmul.f32 %v4174, %v4174
    %v4205 = vsel %vm972, %v4175, 0.0
    %v4206 = vsel %vm972, %v4176, 0.0
    %v4207 = vadd.f32 %v4205, %v4206
    %v4208 = vsel %vm972, %v4177, 0.0
    %v4209 = vadd.f32 %v4207, %v4208
    %v4210 = vsel %vm972, %v4178, 0.0
    %v4211 = vadd.f32 %v4209, %v4210
    %v4212 = vsel %vm972, %v4179, 0.0
    %v4213 = vadd.f32 %v4211, %v4212
    %v4214 = vsel %vm972, %v4180, 0.0
    %v4215 = vadd.f32 %v4213, %v4214
    %v4216 = vsel %vm972, %v4181, 0.0
    %v4217 = vadd.f32 %v4215, %v4216
    %v4218 = vsel %vm972, %v4182, 0.0
    %v4219 = vadd.f32 %v4217, %v4218
    %v4220 = vsel %vm972, %v4183, 0.0
    %v4221 = vadd.f32 %v4219, %v4220
    %v4222 = vsel %vm972, %v4184, 0.0
    %v4223 = vadd.f32 %v4221, %v4222
    %v4224 = vsel %vm972, %v4185, 0.0
    %v4225 = vadd.f32 %v4223, %v4224
    %v4226 = vsel %vm972, %v4186, 0.0
    %v4227 = vadd.f32 %v4225, %v4226
    %v4228 = vsel %vm972, %v4187, 0.0
    %v4229 = vadd.f32 %v4227, %v4228
    %v4230 = vsel %vm972, %v4188, 0.0
    %v4231 = vadd.f32 %v4229, %v4230
    %v4232 = vsel %vm972, %v4189, 0.0
    %v4233 = vadd.f32 %v4231, %v4232
    %v4234 = vsel %vm972, %v4190, 0.0
    %v4235 = vadd.f32 %v4233, %v4234
    %v4236 = vsel %vm972, %v4191, 0.0
    %v4237 = vadd.f32 %v4235, %v4236
    %v4238 = vsel %vm972, %v4192, 0.0
    %v4239 = vadd.f32 %v4237, %v4238
    %v4240 = vsel %vm972, %v4193, 0.0
    %v4241 = vadd.f32 %v4239, %v4240
    %v4242 = vsel %vm972, %v4194, 0.0
    %v4243 = vadd.f32 %v4241, %v4242
    %v4244 = vsel %vm972, %v4195, 0.0
    %v4245 = vadd.f32 %v4243, %v4244
    %v4246 = vsel %vm972, %v4196, 0.0
    %v4247 = vadd.f32 %v4245, %v4246
    %v4248 = vsel %vm972, %v4197, 0.0
    %v4249 = vadd.f32 %v4247, %v4248
    %v4250 = vsel %vm972, %v4198, 0.0
    %v4251 = vadd.f32 %v4249, %v4250
    %v4252 = vsel %vm972, %v4199, 0.0
    %v4253 = vadd.f32 %v4251, %v4252
    %v4254 = vsel %vm972, %v4200, 0.0
    %v4255 = vadd.f32 %v4253, %v4254
    %v4256 = vsel %vm972, %v4201, 0.0
    %v4257 = vadd.f32 %v4255, %v4256
    %v4258 = vsel %vm972, %v4202, 0.0
    %v4259 = vadd.f32 %v4257, %v4258
    %v4260 = vsel %vm972, %v4203, 0.0
    %v4261 = vadd.f32 %v4259, %v4260
    %v4262 = vsel %vm972, %v4204, 0.0
    %v4263 = vadd.f32 %v4261, %v4262
    %v4264 = vrot.slane %v4263, 4
    %v4265 = vadd.f32 %v4263, %v4264
    %v4266 = vrot.slane %v4265, 2
    %v4267 = vadd.f32 %v4265, %v4266
    %v4268 = vrot.slane %v4267, 1
    %v4269 = vadd.f32 %v4267, %v4268
    %v4270 = vmul.f32 %v4269, %v1038
    %v4271 = vadd.f32 %v4270, 1e-05
    %v4272 = vrsqrt.pop %v4271
    %v4273 = vmul.f32 %v4145, %v4272
    %v4274 = vmul.f32 %v4146, %v4272
    %v4275 = vmul.f32 %v4147, %v4272
    %v4276 = vmul.f32 %v4148, %v4272
    %v4277 = vmul.f32 %v4149, %v4272
    %v4278 = vmul.f32 %v4150, %v4272
    %v4279 = vmul.f32 %v4151, %v4272
    %v4280 = vmul.f32 %v4152, %v4272
    %v4281 = vmul.f32 %v4153, %v4272
    %v4282 = vmul.f32 %v4154, %v4272
    %v4283 = vmul.f32 %v4155, %v4272
    %v4284 = vmul.f32 %v4156, %v4272
    %v4285 = vmul.f32 %v4157, %v4272
    %v4286 = vmul.f32 %v4158, %v4272
    %v4287 = vmul.f32 %v4159, %v4272
    %v4288 = vmul.f32 %v4160, %v4272
    %v4289 = vmul.f32 %v4161, %v4272
    %v4290 = vmul.f32 %v4162, %v4272
    %v4291 = vmul.f32 %v4163, %v4272
    %v4292 = vmul.f32 %v4164, %v4272
    %v4293 = vmul.f32 %v4165, %v4272
    %v4294 = vmul.f32 %v4166, %v4272
    %v4295 = vmul.f32 %v4167, %v4272
    %v4296 = vmul.f32 %v4168, %v4272
    %v4297 = vmul.f32 %v4169, %v4272
    %v4298 = vmul.f32 %v4170, %v4272
    %v4299 = vmul.f32 %v4171, %v4272
    %v4300 = vmul.f32 %v4172, %v4272
    %v4301 = vmul.f32 %v4173, %v4272
    %v4302 = vmul.f32 %v4174, %v4272
    %v4303 = vlaneseq
    %v4304 = vshrl.u32 %v4303, 7
    %v4305 = vsub.s32 6, %v4304
    %v4306 = vrot.slane %v2447, %v4305
    %v4307 = vmul.f32 %v4273, %v4306
    %v4308 = vmul.f32 %v4274, %v4306
    %v4309 = vmul.f32 %v4275, %v4306
    %v4310 = vmul.f32 %v4276, %v4306
    %v4311 = vmul.f32 %v4277, %v4306
    %v4312 = vmul.f32 %v4278, %v4306
    %v4313 = vmul.f32 %v4279, %v4306
    %v4314 = vmul.f32 %v4280, %v4306
    %v4315 = vmul.f32 %v4281, %v4306
    %v4316 = vmul.f32 %v4282, %v4306
    %v4317 = vmul.f32 %v4283, %v4306
    %v4318 = vmul.f32 %v4284, %v4306
    %v4319 = vmul.f32 %v4285, %v4306
    %v4320 = vmul.f32 %v4286, %v4306
    %v4321 = vmul.f32 %v4287, %v4306
    %v4322 = vmul.f32 %v4288, %v4306
    %v4323 = vmul.f32 %v4289, %v4306
    %v4324 = vmul.f32 %v4290, %v4306
    %v4325 = vmul.f32 %v4291, %v4306
    %v4326 = vmul.f32 %v4292, %v4306
    %v4327 = vmul.f32 %v4293, %v4306
    %v4328 = vmul.f32 %v4294, %v4306
    %v4329 = vmul.f32 %v4295, %v4306
    %v4330 = vmul.f32 %v4296, %v4306
    %v4331 = vmul.f32 %v4297, %v4306
    %v4332 = vmul.f32 %v4298, %v4306
    %v4333 = vmul.f32 %v4299, %v4306
    %v4334 = vmul.f32 %v4300, %v4306
    %v4335 = vmul.f32 %v4301, %v4306
    %v4336 = vmul.f32 %v4302, %v4306
    %v4337 = vlaneseq
    %v4338 = vshrl.u32 %v4337, 7
    %v4339 = vsub.s32 7, %v4338
    %v4340 = vrot.slane %v2447, %v4339
    %v4341 = vadd.f32 %v4307, %v4340
    %v4342 = vadd.f32 %v4308, %v4340
    %v4343 = vadd.f32 %v4309, %v4340
    %v4344 = vadd.f32 %v4310, %v4340
    %v4345 = vadd.f32 %v4311, %v4340
    %v4346 = vadd.f32 %v4312, %v4340
    %v4347 = vadd.f32 %v4313, %v4340
    %v4348 = vadd.f32 %v4314, %v4340
    %v4349 = vadd.f32 %v4315, %v4340
    %v4350 = vadd.f32 %v4316, %v4340
    %v4351 = vadd.f32 %v4317, %v4340
    %v4352 = vadd.f32 %v4318, %v4340
    %v4353 = vadd.f32 %v4319, %v4340
    %v4354 = vadd.f32 %v4320, %v4340
    %v4355 = vadd.f32 %v4321, %v4340
    %v4356 = vadd.f32 %v4322, %v4340
    %v4357 = vadd.f32 %v4323, %v4340
    %v4358 = vadd.f32 %v4324, %v4340
    %v4359 = vadd.f32 %v4325, %v4340
    %v4360 = vadd.f32 %v4326, %v4340
    %v4361 = vadd.f32 %v4327, %v4340
    %v4362 = vadd.f32 %v4328, %v4340
    %v4363 = vadd.f32 %v4329, %v4340
    %v4364 = vadd.f32 %v4330, %v4340
    %v4365 = vadd.f32 %v4331, %v4340
    %v4366 = vadd.f32 %v4332, %v4340
    %v4367 = vadd.f32 %v4333, %v4340
    %v4368 = vadd.f32 %v4334, %v4340
    %v4369 = vadd.f32 %v4335, %v4340
    %v4370 = vadd.f32 %v4336, %v4340
    %v4371 = vmax.f32 %v4341, 0.0
    %v4372 = vmax.f32 %v4342, 0.0
    %v4373 = vmax.f32 %v4343, 0.0
    %v4374 = vmax.f32 %v4344, 0.0
    %v4375 = vmax.f32 %v4345, 0.0
    %v4376 = vmax.f32 %v4346, 0.0
    %v4377 = vmax.f32 %v4347, 0.0
    %v4378 = vmax.f32 %v4348, 0.0
    %v4379 = vmax.f32 %v4349, 0.0
    %v4380 = vmax.f32 %v4350, 0.0
    %v4381 = vmax.f32 %v4351, 0.0
    %v4382 = vmax.f32 %v4352, 0.0
    %v4383 = vmax.f32 %v4353, 0.0
    %v4384 = vmax.f32 %v4354, 0.0
    %v4385 = vmax.f32 %v4355, 0.0
    %v4386 = vmax.f32 %v4356, 0.0
    %v4387 = vmax.f32 %v4357, 0.0
    %v4388 = vmax.f32 %v4358, 0.0
    %v4389 = vmax.f32 %v4359, 0.0
    %v4390 = vmax.f32 %v4360, 0.0
    %v4391 = vmax.f32 %v4361, 0.0
    %v4392 = vmax.f32 %v4362, 0.0
    %v4393 = vmax.f32 %v4363, 0.0
    %v4394 = vmax.f32 %v4364, 0.0
    %v4395 = vmax.f32 %v4365, 0.0
    %v4396 = vmax.f32 %v4366, 0.0
    %v4397 = vmax.f32 %v4367, 0.0
    %v4398 = vmax.f32 %v4368, 0.0
    %v4399 = vmax.f32 %v4369, 0.0
    %v4400 = vmax.f32 %v4370, 0.0
    %4401 = vmatprep.subr.mxu0 0.0
    %4402 = vmatpush1.msra.mxu0 %v4371
    %4403 = vmatprep.subr.mxu0 0.0
    %4404 = vmatpush1.msra.mxu0 %v4372
    %4405 = vmatprep.subr.mxu0 0.0
    %4406 = vmatpush1.msra.mxu0 %v4373
    %4407 = vmatprep.subr.mxu0 0.0
    %4408 = vmatpush1.msra.mxu0 %v4374
    %4409 = vmatprep.subr.mxu0 0.0
    %4410 = vmatpush1.msra.mxu0 %v4375
    %4411 = vmatprep.subr.mxu0 0.0
    %4412 = vmatpush1.msra.mxu0 %v4376
    %4413 = vmatprep.subr.mxu0 0.0
    %4414 = vmatpush1.msra.mxu0 %v4377
    %4415 = vmatprep.subr.mxu0 0.0
    %4416 = vmatpush1.msra.mxu0 %v4378
    %4417 = vmatprep.subr.mxu0 0.0
    %4418 = vmatpush1.msra.mxu0 %v4379
    %4419 = vmatprep.subr.mxu0 0.0
    %4420 = vmatpush1.msra.mxu0 %v4380
    %4421 = vmatprep.subr.mxu0 0.0
    %4422 = vmatpush1.msra.mxu0 %v4381
    %4423 = vmatprep.subr.mxu0 0.0
    %4424 = vmatpush1.msra.mxu0 %v4382
    %4425 = vmatprep.subr.mxu0 0.0
    %4426 = vmatpush1.msra.mxu0 %v4383
    %4427 = vmatprep.subr.mxu0 0.0
    %4428 = vmatpush1.msra.mxu0 %v4384
    %4429 = vmatprep.subr.mxu0 0.0
    %4430 = vmatpush1.msra.mxu0 %v4385
    %4431 = vmatprep.subr.mxu0 0.0
    %4432 = vmatpush1.msra.mxu0 %v4386
    %4433 = vmatprep.subr.mxu0 0.0
    %4434 = vmatpush1.msra.mxu0 %v4387
    %4435 = vmatprep.subr.mxu0 0.0
    %4436 = vmatpush1.msra.mxu0 %v4388
    %4437 = vmatprep.subr.mxu0 0.0
    %4438 = vmatpush1.msra.mxu0 %v4389
    %4439 = vmatprep.subr.mxu0 0.0
    %4440 = vmatpush1.msra.mxu0 %v4390
    %4441 = vmatprep.subr.mxu0 0.0
    %4442 = vmatpush1.msra.mxu0 %v4391
    %4443 = vmatprep.subr.mxu0 0.0
    %4444 = vmatpush1.msra.mxu0 %v4392
    %4445 = vmatprep.subr.mxu0 0.0
    %4446 = vmatpush1.msra.mxu0 %v4393
    %4447 = vmatprep.subr.mxu0 0.0
    %4448 = vmatpush1.msra.mxu0 %v4394
    %4449 = vmatprep.subr.mxu0 0.0
    %4450 = vmatpush1.msra.mxu0 %v4395
    %4451 = vmatprep.subr.mxu0 0.0
    %4452 = vmatpush1.msra.mxu0 %v4396
    %4453 = vmatprep.subr.mxu0 0.0
    %4454 = vmatpush1.msra.mxu0 %v4397
    %4455 = vmatprep.subr.mxu0 0.0
    %4456 = vmatpush1.msra.mxu0 %v4398
    %4457 = vmatprep.subr.mxu0 0.0
    %4458 = vmatpush1.msra.mxu0 %v4399
    %4459 = vmatprep.subr.mxu0 0.0
    %4460 = vmatpush1.msra.mxu0 %v4400
    %4461 = vmatprep.subr.mxu0 0.0
    %4462 = vmatpush1.msra.mxu0 0.0
    %4463 = vmatprep.subr.mxu0 0.0
    %4464 = vmatpush1.msra.mxu0 0.0
    %4465 = vmatprep.mubr.f32.mxu0 %v97
    %4466 = vmatmul.mubr.f32.gmra.mrb[0].mxu0 %v86
    %v4467 = vpop.f32.mrb[0].mxu0
    %v4468 = vadd.f32 0.0, %v4467
    %v4469 = vpop.f32.mrb[0].mxu0
    %4470 = vmatprep.mubr.f32.mxu0 %v100
    %4471 = vmatmul.mubr.f32.gmra.mrb[0].mxu0 %v88
    %v4472 = vpop.f32.mrb[0].mxu0
    %v4473 = vadd.f32 0.0, %v4472
    %v4474 = vpop.f32.mrb[0].mxu0
    %4475 = vmatprep.mubr.f32.mxu0 %v103
    %4476 = vmatmul.mubr.f32.gmra.mrb[0].mxu0 %v90
    %v4477 = vpop.f32.mrb[0].mxu0
    %v4478 = vadd.f32 0.0, %v4477
    %v4479 = vpop.f32.mrb[0].mxu0
    %4480 = vmatprep.mubr.f32.mxu0 %v106
    %4481 = vmatmul.mubr.f32.gmra.mrb[0].mxu0 %v92
    %v4482 = vpop.f32.mrb[0].mxu0
    %v4483 = vadd.f32 0.0, %v4482
    %v4484 = vpop.f32.mrb[0].mxu0
    %4485 = vdwg.mxu0
    %v4486 = vld [vmem:[%s12] sm:$0xff]
    %v4487 = vld [vmem:[%s12 + $0x8] sm:$0xff]
    %v4489 = vsel %vm972, %v4468, 0
    %v4492 = vsel %vm972, %v4473, 0
    %v4495 = vsel %vm972, %v4478, 0
    %v4498 = vsel %vm972, %v4483, 0
    %4500 = vmatprep.subr.mxu0 0.0
    %4501 = vmatpush1.msra.mxu0 %v4486
    %4502 = vmatprep.subr.mxu0 0.0
    %4503 = vmatpush1.msra.mxu0 %v4487
    %4504 = vmatprep.subr.mxu0 0.0
    %4505 = vmatpush1.msra.mxu0 0.0
    %4506 = vmatprep.subr.mxu0 0.0
    %4507 = vmatpush1.msra.mxu0 0.0
    %4508 = vmatprep.subr.mxu0 0.0
    %4509 = vmatpush1.msra.mxu0 0.0
    %4510 = vmatprep.subr.mxu0 0.0
    %4511 = vmatpush1.msra.mxu0 0.0
    %4512 = vmatprep.subr.mxu0 0.0
    %4513 = vmatpush1.msra.mxu0 0.0
    %4514 = vmatprep.subr.mxu0 0.0
    %4515 = vmatpush1.msra.mxu0 0.0
    %4516 = vmatprep.subr.mxu0 0.0
    %4517 = vmatpush1.msra.mxu0 0.0
    %4518 = vmatprep.subr.mxu0 0.0
    %4519 = vmatpush1.msra.mxu0 0.0
    %4520 = vmatprep.subr.mxu0 0.0
    %4521 = vmatpush1.msra.mxu0 0.0
    %4522 = vmatprep.subr.mxu0 0.0
    %4523 = vmatpush1.msra.mxu0 0.0
    %4524 = vmatprep.subr.mxu0 0.0
    %4525 = vmatpush1.msra.mxu0 0.0
    %4526 = vmatprep.subr.mxu0 0.0
    %4527 = vmatpush1.msra.mxu0 0.0
    %4528 = vmatprep.subr.mxu0 0.0
    %4529 = vmatpush1.msra.mxu0 0.0
    %4530 = vmatprep.subr.mxu0 0.0
    %4531 = vmatpush1.msra.mxu0 0.0
    %4532 = vmatprep.subr.mxu0 0.0
    %4533 = vmatpush1.msra.mxu0 0.0
    %4534 = vmatprep.subr.mxu0 0.0
    %4535 = vmatpush1.msra.mxu0 0.0
    %4536 = vmatprep.subr.mxu0 0.0
    %4537 = vmatpush1.msra.mxu0 0.0
    %4538 = vmatprep.subr.mxu0 0.0
    %4539 = vmatpush1.msra.mxu0 0.0
    %4540 = vmatprep.subr.mxu0 0.0
    %4541 = vmatpush1.msra.mxu0 0.0
    %4542 = vmatprep.subr.mxu0 0.0
    %4543 = vmatpush1.msra.mxu0 0.0
    %4544 = vmatprep.subr.mxu0 0.0
    %4545 = vmatpush1.msra.mxu0 0.0
    %4546 = vmatprep.subr.mxu0 0.0
    %4547 = vmatpush1.msra.mxu0 0.0
    %4548 = vmatprep.subr.mxu0 0.0
    %4549 = vmatpush1.msra.mxu0 0.0
    %4550 = vmatprep.subr.mxu0 0.0
    %4551 = vmatpush1.msra.mxu0 0.0
    %4552 = vmatprep.subr.mxu0 0.0
    %4553 = vmatpush1.msra.mxu0 0.0
    %4554 = vmatprep.subr.mxu0 0.0
    %4555 = vmatpush1.msra.mxu0 0.0
    %4556 = vmatprep.subr.mxu0 0.0
    %4557 = vmatpush1.msra.mxu0 0.0
    %4558 = vmatprep.subr.mxu0 0.0
    %4559 = vmatpush1.msra.mxu0 0.0
    %4560 = vmatprep.subr.mxu0 0.0
    %4561 = vmatpush1.msra.mxu0 0.0
    %4562 = vmatprep.subr.mxu0 0.0
    %4563 = vmatpush1.msra.mxu0 0.0
    %4564 = vmatprep.mubr.f32.mxu0 0.0
    %4565 = vmatmul.mubr.f32.gmra.mrb[0].mxu0 %v4489
    %v4566 = vpop.f32.mrb[0].mxu0
    %v4567 = vadd.f32 0.0, %v4566
    %v4568 = vpop.f32.mrb[0].mxu0
    %4569 = vmatprep.mubr.f32.mxu0 0.0
    %4570 = vmatmul.mubr.f32.gmra.mrb[0].mxu0 %v4492
    %v4571 = vpop.f32.mrb[0].mxu0
    %v4572 = vadd.f32 0.0, %v4571
    %v4573 = vpop.f32.mrb[0].mxu0
    %4574 = vmatprep.mubr.f32.mxu0 0.0
    %4575 = vmatmul.mubr.f32.gmra.mrb[0].mxu0 %v4495
    %v4576 = vpop.f32.mrb[0].mxu0
    %v4577 = vadd.f32 0.0, %v4576
    %v4578 = vpop.f32.mrb[0].mxu0
    %4579 = vmatprep.mubr.f32.mxu0 0.0
    %4580 = vmatmul.mubr.f32.gmra.mrb[0].mxu0 %v4498
    %v4581 = vpop.f32.mrb[0].mxu0
    %v4582 = vadd.f32 0.0, %v4581
    %v4583 = vpop.f32.mrb[0].mxu0
    %4584 = vdwg.mxu0
    %v4585 = vadd.f32 %v2443, %v4567
    %v4586 = vadd.f32 %v2444, %v4572
    %v4587 = vadd.f32 %v2445, %v4577
    %v4588 = vadd.f32 %v2446, %v4582
    %v4589 = vlaneseq
    %v4590 = vshrl.u32 %v4589, 7
    %v4591 = vsub.s32 2, %v4590
    %v4592 = vrot.slane %v94, %v4591
    %v4593 = vadd.f32 %v4585, %v4592
    %v4594 = vadd.f32 %v4586, %v4592
    %v4595 = vadd.f32 %v4587, %v4592
    %v4596 = vadd.f32 %v4588, %v4592
    %v4597 = vld [vmem:[%s14] sm:$0xff]
    %v4598 = vld [vmem:[%s14 + $0x8] sm:$0x3]
    %v4599 = vld [vmem:[#allocation2] sm:$0x1]
    %vm4600 = vcmask 121856
    %v4602 = vsel %vm4600, %v4597, 0
    %v4605 = vsel %vm4600, %v4598, 0
    %vm4607 = vcmask 1046528
    %v4609 = vsel %vm4607, %v4594, 0
    %4611 = vmatprep.subr.mxu0 0.0
    %4612 = vmatpush1.msra.mxu0 %v4593
    %4613 = vmatprep.subr.mxu0 0.0
    %4614 = vmatpush1.msra.mxu0 %v4609
    %4615 = vmatprep.subr.mxu0 0.0
    %4616 = vmatpush1.msra.mxu0 0.0
    %4617 = vmatprep.subr.mxu0 0.0
    %4618 = vmatpush1.msra.mxu0 0.0
    %4619 = vmatprep.subr.mxu0 0.0
    %4620 = vmatpush1.msra.mxu0 0.0
    %4621 = vmatprep.subr.mxu0 0.0
    %4622 = vmatpush1.msra.mxu0 0.0
    %4623 = vmatprep.subr.mxu0 0.0
    %4624 = vmatpush1.msra.mxu0 0.0
    %4625 = vmatprep.subr.mxu0 0.0
    %4626 = vmatpush1.msra.mxu0 0.0
    %4627 = vmatprep.subr.mxu0 0.0
    %4628 = vmatpush1.msra.mxu0 0.0
    %4629 = vmatprep.subr.mxu0 0.0
    %4630 = vmatpush1.msra.mxu0 0.0
    %4631 = vmatprep.subr.mxu0 0.0
    %4632 = vmatpush1.msra.mxu0 0.0
    %4633 = vmatprep.subr.mxu0 0.0
    %4634 = vmatpush1.msra.mxu0 0.0
    %4635 = vmatprep.subr.mxu0 0.0
    %4636 = vmatpush1.msra.mxu0 0.0
    %4637 = vmatprep.subr.mxu0 0.0
    %4638 = vmatpush1.msra.mxu0 0.0
    %4639 = vmatprep.subr.mxu0 0.0
    %4640 = vmatpush1.msra.mxu0 0.0
    %4641 = vmatprep.subr.mxu0 0.0
    %4642 = vmatpush1.msra.mxu0 0.0
    %4643 = vmatprep.subr.mxu0 0.0
    %4644 = vmatpush1.msra.mxu0 0.0
    %4645 = vmatprep.subr.mxu0 0.0
    %4646 = vmatpush1.msra.mxu0 0.0
    %4647 = vmatprep.subr.mxu0 0.0
    %4648 = vmatpush1.msra.mxu0 0.0
    %4649 = vmatprep.subr.mxu0 0.0
    %4650 = vmatpush1.msra.mxu0 0.0
    %4651 = vmatprep.subr.mxu0 0.0
    %4652 = vmatpush1.msra.mxu0 0.0
    %4653 = vmatprep.subr.mxu0 0.0
    %4654 = vmatpush1.msra.mxu0 0.0
    %4655 = vmatprep.subr.mxu0 0.0
    %4656 = vmatpush1.msra.mxu0 0.0
    %4657 = vmatprep.subr.mxu0 0.0
    %4658 = vmatpush1.msra.mxu0 0.0
    %4659 = vmatprep.subr.mxu0 0.0
    %4660 = vmatpush1.msra.mxu0 0.0
    %4661 = vmatprep.subr.mxu0 0.0
    %4662 = vmatpush1.msra.mxu0 0.0
    %4663 = vmatprep.subr.mxu0 0.0
    %4664 = vmatpush1.msra.mxu0 0.0
    %4665 = vmatprep.subr.mxu0 0.0
    %4666 = vmatpush1.msra.mxu0 0.0
    %4667 = vmatprep.subr.mxu0 0.0
    %4668 = vmatpush1.msra.mxu0 0.0
    %4669 = vmatprep.subr.mxu0 0.0
    %4670 = vmatpush1.msra.mxu0 0.0
    %4671 = vmatprep.subr.mxu0 0.0
    %4672 = vmatpush1.msra.mxu0 0.0
    %4673 = vmatprep.subr.mxu0 0.0
    %4674 = vmatpush1.msra.mxu0 0.0
    %4675 = vmatprep.mubr.f32.mxu0 0.0
    %4676 = vmatmul.mubr.f32.gmra.mrb[0].mxu0 %v4602
    %v4677 = vpop.f32.mrb[0].mxu0
    %v4678 = vadd.f32 0.0, %v4677
    %v4679 = vpop.f32.mrb[0].mxu0
    %4680 = vmatprep.mubr.f32.mxu0 0.0
    %4681 = vmatmul.mubr.f32.gmra.mrb[0].mxu0 %v4605
    %v4682 = vpop.f32.mrb[0].mxu0
    %v4683 = vadd.f32 0.0, %v4682
    %v4684 = vpop.f32.mrb[0].mxu0
    %4685 = vdwg.mxu0
    %v4687 = vrot.slane %v4678, 1
    %4688 = vrot.lane.b32.xlu0 %v4687, 127
    %v4689 = vpop.permute.xlu0 %4688
    %v4691 = vadd.f32 %v4678, %v4689
    %v4692 = vrot.slane %v4678, 2
    %4693 = vrot.lane.b32.xlu0 %v4692, 126
    %v4694 = vpop.permute.xlu0 %4693
    %v4696 = vadd.f32 %v4691, %v4694
    %v4697 = vrot.slane %v4678, 3
    %4698 = vrot.lane.b32.xlu0 %v4697, 125
    %v4699 = vpop.permute.xlu0 %4698
    %v4701 = vadd.f32 %v4696, %v4699
    %v4702 = vrot.slane %v4678, 4
    %4703 = vrot.lane.b32.xlu0 %v4702, 124
    %v4704 = vpop.permute.xlu0 %4703
    %v4706 = vadd.f32 %v4701, %v4704
    %v4707 = vrot.slane %v4678, 5
    %4708 = vrot.lane.b32.xlu0 %v4707, 123
    %v4709 = vpop.permute.xlu0 %4708
    %v4711 = vadd.f32 %v4706, %v4709
    %v4712 = vrot.slane %v4678, 6
    %4713 = vrot.lane.b32.xlu0 %v4712, 122
    %v4714 = vpop.permute.xlu0 %4713
    %v4716 = vadd.f32 %v4711, %v4714
    %v4717 = vrot.slane %v4678, 7
    %4718 = vrot.lane.b32.xlu0 %v4717, 121
    %v4719 = vpop.permute.xlu0 %4718
    %v4721 = vadd.f32 %v4716, %v4719
    %4723 = vrot.lane.b32.xlu0 %v4683, 120
    %v4724 = vpop.permute.xlu0 %4723
    %v4726 = vadd.f32 %v4721, %v4724
    %v4727 = vrot.slane %v4683, 1
    %4728 = vrot.lane.b32.xlu0 %v4727, 119
    %v4729 = vpop.permute.xlu0 %4728
    %v4731 = vadd.f32 %v4726, %v4729
    %vm4734 = vcmask 1040384
    %v4735 = vrot.slane %v4594, 7
    %v4736 = vrot.slane %v4595, 7
    %v4737 = vsel %vm4734, %v4735, %v4736
    %v4738 = vrot.slane %v4596, 7
    %v4739 = vsel %vm4734, %v4736, %v4738
    %v4741 = vsel %vm4607, %v4739, 0
    %4743 = vmatprep.subr.mxu0 0.0
    %4744 = vmatpush1.msra.mxu0 %v4737
    %4745 = vmatprep.subr.mxu0 0.0
    %4746 = vmatpush1.msra.mxu0 %v4741
    %4747 = vmatprep.subr.mxu0 0.0
    %4748 = vmatpush1.msra.mxu0 0.0
    %4749 = vmatprep.subr.mxu0 0.0
    %4750 = vmatpush1.msra.mxu0 0.0
    %4751 = vmatprep.subr.mxu0 0.0
    %4752 = vmatpush1.msra.mxu0 0.0
    %4753 = vmatprep.subr.mxu0 0.0
    %4754 = vmatpush1.msra.mxu0 0.0
    %4755 = vmatprep.subr.mxu0 0.0
    %4756 = vmatpush1.msra.mxu0 0.0
    %4757 = vmatprep.subr.mxu0 0.0
    %4758 = vmatpush1.msra.mxu0 0.0
    %4759 = vmatprep.subr.mxu0 0.0
    %4760 = vmatpush1.msra.mxu0 0.0
    %4761 = vmatprep.subr.mxu0 0.0
    %4762 = vmatpush1.msra.mxu0 0.0
    %4763 = vmatprep.subr.mxu0 0.0
    %4764 = vmatpush1.msra.mxu0 0.0
    %4765 = vmatprep.subr.mxu0 0.0
    %4766 = vmatpush1.msra.mxu0 0.0
    %4767 = vmatprep.subr.mxu0 0.0
    %4768 = vmatpush1.msra.mxu0 0.0
    %4769 = vmatprep.subr.mxu0 0.0
    %4770 = vmatpush1.msra.mxu0 0.0
    %4771 = vmatprep.subr.mxu0 0.0
    %4772 = vmatpush1.msra.mxu0 0.0
    %4773 = vmatprep.subr.mxu0 0.0
    %4774 = vmatpush1.msra.mxu0 0.0
    %4775 = vmatprep.subr.mxu0 0.0
    %4776 = vmatpush1.msra.mxu0 0.0
    %4777 = vmatprep.subr.mxu0 0.0
    %4778 = vmatpush1.msra.mxu0 0.0
    %4779 = vmatprep.subr.mxu0 0.0
    %4780 = vmatpush1.msra.mxu0 0.0
    %4781 = vmatprep.subr.mxu0 0.0
    %4782 = vmatpush1.msra.mxu0 0.0
    %4783 = vmatprep.subr.mxu0 0.0
    %4784 = vmatpush1.msra.mxu0 0.0
    %4785 = vmatprep.subr.mxu0 0.0
    %4786 = vmatpush1.msra.mxu0 0.0
    %4787 = vmatprep.subr.mxu0 0.0
    %4788 = vmatpush1.msra.mxu0 0.0
    %4789 = vmatprep.subr.mxu0 0.0
    %4790 = vmatpush1.msra.mxu0 0.0
    %4791 = vmatprep.subr.mxu0 0.0
    %4792 = vmatpush1.msra.mxu0 0.0
    %4793 = vmatprep.subr.mxu0 0.0
    %4794 = vmatpush1.msra.mxu0 0.0
    %4795 = vmatprep.subr.mxu0 0.0
    %4796 = vmatpush1.msra.mxu0 0.0
    %4797 = vmatprep.subr.mxu0 0.0
    %4798 = vmatpush1.msra.mxu0 0.0
    %4799 = vmatprep.subr.mxu0 0.0
    %4800 = vmatpush1.msra.mxu0 0.0
    %4801 = vmatprep.subr.mxu0 0.0
    %4802 = vmatpush1.msra.mxu0 0.0
    %4803 = vmatprep.subr.mxu0 0.0
    %4804 = vmatpush1.msra.mxu0 0.0
    %4805 = vmatprep.subr.mxu0 0.0
    %4806 = vmatpush1.msra.mxu0 0.0
    %4807 = vmatprep.mubr.f32.mxu0 0.0
    %4808 = vmatmul.mubr.f32.gmra.mrb[0].mxu0 %v4602
    %v4809 = vpop.f32.mrb[0].mxu0
    %v4810 = vadd.f32 0.0, %v4809
    %v4811 = vpop.f32.mrb[0].mxu0
    %4812 = vmatprep.mubr.f32.mxu0 0.0
    %4813 = vmatmul.mubr.f32.gmra.mrb[0].mxu0 %v4605
    %v4814 = vpop.f32.mrb[0].mxu0
    %v4815 = vadd.f32 0.0, %v4814
    %v4816 = vpop.f32.mrb[0].mxu0
    %4817 = vdwg.mxu0
    %v4819 = vrot.slane %v4810, 1
    %4820 = vrot.lane.b32.xlu0 %v4819, 127
    %v4821 = vpop.permute.xlu0 %4820
    %v4823 = vadd.f32 %v4810, %v4821
    %v4824 = vrot.slane %v4810, 2
    %4825 = vrot.lane.b32.xlu0 %v4824, 126
    %v4826 = vpop.permute.xlu0 %4825
    %v4828 = vadd.f32 %v4823, %v4826
    %v4829 = vrot.slane %v4810, 3
    %4830 = vrot.lane.b32.xlu0 %v4829, 125
    %v4831 = vpop.permute.xlu0 %4830
    %v4833 = vadd.f32 %v4828, %v4831
    %v4834 = vrot.slane %v4810, 4
    %4835 = vrot.lane.b32.xlu0 %v4834, 124
    %v4836 = vpop.permute.xlu0 %4835
    %v4838 = vadd.f32 %v4833, %v4836
    %v4839 = vrot.slane %v4810, 5
    %4840 = vrot.lane.b32.xlu0 %v4839, 123
    %v4841 = vpop.permute.xlu0 %4840
    %v4843 = vadd.f32 %v4838, %v4841
    %v4844 = vrot.slane %v4810, 6
    %4845 = vrot.lane.b32.xlu0 %v4844, 122
    %v4846 = vpop.permute.xlu0 %4845
    %v4848 = vadd.f32 %v4843, %v4846
    %v4849 = vrot.slane %v4810, 7
    %4850 = vrot.lane.b32.xlu0 %v4849, 121
    %v4851 = vpop.permute.xlu0 %4850
    %v4853 = vadd.f32 %v4848, %v4851
    %4855 = vrot.lane.b32.xlu0 %v4815, 120
    %v4856 = vpop.permute.xlu0 %4855
    %v4858 = vadd.f32 %v4853, %v4856
    %v4859 = vrot.slane %v4815, 1
    %4860 = vrot.lane.b32.xlu0 %v4859, 119
    %v4861 = vpop.permute.xlu0 %4860
    %v4863 = vadd.f32 %v4858, %v4861
    %v4865 = vrot.slane %v4863, 7
    %v4867 = vsel %vm4734, %v4731, %v4865
    %v4869 = vlaneseq
    %v4870 = vshrl.u32 %v4869, 7
    %v4871 = vsub.s32 0, %v4870
    %v4872 = vrot.slane %v4599, %v4871
    %4873 = vset.pattern.permute.xlu0 0
    %4874 = vperm.xlu0 %4873, %v4872
    %v4875 = vpop.permute.xlu0 %4874
    %v4877 = vadd.f32 %v4867, %v4875
    %vm4878 = vcmask 50176
    %4879 = vst.msk [vmem:[#allocation3] sm:$0x3] %vm4878, %v4877
    // Predicated region
    $region66: #{gin_forward.1} parent=1 // pred_check
      _
    $region67: #{gin_forward.1} parent=1 // pred_check_branch
      %4881 = sbr.rel (0) target = $region69
    $region68: #{gin_forward.1} parent=1 // pred_region
      %s4883 = ssub.s32 32, 32
      %4884 = vsyncadd [#allocation4], %s4883
      %s4886 = sshll.u32 [#allocation3], 4
      %s4887 = int_to_ptr.vmem [resolvable:$true] %s4886
      %4889 = dma.vmem_to_hbm [thread:$0]  %s4887, 32, %s16, [#allocation4]
    $region69: #{gin_forward.1} parent=1 // pred_fallthru
      _
    // Predicated region
    $region70: #{gin_forward.1} parent=1 // pred_check
      _
    $region71: #{gin_forward.1} parent=1 // pred_check_branch
      %4891 = sbr.rel (0) target = $region73
    $region72: #{gin_forward.1} parent=1 // pred_region
      %4892 = dma.done [#allocation4], 32
    $region73: #{gin_forward.1} parent=1 // pred_fallthru
      _
    %4893 = vsyncpa [#allocation4], 1

</llo_original>
